<compile_context>
chip_gen: v7x
topology: tpu7x:2x2x1
jax: 0.10.0
libtpu: 0.0.40
codegen_flags: <defaults>
</compile_context>

<pallas_src>
import functools

import numpy as np
import jax
import jax.numpy as jnp
from jax.experimental import pallas as pl
from jax.experimental.pallas import tpu as pltpu

NEG_SLOPE = 0.2   # LeakyReLU(0.2) == activ='lrelu'


def _round_up(x, m):
    return ((x + m - 1) // m) * m


# ----------------------------------------------------------------------------
# Fused Pallas kernel: full multi-scale discriminator forward (single call,
# single invocation; every intermediate activation stays in VMEM/vregs).
# ----------------------------------------------------------------------------
def _dis_fused_kernel(*refs, num_scales, n_layers, meta):
    """refs = [x] +
              [bias_all, (S, Bcat) * n_layers]   per scale +
              [out_0 ... out_{num_scales-1}]"""
    idx = 0
    x_ref = refs[idx]; idx += 1
    scale_refs = []
    for _ in range(num_scales):
        bias_ref = refs[idx]; idx += 1
        layers = []
        for _ in range(n_layers):
            layers.append((refs[idx], refs[idx + 1]))
            idx += 2
        scale_refs.append((bias_ref, layers))
    out_refs = refs[idx:idx + num_scales]

    # Single f32 -> bf16 cast of the raw input, shared by every scale (the avg-pool
    # downsample chain is folded into each scale's first-layer structure matrices).
    x_bf = x_ref[...].astype(jnp.bfloat16)

    for s in range(num_scales):
        bias_ref, layers = scale_refs[s]
        a_bf = x_bf
        acc = None
        for l in range(n_layers):
            s_ref, bcat_ref = layers[l]
            ptap, act = meta[s][l]
            ntaps = s_ref.shape[0]
            # One wide MXU matmul for all vertical-tap bands at once (Bcat = per-tap banded
            # conv matrices concatenated along 128-padded lanes).
            t = jnp.dot(a_bf, bcat_ref[...], preferred_element_type=jnp.float32)
            acc = None
            for i in range(ntaps):
                ti = t[:, i * ptap:(i + 1) * ptap]          # 128-aligned static lane slice
                # S_i is a 0/1 (or pool-coefficient) row-gather matrix; kept in f32 so the
                # gather/sum is exact (no extra bf16 requantization of partial sums).
                part = jnp.dot(s_ref[i], ti, preferred_element_type=jnp.float32)
                acc = part if acc is None else acc + part
            acc = acc + bias_ref[l][:, :ptap]               # f32 bias row (lane-padded)
            if act:
                acc = jnp.maximum(acc, NEG_SLOPE * acc)     # LeakyReLU(0.2), 2 VPU ops
            if l + 1 < n_layers:
                a_bf = acc.astype(jnp.bfloat16)             # single cast per layer
        out_refs[s][...] = acc.astype(out_refs[s].dtype)    # full lane-dense tile store


# ----------------------------------------------------------------------------
# Structure-matrix construction (weight layout transform, done once in numpy)
# ----------------------------------------------------------------------------
def _map_idx(u, size, pad_type):
    """Map a (possibly out-of-range) index to its source index; None == dropped (zero pad)."""
    if 0 <= u < size:
        return u
    if pad_type == "zero":
        return None
    # reflect (ReflectionPad2d semantics, pad==1 here)
    if u < 0:
        u = -u
    if u >= size:
        u = 2 * (size - 1) - u
    return u


def _build_row_gather(n, h_in, h_out, k, stride, pad, pad_type, rows_out_pad, rows_in_pad):
    """Per-tap 0/1 row-gather matrices (vertical taps + H padding), padded to (8k, ...)."""
    S = np.zeros((k, rows_out_pad, rows_in_pad), np.float64)
    for i in range(k):
        for ho in range(h_out):
            src = _map_idx(ho * stride + i - pad, h_in, pad_type)
            if src is None:
                continue
            for b in range(n):
                S[i, b * h_out + ho, b * h_in + src] = 1.0
    return S


def _build_band_cat(w4, w_in, w_out, stride, pad, pad_type, lanes_in_pad, ptap):
    """Banded conv matrices for the k vertical taps, concatenated along 128-padded lanes."""
    kh, kw, cin, cout = w4.shape
    B = np.zeros((lanes_in_pad, kh * ptap), np.float64)
    for i in range(kh):
        for wo in range(w_out):
            for j in range(kw):
                src = _map_idx(wo * stride + j - pad, w_in, pad_type)
                if src is None:
                    continue
                B[src * cin:(src + 1) * cin,
                  i * ptap + wo * cout:i * ptap + (wo + 1) * cout] += w4[i, j]
    return B


def _build_pool_mats(n, h, w, c, rows_in_pad, lanes_in_pad):
    """AvgPool2d(3, stride=2, padding=1, count_include_pad=False) as PH @ A @ PW (padded)."""
    h_out = (h - 1) // 2 + 1
    w_out = (w - 1) // 2 + 1
    rows_out_pad = _round_up(n * h_out, 8)
    lanes_out_pad = _round_up(w_out * c, 128)
    PH = np.zeros((rows_out_pad, rows_in_pad), np.float64)
    for ho in range(h_out):
        rows = [r for r in (2 * ho - 1, 2 * ho, 2 * ho + 1) if 0 <= r < h]
        for b in range(n):
            for r in rows:
                PH[b * h_out + ho, b * h + r] = 1.0 / len(rows)
    PW = np.zeros((lanes_in_pad, lanes_out_pad), np.float64)
    for wo in range(w_out):
        cols = [x for x in (2 * wo - 1, 2 * wo, 2 * wo + 1) if 0 <= x < w]
        for x in cols:
            for ci in range(c):
                PW[x * c + ci, wo * c + ci] = 1.0 / len(cols)
    return PH, PW, h_out, w_out, rows_out_pad, lanes_out_pad


# ----------------------------------------------------------------------------
# Dis parameters: init + preparation (raw conv weights -> banded/gather matrices)
# ----------------------------------------------------------------------------
def init_dis_params(key, input_dim, dim, n_layer, num_scales, pad_type):
    """Deterministic synthetic init matching Dis._make_net layer shapes (norm='none')."""
    params = []
    for _ in range(num_scales):
        specs, cin, d = [], input_dim, dim
        specs.append((cin, d, 4, 2, 1, pad_type, True))            # first Conv2dBlock
        cin = d
        for _ in range(n_layer - 1):
            specs.append((cin, cin * 2, 4, 2, 1, pad_type, True))
            cin *= 2
        specs.append((cin, cin * 2, 4, 1, 1, pad_type, True))      # stride-1 block
        cin *= 2
        specs.append((cin, 1, 4, 1, 1, "zero", False))             # final nn.Conv2d(dim,1,4,1,1)
        layers = []
        for (ci, co, k, st, pd, pt, act) in specs:
            key, wk, bk = jax.random.split(key, 3)
            w = jax.random.normal(wk, (k, k, ci, co), jnp.float32) / jnp.sqrt(float(k * k * ci))
            b = 0.01 * jax.random.normal(bk, (co,), jnp.float32)
            layers.append(dict(W=w, b=b, stride=st, pad=pd, pad_type=pt, act=act))
        params.append(layers)
    return params


def prepare_dis(params, batch, height, width, input_dim, mxu_dtype=jnp.bfloat16):
    num_scales = len(params)
    n_layers = len(params[0])

    # Padded representation of the raw input row matrix (shared by all scales).
    rows0_real = batch * height
    lanes0_real = width * input_dim
    rows0_pad = _round_up(rows0_real, 8)
    lanes0_pad = _round_up(lanes0_real, 128)

    # Accumulated avg-pool chains:  pooled_s = PHc_s @ x @ PWc_s  (folded into layer 0 below).
    ph_chain = np.eye(rows0_pad, dtype=np.float64)
    pw_chain = np.eye(lanes0_pad, dtype=np.float64)
    h_p, w_p = height, width
    rows_p_pad, lanes_p_pad = rows0_pad, lanes0_pad
    pool_chains = []
    for s in range(num_scales):
        pool_chains.append((ph_chain.copy(), pw_chain.copy(), h_p, w_p, rows_p_pad, lanes_p_pad))
        if s < num_scales - 1:
            PH, PW, h_p, w_p, rows_p_pad, lanes_p_pad = _build_pool_mats(
                batch, h_p, w_p, input_dim, rows_p_pad, lanes_p_pad)
            ph_chain = PH @ ph_chain
            pw_chain = pw_chain @ PW

    scales, meta, out_info, out_pad_shapes = [], [], [], []
    for (phc, pwc, hs, ws, r_pad, l_pad), layers in zip(pool_chains, params):
        h_cur, w_cur = hs, ws
        rows_in_pad, lanes_in_pad = r_pad, l_pad
        layer_arrays, layer_meta, bias_rows = [], [], []
        cout = input_dim
        for li, layer in enumerate(layers):
            w4 = np.asarray(jax.device_get(layer["W"]), np.float64)
            bias = np.asarray(jax.device_get(layer["b"]), np.float64)
            k, cout = w4.shape[0], w4.shape[3]
            st, pd, pt = layer["stride"], layer["pad"], layer["pad_type"]
            h_out = (h_cur + 2 * pd - k) // st + 1
            w_out = (w_cur + 2 * pd - k) // st + 1
            rows_out_pad = _round_up(batch * h_out, 8)
            ptap = _round_up(w_out * cout, 128)
            S = _build_row_gather(batch, h_cur, h_out, k, st, pd, pt, rows_out_pad, rows_in_pad)
            B = _build_band_cat(w4, w_cur, w_out, st, pd, pt, lanes_in_pad, ptap)
            if li == 0:
                # Fold the accumulated avg-pool chain into the first (linear) conv block:
                #   out = sum_i (S_i @ PHc) @ x @ (PWc @ B_i)
                S = np.einsum("imn,nk->imk", S, phc)   # (k, rows_out_pad, rows0_pad)
                B = pwc @ B                            # (lanes0_pad, k*ptap)
            brow = np.zeros((1, ptap), np.float64)
            brow[0, :w_out * cout] = np.tile(bias.reshape(1, cout), (w_out, 1)).reshape(-1)
            layer_arrays.append((jnp.asarray(S, jnp.float32), jnp.asarray(B, mxu_dtype)))
            bias_rows.append(brow)
            layer_meta.append((int(ptap), bool(layer["act"])))
            h_cur, w_cur = h_out, w_out
            rows_in_pad, lanes_in_pad = rows_out_pad, ptap
        max_p = max(b.shape[1] for b in bias_rows)
        bias_all = np.zeros((n_layers, 1, max_p), np.float64)
        for li, b in enumerate(bias_rows):
            bias_all[li, :, :b.shape[1]] = b
        scales.append(dict(bias_all=jnp.asarray(bias_all, jnp.float32), layers=layer_arrays))
        meta.append(tuple(layer_meta))
        out_info.append((h_cur, w_cur, cout))
        out_pad_shapes.append((rows_in_pad, lanes_in_pad))

    return dict(scales=scales, meta=tuple(meta), out_info=tuple(out_info),
                out_pad_shapes=tuple(out_pad_shapes), batch=batch, in_hw=(height, width),
                input_dim=input_dim, x_pad_shape=(rows0_pad, lanes0_pad),
                n_layers=n_layers, num_scales=num_scales)


# ----------------------------------------------------------------------------
# Fused forward (single gridless pallas_call; all operands whole-array in VMEM)
# ----------------------------------------------------------------------------
def dis_forward(prep, x_nchw):
    n, c = prep["batch"], prep["input_dim"]
    h, w = prep["in_hw"]
    rows_real, lanes_real = n * h, w * c
    rows_pad, lanes_pad = prep["x_pad_shape"]
    num_scales, n_layers = prep["num_scales"], prep["n_layers"]

    # NCHW -> lane-dense (N*H, W*C) row-matrix layout, zero-padded to (8k, 128m)
    x_rows = jnp.transpose(x_nchw, (0, 2, 3, 1)).reshape(rows_real, lanes_real)
    x_pad = jnp.pad(x_rows.astype(jnp.float32),
                    ((0, rows_pad - rows_real), (0, lanes_pad - lanes_real)))

    inputs = [x_pad]
    for scale in prep["scales"]:
        inputs.append(scale["bias_all"])
        for (S, B) in scale["layers"]:
            inputs.extend([S, B])

    out_shapes = tuple(jax.ShapeDtypeStruct(shape, jnp.float32)
                       for shape in prep["out_pad_shapes"])
    in_specs = [pl.BlockSpec(memory_space=pltpu.MemorySpace.VMEM) for _ in inputs]
    out_specs = tuple(pl.BlockSpec(memory_space=pltpu.MemorySpace.VMEM) for _ in out_shapes)

    kernel = functools.partial(_dis_fused_kernel, num_scales=num_scales,
                               n_layers=n_layers, meta=prep["meta"])
    outs = pl.pallas_call(
        kernel,
        out_shape=out_shapes,
        in_specs=in_specs,
        out_specs=out_specs,
    )(*inputs)

    results = []
    for (ho, wo, co), o in zip(prep["out_info"], outs):
        o = o[:n * ho, :wo * co].reshape(n, ho, wo, co).transpose(0, 3, 1, 2)  # -> NCHW
        results.append(o)
    return results


# ----------------------------------------------------------------------------
# Plain-XLA reference (f32) for a sanity check of the reformulation
# ----------------------------------------------------------------------------
def _ref_conv_block(x, w, b, stride, pad, pad_type, act):
    if pad > 0:
        mode = "reflect" if pad_type == "reflect" else "constant"
        x = jnp.pad(x, ((0, 0), (pad, pad), (pad, pad), (0, 0)), mode=mode)
    y = jax.lax.conv_general_dilated(x, w, (stride, stride), "VALID",
                                     dimension_numbers=("NHWC", "HWIO", "NHWC"))
    y = y + b
    if act:
        y = jnp.where(y >= 0.0, y, NEG_SLOPE * y)
    return y


def _ref_avgpool_3x3_s2(x):
    pad = [(0, 0), (1, 1), (1, 1), (0, 0)]
    s = jax.lax.reduce_window(x, 0.0, jax.lax.add, (1, 3, 3, 1), (1, 2, 2, 1), pad)
    cnt = jax.lax.reduce_window(jnp.ones_like(x[..., :1]), 0.0, jax.lax.add,
                                (1, 3, 3, 1), (1, 2, 2, 1), pad)
    return s / cnt


def dis_forward_reference(params, x_nchw):
    x = jnp.transpose(x_nchw, (0, 2, 3, 1))
    outs = []
    for layers in params:
        hcur = x
        for layer in layers:
            hcur = _ref_conv_block(hcur, layer["W"], layer["b"], layer["stride"],
                                   layer["pad"], layer["pad_type"], layer["act"])
        outs.append(jnp.transpose(hcur, (0, 3, 1, 2)))
        x = _ref_avgpool_3x3_s2(x)
    return outs


# TODO(synk): calc_dis_loss / calc_enc_loss are trivial scalar (lsgan) reductions over the
# forward outputs and are left to plain JAX rather than separate kernels.

if __name__ == "__main__":
    key = jax.random.PRNGKey(0)
    pkey, xkey = jax.random.split(key)

    # Dis(input_dim=3, params={n_layer:2, dim:8, norm:'none', activ:'lrelu',
    #                          num_scales:2, pad_type:'reflect', gan_type:'lsgan'})
    params = init_dis_params(pkey, input_dim=3, dim=8, n_layer=2, num_scales=2,
                             pad_type="reflect")
    x = jax.random.normal(xkey, (2, 3, 32, 32), jnp.float32)   # NCHW, like PyTorch

    prep = prepare_dis(params, batch=2, height=32, width=32, input_dim=3)
    fwd = jax.jit(functools.partial(dis_forward, prep))

    outs = jax.block_until_ready(fwd(x))

    # Expected shapes: scale 0 -> (2,1,6,6); scale 1 (after 3x3/s2 avgpool) -> (2,1,2,2)
    assert outs[0].shape == (2, 1, 6, 6), outs[0].shape
    assert outs[1].shape == (2, 1, 2, 2), outs[1].shape
    assert all(bool(jnp.all(jnp.isfinite(o))) for o in outs)

    # Sanity check against a plain-XLA f32 reference (bf16 MXU weights -> loose tolerance)
    refs = jax.block_until_ready(dis_forward_reference(params, x))
    for o, r in zip(outs, refs):
        err = float(jnp.max(jnp.abs(o - r)))
        assert err < 0.2, f"mismatch vs reference: {err}"

    print("KERNEL_OK")
</pallas_src>

<mosaic_0001>
module attributes {stable_mosaic.version = 11 : i64} {
  func.func @_dis_fused_kernel(%arg0: memref<64x128xf32, #tpu.memory_space<vmem>>, %arg1: memref<4x1x256xf32, #tpu.memory_space<vmem>>, %arg2: memref<4x32x64xf32, #tpu.memory_space<vmem>>, %arg3: memref<128x512xbf16, #tpu.memory_space<vmem>>, %arg4: memref<4x16x32xf32, #tpu.memory_space<vmem>>, %arg5: memref<128x512xbf16, #tpu.memory_space<vmem>>, %arg6: memref<4x16x16xf32, #tpu.memory_space<vmem>>, %arg7: memref<128x1024xbf16, #tpu.memory_space<vmem>>, %arg8: memref<4x16x16xf32, #tpu.memory_space<vmem>>, %arg9: memref<256x512xbf16, #tpu.memory_space<vmem>>, %arg10: memref<4x1x128xf32, #tpu.memory_space<vmem>>, %arg11: memref<4x16x64xf32, #tpu.memory_space<vmem>>, %arg12: memref<128x512xbf16, #tpu.memory_space<vmem>>, %arg13: memref<4x8x16xf32, #tpu.memory_space<vmem>>, %arg14: memref<128x512xbf16, #tpu.memory_space<vmem>>, %arg15: memref<4x8x8xf32, #tpu.memory_space<vmem>>, %arg16: memref<128x512xbf16, #tpu.memory_space<vmem>>, %arg17: memref<4x8x8xf32, #tpu.memory_space<vmem>>, %arg18: memref<128x512xbf16, #tpu.memory_space<vmem>>, %arg19: memref<16x128xf32, #tpu.memory_space<vmem>>, %arg20: memref<8x128xf32, #tpu.memory_space<vmem>>) attributes {dimension_semantics = [], scalar_prefetch = 0 : i64, scratch_operands = 0 : i64, tpu.core_type = #tpu.core_type<tc>} {
    %c0 = arith.constant 0 : index
    %c0_0 = arith.constant 0 : index
    %0 = vector.load %arg0[%c0, %c0_0] : memref<64x128xf32, #tpu.memory_space<vmem>>, vector<64x128xf32>
    %1 = arith.truncf %0 : vector<64x128xf32> to vector<64x128xbf16>
    %c0_1 = arith.constant 0 : index
    %c0_2 = arith.constant 0 : index
    %2 = vector.load %arg3[%c0_1, %c0_2] : memref<128x512xbf16, #tpu.memory_space<vmem>>, vector<128x512xbf16>
    %cst = arith.constant dense<0.000000e+00> : vector<64x512xf32>
    %3 = tpu.matmul %1, %2, %cst {dimension_numbers = #tpu.dot_dimension_numbers<[1], [0], [0], [1], [0, 0, 1, 1], [], []>} : vector<64x128xbf16>, vector<128x512xbf16>, vector<64x512xf32> -> vector<64x512xf32>
    %4 = vector.extract_strided_slice %3 {offsets = [0, 0], sizes = [64, 128], strides = [1, 1]} : vector<64x512xf32> to vector<64x128xf32>
    %c0_3 = arith.constant 0 : index
    %c0_4 = arith.constant 0 : index
    %c0_5 = arith.constant 0 : index
    %5 = vector.load %arg2[%c0_3, %c0_4, %c0_5] : memref<4x32x64xf32, #tpu.memory_space<vmem>>, vector<1x32x64xf32>
    %6 = vector.shape_cast %5 : vector<1x32x64xf32> to vector<32x64xf32>
    %cst_6 = arith.constant dense<0.000000e+00> : vector<32x128xf32>
    %7 = tpu.matmul %6, %4, %cst_6 {dimension_numbers = #tpu.dot_dimension_numbers<[1], [0], [0], [1], [0, 0, 1, 1], [], []>} : vector<32x64xf32>, vector<64x128xf32>, vector<32x128xf32> -> vector<32x128xf32>
    %8 = vector.extract_strided_slice %3 {offsets = [0, 128], sizes = [64, 128], strides = [1, 1]} : vector<64x512xf32> to vector<64x128xf32>
    %c1 = arith.constant 1 : index
    %c0_7 = arith.constant 0 : index
    %c0_8 = arith.constant 0 : index
    %9 = vector.load %arg2[%c1, %c0_7, %c0_8] : memref<4x32x64xf32, #tpu.memory_space<vmem>>, vector<1x32x64xf32>
    %10 = vector.shape_cast %9 : vector<1x32x64xf32> to vector<32x64xf32>
    %cst_9 = arith.constant dense<0.000000e+00> : vector<32x128xf32>
    %11 = tpu.matmul %10, %8, %cst_9 {dimension_numbers = #tpu.dot_dimension_numbers<[1], [0], [0], [1], [0, 0, 1, 1], [], []>} : vector<32x64xf32>, vector<64x128xf32>, vector<32x128xf32> -> vector<32x128xf32>
    %12 = arith.addf %7, %11 : vector<32x128xf32>
    %13 = vector.extract_strided_slice %3 {offsets = [0, 256], sizes = [64, 128], strides = [1, 1]} : vector<64x512xf32> to vector<64x128xf32>
    %c2 = arith.constant 2 : index
    %c0_10 = arith.constant 0 : index
    %c0_11 = arith.constant 0 : index
    %14 = vector.load %arg2[%c2, %c0_10, %c0_11] : memref<4x32x64xf32, #tpu.memory_space<vmem>>, vector<1x32x64xf32>
    %15 = vector.shape_cast %14 : vector<1x32x64xf32> to vector<32x64xf32>
    %cst_12 = arith.constant dense<0.000000e+00> : vector<32x128xf32>
    %16 = tpu.matmul %15, %13, %cst_12 {dimension_numbers = #tpu.dot_dimension_numbers<[1], [0], [0], [1], [0, 0, 1, 1], [], []>} : vector<32x64xf32>, vector<64x128xf32>, vector<32x128xf32> -> vector<32x128xf32>
    %17 = arith.addf %12, %16 : vector<32x128xf32>
    %18 = vector.extract_strided_slice %3 {offsets = [0, 384], sizes = [64, 128], strides = [1, 1]} : vector<64x512xf32> to vector<64x128xf32>
    %c3 = arith.constant 3 : index
    %c0_13 = arith.constant 0 : index
    %c0_14 = arith.constant 0 : index
    %19 = vector.load %arg2[%c3, %c0_13, %c0_14] : memref<4x32x64xf32, #tpu.memory_space<vmem>>, vector<1x32x64xf32>
    %20 = vector.shape_cast %19 : vector<1x32x64xf32> to vector<32x64xf32>
    %cst_15 = arith.constant dense<0.000000e+00> : vector<32x128xf32>
    %21 = tpu.matmul %20, %18, %cst_15 {dimension_numbers = #tpu.dot_dimension_numbers<[1], [0], [0], [1], [0, 0, 1, 1], [], []>} : vector<32x64xf32>, vector<64x128xf32>, vector<32x128xf32> -> vector<32x128xf32>
    %22 = arith.addf %17, %21 : vector<32x128xf32>
    %c0_16 = arith.constant 0 : index
    %c0_17 = arith.constant 0 : index
    %c0_18 = arith.constant 0 : index
    %23 = vector.load %arg1[%c0_16, %c0_17, %c0_18] : memref<4x1x256xf32, #tpu.memory_space<vmem>>, vector<1x1x256xf32>
    %24 = vector.shape_cast %23 : vector<1x1x256xf32> to vector<1x256xf32>
    %25 = vector.extract_strided_slice %24 {offsets = [0, 0], sizes = [1, 128], strides = [1, 1]} : vector<1x256xf32> to vector<1x128xf32>
    %26 = vector.broadcast %25 : vector<1x128xf32> to vector<32x128xf32>
    %27 = arith.addf %22, %26 : vector<32x128xf32>
    %cst_19 = arith.constant 2.000000e-01 : f32
    %28 = vector.broadcast %cst_19 : f32 to vector<32x128xf32>
    %29 = arith.mulf %28, %27 : vector<32x128xf32>
    %30 = arith.maximumf %27, %29 : vector<32x128xf32>
    %31 = arith.truncf %30 : vector<32x128xf32> to vector<32x128xbf16>
    %c0_20 = arith.constant 0 : index
    %c0_21 = arith.constant 0 : index
    %32 = vector.load %arg5[%c0_20, %c0_21] : memref<128x512xbf16, #tpu.memory_space<vmem>>, vector<128x512xbf16>
    %cst_22 = arith.constant dense<0.000000e+00> : vector<32x512xf32>
    %33 = tpu.matmul %31, %32, %cst_22 {dimension_numbers = #tpu.dot_dimension_numbers<[1], [0], [0], [1], [0, 0, 1, 1], [], []>} : vector<32x128xbf16>, vector<128x512xbf16>, vector<32x512xf32> -> vector<32x512xf32>
    %34 = vector.extract_strided_slice %33 {offsets = [0, 0], sizes = [32, 128], strides = [1, 1]} : vector<32x512xf32> to vector<32x128xf32>
    %c0_23 = arith.constant 0 : index
    %c0_24 = arith.constant 0 : index
    %c0_25 = arith.constant 0 : index
    %35 = vector.load %arg4[%c0_23, %c0_24, %c0_25] : memref<4x16x32xf32, #tpu.memory_space<vmem>>, vector<1x16x32xf32>
    %36 = vector.shape_cast %35 : vector<1x16x32xf32> to vector<16x32xf32>
    %cst_26 = arith.constant dense<0.000000e+00> : vector<16x128xf32>
    %37 = tpu.matmul %36, %34, %cst_26 {dimension_numbers = #tpu.dot_dimension_numbers<[1], [0], [0], [1], [0, 0, 1, 1], [], []>} : vector<16x32xf32>, vector<32x128xf32>, vector<16x128xf32> -> vector<16x128xf32>
    %38 = vector.extract_strided_slice %33 {offsets = [0, 128], sizes = [32, 128], strides = [1, 1]} : vector<32x512xf32> to vector<32x128xf32>
    %c1_27 = arith.constant 1 : index
    %c0_28 = arith.constant 0 : index
    %c0_29 = arith.constant 0 : index
    %39 = vector.load %arg4[%c1_27, %c0_28, %c0_29] : memref<4x16x32xf32, #tpu.memory_space<vmem>>, vector<1x16x32xf32>
    %40 = vector.shape_cast %39 : vector<1x16x32xf32> to vector<16x32xf32>
    %cst_30 = arith.constant dense<0.000000e+00> : vector<16x128xf32>
    %41 = tpu.matmul %40, %38, %cst_30 {dimension_numbers = #tpu.dot_dimension_numbers<[1], [0], [0], [1], [0, 0, 1, 1], [], []>} : vector<16x32xf32>, vector<32x128xf32>, vector<16x128xf32> -> vector<16x128xf32>
    %42 = arith.addf %37, %41 : vector<16x128xf32>
    %43 = vector.extract_strided_slice %33 {offsets = [0, 256], sizes = [32, 128], strides = [1, 1]} : vector<32x512xf32> to vector<32x128xf32>
    %c2_31 = arith.constant 2 : index
    %c0_32 = arith.constant 0 : index
    %c0_33 = arith.constant 0 : index
    %44 = vector.load %arg4[%c2_31, %c0_32, %c0_33] : memref<4x16x32xf32, #tpu.memory_space<vmem>>, vector<1x16x32xf32>
    %45 = vector.shape_cast %44 : vector<1x16x32xf32> to vector<16x32xf32>
    %cst_34 = arith.constant dense<0.000000e+00> : vector<16x128xf32>
    %46 = tpu.matmul %45, %43, %cst_34 {dimension_numbers = #tpu.dot_dimension_numbers<[1], [0], [0], [1], [0, 0, 1, 1], [], []>} : vector<16x32xf32>, vector<32x128xf32>, vector<16x128xf32> -> vector<16x128xf32>
    %47 = arith.addf %42, %46 : vector<16x128xf32>
    %48 = vector.extract_strided_slice %33 {offsets = [0, 384], sizes = [32, 128], strides = [1, 1]} : vector<32x512xf32> to vector<32x128xf32>
    %c3_35 = arith.constant 3 : index
    %c0_36 = arith.constant 0 : index
    %c0_37 = arith.constant 0 : index
    %49 = vector.load %arg4[%c3_35, %c0_36, %c0_37] : memref<4x16x32xf32, #tpu.memory_space<vmem>>, vector<1x16x32xf32>
    %50 = vector.shape_cast %49 : vector<1x16x32xf32> to vector<16x32xf32>
    %cst_38 = arith.constant dense<0.000000e+00> : vector<16x128xf32>
    %51 = tpu.matmul %50, %48, %cst_38 {dimension_numbers = #tpu.dot_dimension_numbers<[1], [0], [0], [1], [0, 0, 1, 1], [], []>} : vector<16x32xf32>, vector<32x128xf32>, vector<16x128xf32> -> vector<16x128xf32>
    %52 = arith.addf %47, %51 : vector<16x128xf32>
    %c1_39 = arith.constant 1 : index
    %c0_40 = arith.constant 0 : index
    %c0_41 = arith.constant 0 : index
    %53 = vector.load %arg1[%c1_39, %c0_40, %c0_41] : memref<4x1x256xf32, #tpu.memory_space<vmem>>, vector<1x1x256xf32>
    %54 = vector.shape_cast %53 : vector<1x1x256xf32> to vector<1x256xf32>
    %55 = vector.extract_strided_slice %54 {offsets = [0, 0], sizes = [1, 128], strides = [1, 1]} : vector<1x256xf32> to vector<1x128xf32>
    %56 = vector.broadcast %55 : vector<1x128xf32> to vector<16x128xf32>
    %57 = arith.addf %52, %56 : vector<16x128xf32>
    %cst_42 = arith.constant 2.000000e-01 : f32
    %58 = vector.broadcast %cst_42 : f32 to vector<16x128xf32>
    %59 = arith.mulf %58, %57 : vector<16x128xf32>
    %60 = arith.maximumf %57, %59 : vector<16x128xf32>
    %61 = arith.truncf %60 : vector<16x128xf32> to vector<16x128xbf16>
    %c0_43 = arith.constant 0 : index
    %c0_44 = arith.constant 0 : index
    %62 = vector.load %arg7[%c0_43, %c0_44] : memref<128x1024xbf16, #tpu.memory_space<vmem>>, vector<128x1024xbf16>
    %cst_45 = arith.constant dense<0.000000e+00> : vector<16x1024xf32>
    %63 = tpu.matmul %61, %62, %cst_45 {dimension_numbers = #tpu.dot_dimension_numbers<[1], [0], [0], [1], [0, 0, 1, 1], [], []>} : vector<16x128xbf16>, vector<128x1024xbf16>, vector<16x1024xf32> -> vector<16x1024xf32>
    %64 = vector.extract_strided_slice %63 {offsets = [0, 0], sizes = [16, 256], strides = [1, 1]} : vector<16x1024xf32> to vector<16x256xf32>
    %c0_46 = arith.constant 0 : index
    %c0_47 = arith.constant 0 : index
    %c0_48 = arith.constant 0 : index
    %65 = vector.load %arg6[%c0_46, %c0_47, %c0_48] : memref<4x16x16xf32, #tpu.memory_space<vmem>>, vector<1x16x16xf32>
    %66 = vector.shape_cast %65 : vector<1x16x16xf32> to vector<16x16xf32>
    %cst_49 = arith.constant dense<0.000000e+00> : vector<16x256xf32>
    %67 = tpu.matmul %66, %64, %cst_49 {dimension_numbers = #tpu.dot_dimension_numbers<[1], [0], [0], [1], [0, 0, 1, 1], [], []>} : vector<16x16xf32>, vector<16x256xf32>, vector<16x256xf32> -> vector<16x256xf32>
    %68 = vector.extract_strided_slice %63 {offsets = [0, 256], sizes = [16, 256], strides = [1, 1]} : vector<16x1024xf32> to vector<16x256xf32>
    %c1_50 = arith.constant 1 : index
    %c0_51 = arith.constant 0 : index
    %c0_52 = arith.constant 0 : index
    %69 = vector.load %arg6[%c1_50, %c0_51, %c0_52] : memref<4x16x16xf32, #tpu.memory_space<vmem>>, vector<1x16x16xf32>
    %70 = vector.shape_cast %69 : vector<1x16x16xf32> to vector<16x16xf32>
    %cst_53 = arith.constant dense<0.000000e+00> : vector<16x256xf32>
    %71 = tpu.matmul %70, %68, %cst_53 {dimension_numbers = #tpu.dot_dimension_numbers<[1], [0], [0], [1], [0, 0, 1, 1], [], []>} : vector<16x16xf32>, vector<16x256xf32>, vector<16x256xf32> -> vector<16x256xf32>
    %72 = arith.addf %67, %71 : vector<16x256xf32>
    %73 = vector.extract_strided_slice %63 {offsets = [0, 512], sizes = [16, 256], strides = [1, 1]} : vector<16x1024xf32> to vector<16x256xf32>
    %c2_54 = arith.constant 2 : index
    %c0_55 = arith.constant 0 : index
    %c0_56 = arith.constant 0 : index
    %74 = vector.load %arg6[%c2_54, %c0_55, %c0_56] : memref<4x16x16xf32, #tpu.memory_space<vmem>>, vector<1x16x16xf32>
    %75 = vector.shape_cast %74 : vector<1x16x16xf32> to vector<16x16xf32>
    %cst_57 = arith.constant dense<0.000000e+00> : vector<16x256xf32>
    %76 = tpu.matmul %75, %73, %cst_57 {dimension_numbers = #tpu.dot_dimension_numbers<[1], [0], [0], [1], [0, 0, 1, 1], [], []>} : vector<16x16xf32>, vector<16x256xf32>, vector<16x256xf32> -> vector<16x256xf32>
    %77 = arith.addf %72, %76 : vector<16x256xf32>
    %78 = vector.extract_strided_slice %63 {offsets = [0, 768], sizes = [16, 256], strides = [1, 1]} : vector<16x1024xf32> to vector<16x256xf32>
    %c3_58 = arith.constant 3 : index
    %c0_59 = arith.constant 0 : index
    %c0_60 = arith.constant 0 : index
    %79 = vector.load %arg6[%c3_58, %c0_59, %c0_60] : memref<4x16x16xf32, #tpu.memory_space<vmem>>, vector<1x16x16xf32>
    %80 = vector.shape_cast %79 : vector<1x16x16xf32> to vector<16x16xf32>
    %cst_61 = arith.constant dense<0.000000e+00> : vector<16x256xf32>
    %81 = tpu.matmul %80, %78, %cst_61 {dimension_numbers = #tpu.dot_dimension_numbers<[1], [0], [0], [1], [0, 0, 1, 1], [], []>} : vector<16x16xf32>, vector<16x256xf32>, vector<16x256xf32> -> vector<16x256xf32>
    %82 = arith.addf %77, %81 : vector<16x256xf32>
    %c2_62 = arith.constant 2 : index
    %c0_63 = arith.constant 0 : index
    %c0_64 = arith.constant 0 : index
    %83 = vector.load %arg1[%c2_62, %c0_63, %c0_64] : memref<4x1x256xf32, #tpu.memory_space<vmem>>, vector<1x1x256xf32>
    %84 = vector.shape_cast %83 : vector<1x1x256xf32> to vector<1x256xf32>
    %85 = vector.broadcast %84 : vector<1x256xf32> to vector<16x256xf32>
    %86 = arith.addf %82, %85 : vector<16x256xf32>
    %cst_65 = arith.constant 2.000000e-01 : f32
    %87 = vector.broadcast %cst_65 : f32 to vector<16x256xf32>
    %88 = arith.mulf %87, %86 : vector<16x256xf32>
    %89 = arith.maximumf %86, %88 : vector<16x256xf32>
    %90 = arith.truncf %89 : vector<16x256xf32> to vector<16x256xbf16>
    %c0_66 = arith.constant 0 : index
    %c0_67 = arith.constant 0 : index
    %91 = vector.load %arg9[%c0_66, %c0_67] : memref<256x512xbf16, #tpu.memory_space<vmem>>, vector<256x512xbf16>
    %cst_68 = arith.constant dense<0.000000e+00> : vector<16x512xf32>
    %92 = tpu.matmul %90, %91, %cst_68 {dimension_numbers = #tpu.dot_dimension_numbers<[1], [0], [0], [1], [0, 0, 1, 1], [], []>} : vector<16x256xbf16>, vector<256x512xbf16>, vector<16x512xf32> -> vector<16x512xf32>
    %93 = vector.extract_strided_slice %92 {offsets = [0, 0], sizes = [16, 128], strides = [1, 1]} : vector<16x512xf32> to vector<16x128xf32>
    %c0_69 = arith.constant 0 : index
    %c0_70 = arith.constant 0 : index
    %c0_71 = arith.constant 0 : index
    %94 = vector.load %arg8[%c0_69, %c0_70, %c0_71] : memref<4x16x16xf32, #tpu.memory_space<vmem>>, vector<1x16x16xf32>
    %95 = vector.shape_cast %94 : vector<1x16x16xf32> to vector<16x16xf32>
    %cst_72 = arith.constant dense<0.000000e+00> : vector<16x128xf32>
    %96 = tpu.matmul %95, %93, %cst_72 {dimension_numbers = #tpu.dot_dimension_numbers<[1], [0], [0], [1], [0, 0, 1, 1], [], []>} : vector<16x16xf32>, vector<16x128xf32>, vector<16x128xf32> -> vector<16x128xf32>
    %97 = vector.extract_strided_slice %92 {offsets = [0, 128], sizes = [16, 128], strides = [1, 1]} : vector<16x512xf32> to vector<16x128xf32>
    %c1_73 = arith.constant 1 : index
    %c0_74 = arith.constant 0 : index
    %c0_75 = arith.constant 0 : index
    %98 = vector.load %arg8[%c1_73, %c0_74, %c0_75] : memref<4x16x16xf32, #tpu.memory_space<vmem>>, vector<1x16x16xf32>
    %99 = vector.shape_cast %98 : vector<1x16x16xf32> to vector<16x16xf32>
    %cst_76 = arith.constant dense<0.000000e+00> : vector<16x128xf32>
    %100 = tpu.matmul %99, %97, %cst_76 {dimension_numbers = #tpu.dot_dimension_numbers<[1], [0], [0], [1], [0, 0, 1, 1], [], []>} : vector<16x16xf32>, vector<16x128xf32>, vector<16x128xf32> -> vector<16x128xf32>
    %101 = arith.addf %96, %100 : vector<16x128xf32>
    %102 = vector.extract_strided_slice %92 {offsets = [0, 256], sizes = [16, 128], strides = [1, 1]} : vector<16x512xf32> to vector<16x128xf32>
    %c2_77 = arith.constant 2 : index
    %c0_78 = arith.constant 0 : index
    %c0_79 = arith.constant 0 : index
    %103 = vector.load %arg8[%c2_77, %c0_78, %c0_79] : memref<4x16x16xf32, #tpu.memory_space<vmem>>, vector<1x16x16xf32>
    %104 = vector.shape_cast %103 : vector<1x16x16xf32> to vector<16x16xf32>
    %cst_80 = arith.constant dense<0.000000e+00> : vector<16x128xf32>
    %105 = tpu.matmul %104, %102, %cst_80 {dimension_numbers = #tpu.dot_dimension_numbers<[1], [0], [0], [1], [0, 0, 1, 1], [], []>} : vector<16x16xf32>, vector<16x128xf32>, vector<16x128xf32> -> vector<16x128xf32>
    %106 = arith.addf %101, %105 : vector<16x128xf32>
    %107 = vector.extract_strided_slice %92 {offsets = [0, 384], sizes = [16, 128], strides = [1, 1]} : vector<16x512xf32> to vector<16x128xf32>
    %c3_81 = arith.constant 3 : index
    %c0_82 = arith.constant 0 : index
    %c0_83 = arith.constant 0 : index
    %108 = vector.load %arg8[%c3_81, %c0_82, %c0_83] : memref<4x16x16xf32, #tpu.memory_space<vmem>>, vector<1x16x16xf32>
    %109 = vector.shape_cast %108 : vector<1x16x16xf32> to vector<16x16xf32>
    %cst_84 = arith.constant dense<0.000000e+00> : vector<16x128xf32>
    %110 = tpu.matmul %109, %107, %cst_84 {dimension_numbers = #tpu.dot_dimension_numbers<[1], [0], [0], [1], [0, 0, 1, 1], [], []>} : vector<16x16xf32>, vector<16x128xf32>, vector<16x128xf32> -> vector<16x128xf32>
    %111 = arith.addf %106, %110 : vector<16x128xf32>
    %c3_85 = arith.constant 3 : index
    %c0_86 = arith.constant 0 : index
    %c0_87 = arith.constant 0 : index
    %112 = vector.load %arg1[%c3_85, %c0_86, %c0_87] : memref<4x1x256xf32, #tpu.memory_space<vmem>>, vector<1x1x256xf32>
    %113 = vector.shape_cast %112 : vector<1x1x256xf32> to vector<1x256xf32>
    %114 = vector.extract_strided_slice %113 {offsets = [0, 0], sizes = [1, 128], strides = [1, 1]} : vector<1x256xf32> to vector<1x128xf32>
    %115 = vector.broadcast %114 : vector<1x128xf32> to vector<16x128xf32>
    %116 = arith.addf %111, %115 : vector<16x128xf32>
    %c0_88 = arith.constant 0 : index
    %c0_89 = arith.constant 0 : index
    %117 = vector.load %arg19[%c0_88, %c0_89] : memref<16x128xf32, #tpu.memory_space<vmem>>, vector<16x128xf32>
    tpu.vector_store %arg19[%c0_88, %c0_89], %116 {strides = array<i32>} : memref<16x128xf32, #tpu.memory_space<vmem>>, vector<16x128xf32>,
    %c0_90 = arith.constant 0 : index
    %c0_91 = arith.constant 0 : index
    %118 = vector.load %arg12[%c0_90, %c0_91] : memref<128x512xbf16, #tpu.memory_space<vmem>>, vector<128x512xbf16>
    %cst_92 = arith.constant dense<0.000000e+00> : vector<64x512xf32>
    %119 = tpu.matmul %1, %118, %cst_92 {dimension_numbers = #tpu.dot_dimension_numbers<[1], [0], [0], [1], [0, 0, 1, 1], [], []>} : vector<64x128xbf16>, vector<128x512xbf16>, vector<64x512xf32> -> vector<64x512xf32>
    %120 = vector.extract_strided_slice %119 {offsets = [0, 0], sizes = [64, 128], strides = [1, 1]} : vector<64x512xf32> to vector<64x128xf32>
    %c0_93 = arith.constant 0 : index
    %c0_94 = arith.constant 0 : index
    %c0_95 = arith.constant 0 : index
    %121 = vector.load %arg11[%c0_93, %c0_94, %c0_95] : memref<4x16x64xf32, #tpu.memory_space<vmem>>, vector<1x16x64xf32>
    %122 = vector.shape_cast %121 : vector<1x16x64xf32> to vector<16x64xf32>
    %cst_96 = arith.constant dense<0.000000e+00> : vector<16x128xf32>
    %123 = tpu.matmul %122, %120, %cst_96 {dimension_numbers = #tpu.dot_dimension_numbers<[1], [0], [0], [1], [0, 0, 1, 1], [], []>} : vector<16x64xf32>, vector<64x128xf32>, vector<16x128xf32> -> vector<16x128xf32>
    %124 = vector.extract_strided_slice %119 {offsets = [0, 128], sizes = [64, 128], strides = [1, 1]} : vector<64x512xf32> to vector<64x128xf32>
    %c1_97 = arith.constant 1 : index
    %c0_98 = arith.constant 0 : index
    %c0_99 = arith.constant 0 : index
    %125 = vector.load %arg11[%c1_97, %c0_98, %c0_99] : memref<4x16x64xf32, #tpu.memory_space<vmem>>, vector<1x16x64xf32>
    %126 = vector.shape_cast %125 : vector<1x16x64xf32> to vector<16x64xf32>
    %cst_100 = arith.constant dense<0.000000e+00> : vector<16x128xf32>
    %127 = tpu.matmul %126, %124, %cst_100 {dimension_numbers = #tpu.dot_dimension_numbers<[1], [0], [0], [1], [0, 0, 1, 1], [], []>} : vector<16x64xf32>, vector<64x128xf32>, vector<16x128xf32> -> vector<16x128xf32>
    %128 = arith.addf %123, %127 : vector<16x128xf32>
    %129 = vector.extract_strided_slice %119 {offsets = [0, 256], sizes = [64, 128], strides = [1, 1]} : vector<64x512xf32> to vector<64x128xf32>
    %c2_101 = arith.constant 2 : index
    %c0_102 = arith.constant 0 : index
    %c0_103 = arith.constant 0 : index
    %130 = vector.load %arg11[%c2_101, %c0_102, %c0_103] : memref<4x16x64xf32, #tpu.memory_space<vmem>>, vector<1x16x64xf32>
    %131 = vector.shape_cast %130 : vector<1x16x64xf32> to vector<16x64xf32>
    %cst_104 = arith.constant dense<0.000000e+00> : vector<16x128xf32>
    %132 = tpu.matmul %131, %129, %cst_104 {dimension_numbers = #tpu.dot_dimension_numbers<[1], [0], [0], [1], [0, 0, 1, 1], [], []>} : vector<16x64xf32>, vector<64x128xf32>, vector<16x128xf32> -> vector<16x128xf32>
    %133 = arith.addf %128, %132 : vector<16x128xf32>
    %134 = vector.extract_strided_slice %119 {offsets = [0, 384], sizes = [64, 128], strides = [1, 1]} : vector<64x512xf32> to vector<64x128xf32>
    %c3_105 = arith.constant 3 : index
    %c0_106 = arith.constant 0 : index
    %c0_107 = arith.constant 0 : index
    %135 = vector.load %arg11[%c3_105, %c0_106, %c0_107] : memref<4x16x64xf32, #tpu.memory_space<vmem>>, vector<1x16x64xf32>
    %136 = vector.shape_cast %135 : vector<1x16x64xf32> to vector<16x64xf32>
    %cst_108 = arith.constant dense<0.000000e+00> : vector<16x128xf32>
    %137 = tpu.matmul %136, %134, %cst_108 {dimension_numbers = #tpu.dot_dimension_numbers<[1], [0], [0], [1], [0, 0, 1, 1], [], []>} : vector<16x64xf32>, vector<64x128xf32>, vector<16x128xf32> -> vector<16x128xf32>
    %138 = arith.addf %133, %137 : vector<16x128xf32>
    %c0_109 = arith.constant 0 : index
    %c0_110 = arith.constant 0 : index
    %c0_111 = arith.constant 0 : index
    %139 = vector.load %arg10[%c0_109, %c0_110, %c0_111] : memref<4x1x128xf32, #tpu.memory_space<vmem>>, vector<1x1x128xf32>
    %140 = vector.shape_cast %139 : vector<1x1x128xf32> to vector<1x128xf32>
    %141 = vector.broadcast %140 : vector<1x128xf32> to vector<16x128xf32>
    %142 = arith.addf %138, %141 : vector<16x128xf32>
    %cst_112 = arith.constant 2.000000e-01 : f32
    %143 = vector.broadcast %cst_112 : f32 to vector<16x128xf32>
    %144 = arith.mulf %143, %142 : vector<16x128xf32>
    %145 = arith.maximumf %142, %144 : vector<16x128xf32>
    %146 = arith.truncf %145 : vector<16x128xf32> to vector<16x128xbf16>
    %c0_113 = arith.constant 0 : index
    %c0_114 = arith.constant 0 : index
    %147 = vector.load %arg14[%c0_113, %c0_114] : memref<128x512xbf16, #tpu.memory_space<vmem>>, vector<128x512xbf16>
    %cst_115 = arith.constant dense<0.000000e+00> : vector<16x512xf32>
    %148 = tpu.matmul %146, %147, %cst_115 {dimension_numbers = #tpu.dot_dimension_numbers<[1], [0], [0], [1], [0, 0, 1, 1], [], []>} : vector<16x128xbf16>, vector<128x512xbf16>, vector<16x512xf32> -> vector<16x512xf32>
    %149 = vector.extract_strided_slice %148 {offsets = [0, 0], sizes = [16, 128], strides = [1, 1]} : vector<16x512xf32> to vector<16x128xf32>
    %c0_116 = arith.constant 0 : index
    %c0_117 = arith.constant 0 : index
    %c0_118 = arith.constant 0 : index
    %150 = vector.load %arg13[%c0_116, %c0_117, %c0_118] : memref<4x8x16xf32, #tpu.memory_space<vmem>>, vector<1x8x16xf32>
    %151 = vector.shape_cast %150 : vector<1x8x16xf32> to vector<8x16xf32>
    %cst_119 = arith.constant dense<0.000000e+00> : vector<8x128xf32>
    %152 = tpu.matmul %151, %149, %cst_119 {dimension_numbers = #tpu.dot_dimension_numbers<[1], [0], [0], [1], [0, 0, 1, 1], [], []>} : vector<8x16xf32>, vector<16x128xf32>, vector<8x128xf32> -> vector<8x128xf32>
    %153 = vector.extract_strided_slice %148 {offsets = [0, 128], sizes = [16, 128], strides = [1, 1]} : vector<16x512xf32> to vector<16x128xf32>
    %c1_120 = arith.constant 1 : index
    %c0_121 = arith.constant 0 : index
    %c0_122 = arith.constant 0 : index
    %154 = vector.load %arg13[%c1_120, %c0_121, %c0_122] : memref<4x8x16xf32, #tpu.memory_space<vmem>>, vector<1x8x16xf32>
    %155 = vector.shape_cast %154 : vector<1x8x16xf32> to vector<8x16xf32>
    %cst_123 = arith.constant dense<0.000000e+00> : vector<8x128xf32>
    %156 = tpu.matmul %155, %153, %cst_123 {dimension_numbers = #tpu.dot_dimension_numbers<[1], [0], [0], [1], [0, 0, 1, 1], [], []>} : vector<8x16xf32>, vector<16x128xf32>, vector<8x128xf32> -> vector<8x128xf32>
    %157 = arith.addf %152, %156 : vector<8x128xf32>
    %158 = vector.extract_strided_slice %148 {offsets = [0, 256], sizes = [16, 128], strides = [1, 1]} : vector<16x512xf32> to vector<16x128xf32>
    %c2_124 = arith.constant 2 : index
    %c0_125 = arith.constant 0 : index
    %c0_126 = arith.constant 0 : index
    %159 = vector.load %arg13[%c2_124, %c0_125, %c0_126] : memref<4x8x16xf32, #tpu.memory_space<vmem>>, vector<1x8x16xf32>
    %160 = vector.shape_cast %159 : vector<1x8x16xf32> to vector<8x16xf32>
    %cst_127 = arith.constant dense<0.000000e+00> : vector<8x128xf32>
    %161 = tpu.matmul %160, %158, %cst_127 {dimension_numbers = #tpu.dot_dimension_numbers<[1], [0], [0], [1], [0, 0, 1, 1], [], []>} : vector<8x16xf32>, vector<16x128xf32>, vector<8x128xf32> -> vector<8x128xf32>
    %162 = arith.addf %157, %161 : vector<8x128xf32>
    %163 = vector.extract_strided_slice %148 {offsets = [0, 384], sizes = [16, 128], strides = [1, 1]} : vector<16x512xf32> to vector<16x128xf32>
    %c3_128 = arith.constant 3 : index
    %c0_129 = arith.constant 0 : index
    %c0_130 = arith.constant 0 : index
    %164 = vector.load %arg13[%c3_128, %c0_129, %c0_130] : memref<4x8x16xf32, #tpu.memory_space<vmem>>, vector<1x8x16xf32>
    %165 = vector.shape_cast %164 : vector<1x8x16xf32> to vector<8x16xf32>
    %cst_131 = arith.constant dense<0.000000e+00> : vector<8x128xf32>
    %166 = tpu.matmul %165, %163, %cst_131 {dimension_numbers = #tpu.dot_dimension_numbers<[1], [0], [0], [1], [0, 0, 1, 1], [], []>} : vector<8x16xf32>, vector<16x128xf32>, vector<8x128xf32> -> vector<8x128xf32>
    %167 = arith.addf %162, %166 : vector<8x128xf32>
    %c1_132 = arith.constant 1 : index
    %c0_133 = arith.constant 0 : index
    %c0_134 = arith.constant 0 : index
    %168 = vector.load %arg10[%c1_132, %c0_133, %c0_134] : memref<4x1x128xf32, #tpu.memory_space<vmem>>, vector<1x1x128xf32>
    %169 = vector.shape_cast %168 : vector<1x1x128xf32> to vector<1x128xf32>
    %170 = vector.broadcast %169 : vector<1x128xf32> to vector<8x128xf32>
    %171 = arith.addf %167, %170 : vector<8x128xf32>
    %cst_135 = arith.constant 2.000000e-01 : f32
    %172 = vector.broadcast %cst_135 : f32 to vector<8x128xf32>
    %173 = arith.mulf %172, %171 : vector<8x128xf32>
    %174 = arith.maximumf %171, %173 : vector<8x128xf32>
    %175 = arith.truncf %174 : vector<8x128xf32> to vector<8x128xbf16>
    %c0_136 = arith.constant 0 : index
    %c0_137 = arith.constant 0 : index
    %176 = vector.load %arg16[%c0_136, %c0_137] : memref<128x512xbf16, #tpu.memory_space<vmem>>, vector<128x512xbf16>
    %cst_138 = arith.constant dense<0.000000e+00> : vector<8x512xf32>
    %177 = tpu.matmul %175, %176, %cst_138 {dimension_numbers = #tpu.dot_dimension_numbers<[1], [0], [0], [1], [0, 0, 1, 1], [], []>} : vector<8x128xbf16>, vector<128x512xbf16>, vector<8x512xf32> -> vector<8x512xf32>
    %178 = vector.extract_strided_slice %177 {offsets = [0, 0], sizes = [8, 128], strides = [1, 1]} : vector<8x512xf32> to vector<8x128xf32>
    %c0_139 = arith.constant 0 : index
    %c0_140 = arith.constant 0 : index
    %c0_141 = arith.constant 0 : index
    %179 = vector.load %arg15[%c0_139, %c0_140, %c0_141] : memref<4x8x8xf32, #tpu.memory_space<vmem>>, vector<1x8x8xf32>
    %180 = vector.shape_cast %179 : vector<1x8x8xf32> to vector<8x8xf32>
    %cst_142 = arith.constant dense<0.000000e+00> : vector<8x128xf32>
    %181 = tpu.matmul %180, %178, %cst_142 {dimension_numbers = #tpu.dot_dimension_numbers<[1], [0], [0], [1], [0, 0, 1, 1], [], []>} : vector<8x8xf32>, vector<8x128xf32>, vector<8x128xf32> -> vector<8x128xf32>
    %182 = vector.extract_strided_slice %177 {offsets = [0, 128], sizes = [8, 128], strides = [1, 1]} : vector<8x512xf32> to vector<8x128xf32>
    %c1_143 = arith.constant 1 : index
    %c0_144 = arith.constant 0 : index
    %c0_145 = arith.constant 0 : index
    %183 = vector.load %arg15[%c1_143, %c0_144, %c0_145] : memref<4x8x8xf32, #tpu.memory_space<vmem>>, vector<1x8x8xf32>
    %184 = vector.shape_cast %183 : vector<1x8x8xf32> to vector<8x8xf32>
    %cst_146 = arith.constant dense<0.000000e+00> : vector<8x128xf32>
    %185 = tpu.matmul %184, %182, %cst_146 {dimension_numbers = #tpu.dot_dimension_numbers<[1], [0], [0], [1], [0, 0, 1, 1], [], []>} : vector<8x8xf32>, vector<8x128xf32>, vector<8x128xf32> -> vector<8x128xf32>
    %186 = arith.addf %181, %185 : vector<8x128xf32>
    %187 = vector.extract_strided_slice %177 {offsets = [0, 256], sizes = [8, 128], strides = [1, 1]} : vector<8x512xf32> to vector<8x128xf32>
    %c2_147 = arith.constant 2 : index
    %c0_148 = arith.constant 0 : index
    %c0_149 = arith.constant 0 : index
    %188 = vector.load %arg15[%c2_147, %c0_148, %c0_149] : memref<4x8x8xf32, #tpu.memory_space<vmem>>, vector<1x8x8xf32>
    %189 = vector.shape_cast %188 : vector<1x8x8xf32> to vector<8x8xf32>
    %cst_150 = arith.constant dense<0.000000e+00> : vector<8x128xf32>
    %190 = tpu.matmul %189, %187, %cst_150 {dimension_numbers = #tpu.dot_dimension_numbers<[1], [0], [0], [1], [0, 0, 1, 1], [], []>} : vector<8x8xf32>, vector<8x128xf32>, vector<8x128xf32> -> vector<8x128xf32>
    %191 = arith.addf %186, %190 : vector<8x128xf32>
    %192 = vector.extract_strided_slice %177 {offsets = [0, 384], sizes = [8, 128], strides = [1, 1]} : vector<8x512xf32> to vector<8x128xf32>
    %c3_151 = arith.constant 3 : index
    %c0_152 = arith.constant 0 : index
    %c0_153 = arith.constant 0 : index
    %193 = vector.load %arg15[%c3_151, %c0_152, %c0_153] : memref<4x8x8xf32, #tpu.memory_space<vmem>>, vector<1x8x8xf32>
    %194 = vector.shape_cast %193 : vector<1x8x8xf32> to vector<8x8xf32>
    %cst_154 = arith.constant dense<0.000000e+00> : vector<8x128xf32>
    %195 = tpu.matmul %194, %192, %cst_154 {dimension_numbers = #tpu.dot_dimension_numbers<[1], [0], [0], [1], [0, 0, 1, 1], [], []>} : vector<8x8xf32>, vector<8x128xf32>, vector<8x128xf32> -> vector<8x128xf32>
    %196 = arith.addf %191, %195 : vector<8x128xf32>
    %c2_155 = arith.constant 2 : index
    %c0_156 = arith.constant 0 : index
    %c0_157 = arith.constant 0 : index
    %197 = vector.load %arg10[%c2_155, %c0_156, %c0_157] : memref<4x1x128xf32, #tpu.memory_space<vmem>>, vector<1x1x128xf32>
    %198 = vector.shape_cast %197 : vector<1x1x128xf32> to vector<1x128xf32>
    %199 = vector.broadcast %198 : vector<1x128xf32> to vector<8x128xf32>
    %200 = arith.addf %196, %199 : vector<8x128xf32>
    %cst_158 = arith.constant 2.000000e-01 : f32
    %201 = vector.broadcast %cst_158 : f32 to vector<8x128xf32>
    %202 = arith.mulf %201, %200 : vector<8x128xf32>
    %203 = arith.maximumf %200, %202 : vector<8x128xf32>
    %204 = arith.truncf %203 : vector<8x128xf32> to vector<8x128xbf16>
    %c0_159 = arith.constant 0 : index
    %c0_160 = arith.constant 0 : index
    %205 = vector.load %arg18[%c0_159, %c0_160] : memref<128x512xbf16, #tpu.memory_space<vmem>>, vector<128x512xbf16>
    %cst_161 = arith.constant dense<0.000000e+00> : vector<8x512xf32>
    %206 = tpu.matmul %204, %205, %cst_161 {dimension_numbers = #tpu.dot_dimension_numbers<[1], [0], [0], [1], [0, 0, 1, 1], [], []>} : vector<8x128xbf16>, vector<128x512xbf16>, vector<8x512xf32> -> vector<8x512xf32>
    %207 = vector.extract_strided_slice %206 {offsets = [0, 0], sizes = [8, 128], strides = [1, 1]} : vector<8x512xf32> to vector<8x128xf32>
    %c0_162 = arith.constant 0 : index
    %c0_163 = arith.constant 0 : index
    %c0_164 = arith.constant 0 : index
    %208 = vector.load %arg17[%c0_162, %c0_163, %c0_164] : memref<4x8x8xf32, #tpu.memory_space<vmem>>, vector<1x8x8xf32>
    %209 = vector.shape_cast %208 : vector<1x8x8xf32> to vector<8x8xf32>
    %cst_165 = arith.constant dense<0.000000e+00> : vector<8x128xf32>
    %210 = tpu.matmul %209, %207, %cst_165 {dimension_numbers = #tpu.dot_dimension_numbers<[1], [0], [0], [1], [0, 0, 1, 1], [], []>} : vector<8x8xf32>, vector<8x128xf32>, vector<8x128xf32> -> vector<8x128xf32>
    %211 = vector.extract_strided_slice %206 {offsets = [0, 128], sizes = [8, 128], strides = [1, 1]} : vector<8x512xf32> to vector<8x128xf32>
    %c1_166 = arith.constant 1 : index
    %c0_167 = arith.constant 0 : index
    %c0_168 = arith.constant 0 : index
    %212 = vector.load %arg17[%c1_166, %c0_167, %c0_168] : memref<4x8x8xf32, #tpu.memory_space<vmem>>, vector<1x8x8xf32>
    %213 = vector.shape_cast %212 : vector<1x8x8xf32> to vector<8x8xf32>
    %cst_169 = arith.constant dense<0.000000e+00> : vector<8x128xf32>
    %214 = tpu.matmul %213, %211, %cst_169 {dimension_numbers = #tpu.dot_dimension_numbers<[1], [0], [0], [1], [0, 0, 1, 1], [], []>} : vector<8x8xf32>, vector<8x128xf32>, vector<8x128xf32> -> vector<8x128xf32>
    %215 = arith.addf %210, %214 : vector<8x128xf32>
    %216 = vector.extract_strided_slice %206 {offsets = [0, 256], sizes = [8, 128], strides = [1, 1]} : vector<8x512xf32> to vector<8x128xf32>
    %c2_170 = arith.constant 2 : index
    %c0_171 = arith.constant 0 : index
    %c0_172 = arith.constant 0 : index
    %217 = vector.load %arg17[%c2_170, %c0_171, %c0_172] : memref<4x8x8xf32, #tpu.memory_space<vmem>>, vector<1x8x8xf32>
    %218 = vector.shape_cast %217 : vector<1x8x8xf32> to vector<8x8xf32>
    %cst_173 = arith.constant dense<0.000000e+00> : vector<8x128xf32>
    %219 = tpu.matmul %218, %216, %cst_173 {dimension_numbers = #tpu.dot_dimension_numbers<[1], [0], [0], [1], [0, 0, 1, 1], [], []>} : vector<8x8xf32>, vector<8x128xf32>, vector<8x128xf32> -> vector<8x128xf32>
    %220 = arith.addf %215, %219 : vector<8x128xf32>
    %221 = vector.extract_strided_slice %206 {offsets = [0, 384], sizes = [8, 128], strides = [1, 1]} : vector<8x512xf32> to vector<8x128xf32>
    %c3_174 = arith.constant 3 : index
    %c0_175 = arith.constant 0 : index
    %c0_176 = arith.constant 0 : index
    %222 = vector.load %arg17[%c3_174, %c0_175, %c0_176] : memref<4x8x8xf32, #tpu.memory_space<vmem>>, vector<1x8x8xf32>
    %223 = vector.shape_cast %222 : vector<1x8x8xf32> to vector<8x8xf32>
    %cst_177 = arith.constant dense<0.000000e+00> : vector<8x128xf32>
    %224 = tpu.matmul %223, %221, %cst_177 {dimension_numbers = #tpu.dot_dimension_numbers<[1], [0], [0], [1], [0, 0, 1, 1], [], []>} : vector<8x8xf32>, vector<8x128xf32>, vector<8x128xf32> -> vector<8x128xf32>
    %225 = arith.addf %220, %224 : vector<8x128xf32>
    %c3_178 = arith.constant 3 : index
    %c0_179 = arith.constant 0 : index
    %c0_180 = arith.constant 0 : index
    %226 = vector.load %arg10[%c3_178, %c0_179, %c0_180] : memref<4x1x128xf32, #tpu.memory_space<vmem>>, vector<1x1x128xf32>
    %227 = vector.shape_cast %226 : vector<1x1x128xf32> to vector<1x128xf32>
    %228 = vector.broadcast %227 : vector<1x128xf32> to vector<8x128xf32>
    %229 = arith.addf %225, %228 : vector<8x128xf32>
    %c0_181 = arith.constant 0 : index
    %c0_182 = arith.constant 0 : index
    %230 = vector.load %arg20[%c0_181, %c0_182] : memref<8x128xf32, #tpu.memory_space<vmem>>, vector<8x128xf32>
    tpu.vector_store %arg20[%c0_181, %c0_182], %229 {strides = array<i32>} : memref<8x128xf32, #tpu.memory_space<vmem>>, vector<8x128xf32>,
    return
  }
}

</mosaic_0001>

<llo_original>
// kernel: dis_forward.1
$region0: #{dis_forward.1}
  #allocation0 [shape = 'u32[]', space=smem, size = 0x4, offset = 0x4, fixed_abs, tag = 'smem constant byte address 0x4 - core index']
  #allocation1 [shape = 'u32[144,128]{1,0:T(1,128)}', space=vmem, size = 0x12000, scoped, tag = 'internal scratch']
  %s0 = inlined_call_operand.vmem [shape: f32[64,128], index: 0, kind: input, shape index: {}]
  %s1 = inlined_call_operand.vmem [shape: f32[4,1,256], index: 1, kind: input, shape index: {}]
  %s2 = inlined_call_operand.vmem [shape: f32[4,32,64], index: 2, kind: input, shape index: {}]
  %s3 = inlined_call_operand.vmem [shape: bf16[128,512], index: 3, kind: input, shape index: {}]
  %s4 = inlined_call_operand.vmem [shape: f32[4,16,32], index: 4, kind: input, shape index: {}]
  %s5 = inlined_call_operand.vmem [shape: bf16[128,512], index: 5, kind: input, shape index: {}]
  %s6 = inlined_call_operand.vmem [shape: f32[4,16,16], index: 6, kind: input, shape index: {}]
  %s7 = inlined_call_operand.vmem [shape: bf16[128,1024], index: 7, kind: input, shape index: {}]
  %s8 = inlined_call_operand.vmem [shape: f32[4,16,16], index: 8, kind: input, shape index: {}]
  %s9 = inlined_call_operand.vmem [shape: bf16[256,512], index: 9, kind: input, shape index: {}]
  %s10 = inlined_call_operand.vmem [shape: f32[4,1,128], index: 10, kind: input, shape index: {}]
  %s11 = inlined_call_operand.vmem [shape: f32[4,16,64], index: 11, kind: input, shape index: {}]
  %s12 = inlined_call_operand.vmem [shape: bf16[128,512], index: 12, kind: input, shape index: {}]
  %s13 = inlined_call_operand.vmem [shape: f32[4,8,16], index: 13, kind: input, shape index: {}]
  %s14 = inlined_call_operand.vmem [shape: bf16[128,512], index: 14, kind: input, shape index: {}]
  %s15 = inlined_call_operand.vmem [shape: f32[4,8,8], index: 15, kind: input, shape index: {}]
  %s16 = inlined_call_operand.vmem [shape: bf16[128,512], index: 16, kind: input, shape index: {}]
  %s17 = inlined_call_operand.vmem [shape: f32[4,8,8], index: 17, kind: input, shape index: {}]
  %s18 = inlined_call_operand.vmem [shape: bf16[128,512], index: 18, kind: input, shape index: {}]
  %s19 = inlined_call_operand.vmem [shape: f32[16,128], index: 19, kind: output, shape index: {0}]
  %s20 = inlined_call_operand.vmem [shape: f32[8,128], index: 20, kind: output, shape index: {1}]
  %21 = xla_tuple %s19, %s20
  %s22 = sld [smem:[#allocation0]]
  $region94: #{dis_forward.1} parent=0
    _
  %s24 = ssub.s32 1, %s22
  %s25 = scalar_select 0, %s24, %s22
  // Predicated region
  $region2: #{dis_forward.1} parent=0 // pred_check
    _
  $region3: #{dis_forward.1} parent=0 // pred_check_branch
    %27 = sbr.rel (0) target = $region5
  $region4: #{dis_forward.1} parent=0 // pred_region
    _
  $region5: #{dis_forward.1} parent=0 // pred_fallthru
    _
  // Predicated region
  $region6: #{dis_forward.1} parent=0 // pred_check
    _
  $region7: #{dis_forward.1} parent=0 // pred_check_branch
    %29 = sbr.rel (0) target = $region9
  $region8: #{dis_forward.1} parent=0 // pred_region
    _
  $region9: #{dis_forward.1} parent=0 // pred_fallthru
    _
  // Predicated region
  $region10: #{dis_forward.1} parent=0 // pred_check
    _
  $region11: #{dis_forward.1} parent=0 // pred_check_branch
    %31 = sbr.rel (0) target = $region13
  $region12: #{dis_forward.1} parent=0 // pred_region
    _
  $region13: #{dis_forward.1} parent=0 // pred_fallthru
    _
  // Predicated region
  $region14: #{dis_forward.1} parent=0 // pred_check
    _
  $region15: #{dis_forward.1} parent=0 // pred_check_branch
    %33 = sbr.rel (0) target = $region17
  $region16: #{dis_forward.1} parent=0 // pred_region
    _
  $region17: #{dis_forward.1} parent=0 // pred_fallthru
    _
  // Predicated region
  $region18: #{dis_forward.1} parent=0 // pred_check
    _
  $region19: #{dis_forward.1} parent=0 // pred_check_branch
    %35 = sbr.rel (0) target = $region21
  $region20: #{dis_forward.1} parent=0 // pred_region
    _
  $region21: #{dis_forward.1} parent=0 // pred_fallthru
    _
  // Predicated region
  $region22: #{dis_forward.1} parent=0 // pred_check
    _
  $region23: #{dis_forward.1} parent=0 // pred_check_branch
    %37 = sbr.rel (0) target = $region25
  $region24: #{dis_forward.1} parent=0 // pred_region
    _
  $region25: #{dis_forward.1} parent=0 // pred_fallthru
    _
  // Predicated region
  $region26: #{dis_forward.1} parent=0 // pred_check
    _
  $region27: #{dis_forward.1} parent=0 // pred_check_branch
    %39 = sbr.rel (0) target = $region29
  $region28: #{dis_forward.1} parent=0 // pred_region
    _
  $region29: #{dis_forward.1} parent=0 // pred_fallthru
    _
  // Predicated region
  $region30: #{dis_forward.1} parent=0 // pred_check
    _
  $region31: #{dis_forward.1} parent=0 // pred_check_branch
    %41 = sbr.rel (0) target = $region33
  $region32: #{dis_forward.1} parent=0 // pred_region
    _
  $region33: #{dis_forward.1} parent=0 // pred_fallthru
    _
  // Predicated region
  $region34: #{dis_forward.1} parent=0 // pred_check
    _
  $region35: #{dis_forward.1} parent=0 // pred_check_branch
    %43 = sbr.rel (0) target = $region37
  $region36: #{dis_forward.1} parent=0 // pred_region
    _
  $region37: #{dis_forward.1} parent=0 // pred_fallthru
    _
  // Predicated region
  $region38: #{dis_forward.1} parent=0 // pred_check
    _
  $region39: #{dis_forward.1} parent=0 // pred_check_branch
    %45 = sbr.rel (0) target = $region41
  $region40: #{dis_forward.1} parent=0 // pred_region
    _
  $region41: #{dis_forward.1} parent=0 // pred_fallthru
    _
  // Predicated region
  $region42: #{dis_forward.1} parent=0 // pred_check
    _
  $region43: #{dis_forward.1} parent=0 // pred_check_branch
    %47 = sbr.rel (0) target = $region45
  $region44: #{dis_forward.1} parent=0 // pred_region
    _
  $region45: #{dis_forward.1} parent=0 // pred_fallthru
    _
  // Predicated region
  $region46: #{dis_forward.1} parent=0 // pred_check
    _
  $region47: #{dis_forward.1} parent=0 // pred_check_branch
    %49 = sbr.rel (0) target = $region49
  $region48: #{dis_forward.1} parent=0 // pred_region
    _
  $region49: #{dis_forward.1} parent=0 // pred_fallthru
    _
  // Predicated region
  $region50: #{dis_forward.1} parent=0 // pred_check
    _
  $region51: #{dis_forward.1} parent=0 // pred_check_branch
    %51 = sbr.rel (0) target = $region53
  $region52: #{dis_forward.1} parent=0 // pred_region
    _
  $region53: #{dis_forward.1} parent=0 // pred_fallthru
    _
  // Predicated region
  $region54: #{dis_forward.1} parent=0 // pred_check
    _
  $region55: #{dis_forward.1} parent=0 // pred_check_branch
    %53 = sbr.rel (0) target = $region57
  $region56: #{dis_forward.1} parent=0 // pred_region
    _
  $region57: #{dis_forward.1} parent=0 // pred_fallthru
    _
  // Predicated region
  $region58: #{dis_forward.1} parent=0 // pred_check
    _
  $region59: #{dis_forward.1} parent=0 // pred_check_branch
    %55 = sbr.rel (0) target = $region61
  $region60: #{dis_forward.1} parent=0 // pred_region
    _
  $region61: #{dis_forward.1} parent=0 // pred_fallthru
    _
  // Predicated region
  $region62: #{dis_forward.1} parent=0 // pred_check
    _
  $region63: #{dis_forward.1} parent=0 // pred_check_branch
    %57 = sbr.rel (0) target = $region65
  $region64: #{dis_forward.1} parent=0 // pred_region
    _
  $region65: #{dis_forward.1} parent=0 // pred_fallthru
    _
  // Predicated region
  $region66: #{dis_forward.1} parent=0 // pred_check
    _
  $region67: #{dis_forward.1} parent=0 // pred_check_branch
    %59 = sbr.rel (0) target = $region69
  $region68: #{dis_forward.1} parent=0 // pred_region
    _
  $region69: #{dis_forward.1} parent=0 // pred_fallthru
    _
  // Predicated region
  $region70: #{dis_forward.1} parent=0 // pred_check
    _
  $region71: #{dis_forward.1} parent=0 // pred_check_branch
    %61 = sbr.rel (0) target = $region73
  $region72: #{dis_forward.1} parent=0 // pred_region
    _
  $region73: #{dis_forward.1} parent=0 // pred_fallthru
    _
  // Predicated region
  $region74: #{dis_forward.1} parent=0 // pred_check
    _
  $region75: #{dis_forward.1} parent=0 // pred_check_branch
    %63 = sbr.rel (0) target = $region77
  $region76: #{dis_forward.1} parent=0 // pred_region
    _
  $region77: #{dis_forward.1} parent=0 // pred_fallthru
    _
  %v65 = vld [vmem:[%s0] sm:$0xff]
  %v66 = vld [vmem:[%s0 + $0x8] sm:$0xff]
  %v67 = vld [vmem:[%s0 + $0x10] sm:$0xff]
  %v68 = vld [vmem:[%s0 + $0x18] sm:$0xff]
  %v69 = vld [vmem:[%s0 + $0x20] sm:$0xff]
  %v70 = vld [vmem:[%s0 + $0x28] sm:$0xff]
  %v71 = vld [vmem:[%s0 + $0x30] sm:$0xff]
  %v72 = vld [vmem:[%s0 + $0x38] sm:$0xff]
  %v73 = vpack.c.bf16 %v66, %v65
  %v74 = vpack.c.bf16 %v68, %v67
  %v75 = vpack.c.bf16 %v70, %v69
  %v76 = vpack.c.bf16 %v72, %v71
  %v77 = vld [vmem:[%s3] sm:$0xff]
  %v78 = vld [vmem:[%s3 + $0x8] sm:$0xff]
  %v79 = vld [vmem:[%s3 + $0x10] sm:$0xff]
  %v80 = vld [vmem:[%s3 + $0x18] sm:$0xff]
  %v81 = vld [vmem:[%s3 + $0x20] sm:$0xff]
  %v82 = vld [vmem:[%s3 + $0x28] sm:$0xff]
  %v83 = vld [vmem:[%s3 + $0x30] sm:$0xff]
  %v84 = vld [vmem:[%s3 + $0x38] sm:$0xff]
  %v85 = vld [vmem:[%s3 + $0x40] sm:$0xff]
  %v86 = vld [vmem:[%s3 + $0x48] sm:$0xff]
  %v87 = vld [vmem:[%s3 + $0x50] sm:$0xff]
  %v88 = vld [vmem:[%s3 + $0x58] sm:$0xff]
  %v89 = vld [vmem:[%s3 + $0x60] sm:$0xff]
  %v90 = vld [vmem:[%s3 + $0x68] sm:$0xff]
  %v91 = vld [vmem:[%s3 + $0x70] sm:$0xff]
  %v92 = vld [vmem:[%s3 + $0x78] sm:$0xff]
  %v93 = vld [vmem:[%s3 + $0x80] sm:$0xff]
  %v94 = vld [vmem:[%s3 + $0x88] sm:$0xff]
  %v95 = vld [vmem:[%s3 + $0x90] sm:$0xff]
  %v96 = vld [vmem:[%s3 + $0x98] sm:$0xff]
  %v97 = vld [vmem:[%s3 + $0xa0] sm:$0xff]
  %v98 = vld [vmem:[%s3 + $0xa8] sm:$0xff]
  %v99 = vld [vmem:[%s3 + $0xb0] sm:$0xff]
  %v100 = vld [vmem:[%s3 + $0xb8] sm:$0xff]
  %v101 = vld [vmem:[%s3 + $0xc0] sm:$0xff]
  %v102 = vld [vmem:[%s3 + $0xc8] sm:$0xff]
  %v103 = vld [vmem:[%s3 + $0xd0] sm:$0xff]
  %v104 = vld [vmem:[%s3 + $0xd8] sm:$0xff]
  %v105 = vld [vmem:[%s3 + $0xe0] sm:$0xff]
  %v106 = vld [vmem:[%s3 + $0xe8] sm:$0xff]
  %v107 = vld [vmem:[%s3 + $0xf0] sm:$0xff]
  %v108 = vld [vmem:[%s3 + $0xf8] sm:$0xff]
  %v141 = vunpack.c.l.b16 %v77
  %v142 = vunpack.c.h.b16 %v77
  %v143 = vunpack.c.l.b16 %v78
  %v144 = vunpack.c.h.b16 %v78
  %v145 = vunpack.c.l.b16 %v79
  %v146 = vunpack.c.h.b16 %v79
  %v147 = vunpack.c.l.b16 %v80
  %v148 = vunpack.c.h.b16 %v80
  %v149 = vunpack.c.l.b16 %v81
  %v150 = vunpack.c.h.b16 %v81
  %v151 = vunpack.c.l.b16 %v82
  %v152 = vunpack.c.h.b16 %v82
  %v153 = vunpack.c.l.b16 %v83
  %v154 = vunpack.c.h.b16 %v83
  %v155 = vunpack.c.l.b16 %v84
  %v156 = vunpack.c.h.b16 %v84
  %v157 = vunpack.c.l.b16 %v85
  %v158 = vunpack.c.h.b16 %v85
  %v159 = vunpack.c.l.b16 %v86
  %v160 = vunpack.c.h.b16 %v86
  %v161 = vunpack.c.l.b16 %v87
  %v162 = vunpack.c.h.b16 %v87
  %v163 = vunpack.c.l.b16 %v88
  %v164 = vunpack.c.h.b16 %v88
  %v165 = vunpack.c.l.b16 %v89
  %v166 = vunpack.c.h.b16 %v89
  %v167 = vunpack.c.l.b16 %v90
  %v168 = vunpack.c.h.b16 %v90
  %v169 = vunpack.c.l.b16 %v91
  %v170 = vunpack.c.h.b16 %v91
  %v171 = vunpack.c.l.b16 %v92
  %v172 = vunpack.c.h.b16 %v92
  %v173 = vunpack.c.l.b16 %v93
  %v174 = vunpack.c.h.b16 %v93
  %v175 = vunpack.c.l.b16 %v94
  %v176 = vunpack.c.h.b16 %v94
  %v177 = vunpack.c.l.b16 %v95
  %v178 = vunpack.c.h.b16 %v95
  %v179 = vunpack.c.l.b16 %v96
  %v180 = vunpack.c.h.b16 %v96
  %v181 = vunpack.c.l.b16 %v97
  %v182 = vunpack.c.h.b16 %v97
  %v183 = vunpack.c.l.b16 %v98
  %v184 = vunpack.c.h.b16 %v98
  %v185 = vunpack.c.l.b16 %v99
  %v186 = vunpack.c.h.b16 %v99
  %v187 = vunpack.c.l.b16 %v100
  %v188 = vunpack.c.h.b16 %v100
  %v189 = vunpack.c.l.b16 %v101
  %v190 = vunpack.c.h.b16 %v101
  %v191 = vunpack.c.l.b16 %v102
  %v192 = vunpack.c.h.b16 %v102
  %v193 = vunpack.c.l.b16 %v103
  %v194 = vunpack.c.h.b16 %v103
  %v195 = vunpack.c.l.b16 %v104
  %v196 = vunpack.c.h.b16 %v104
  %v197 = vunpack.c.l.b16 %v105
  %v198 = vunpack.c.h.b16 %v105
  %v199 = vunpack.c.l.b16 %v106
  %v200 = vunpack.c.h.b16 %v106
  %v201 = vunpack.c.l.b16 %v107
  %v202 = vunpack.c.h.b16 %v107
  %v203 = vunpack.c.l.b16 %v108
  %v204 = vunpack.c.h.b16 %v108
  %v205 = vpack.c.b16 %v145, %v141
  %v206 = vpack.c.b16 %v146, %v142
  %v207 = vpack.c.b16 %v147, %v143
  %v208 = vpack.c.b16 %v148, %v144
  %v209 = vpack.c.b16 %v153, %v149
  %v210 = vpack.c.b16 %v154, %v150
  %v211 = vpack.c.b16 %v155, %v151
  %v212 = vpack.c.b16 %v156, %v152
  %v213 = vpack.c.b16 %v161, %v157
  %v214 = vpack.c.b16 %v162, %v158
  %v215 = vpack.c.b16 %v163, %v159
  %v216 = vpack.c.b16 %v164, %v160
  %v217 = vpack.c.b16 %v169, %v165
  %v218 = vpack.c.b16 %v170, %v166
  %v219 = vpack.c.b16 %v171, %v167
  %v220 = vpack.c.b16 %v172, %v168
  %v221 = vpack.c.b16 %v177, %v173
  %v222 = vpack.c.b16 %v178, %v174
  %v223 = vpack.c.b16 %v179, %v175
  %v224 = vpack.c.b16 %v180, %v176
  %v225 = vpack.c.b16 %v185, %v181
  %v226 = vpack.c.b16 %v186, %v182
  %v227 = vpack.c.b16 %v187, %v183
  %v228 = vpack.c.b16 %v188, %v184
  %v229 = vpack.c.b16 %v193, %v189
  %v230 = vpack.c.b16 %v194, %v190
  %v231 = vpack.c.b16 %v195, %v191
  %v232 = vpack.c.b16 %v196, %v192
  %v233 = vpack.c.b16 %v201, %v197
  %v234 = vpack.c.b16 %v202, %v198
  %v235 = vpack.c.b16 %v203, %v199
  %v236 = vpack.c.b16 %v204, %v200
  %269 = vmatprep.subr.bf16.mxu0 %v206
  %270 = vmatpush1.bf16.msra.mxu0 %v205
  %271 = vmatprep.subr.bf16.mxu0 %v210
  %272 = vmatpush1.bf16.msra.mxu0 %v209
  %273 = vmatprep.subr.bf16.mxu0 %v214
  %274 = vmatpush1.bf16.msra.mxu0 %v213
  %275 = vmatprep.subr.bf16.mxu0 %v218
  %276 = vmatpush1.bf16.msra.mxu0 %v217
  %277 = vmatprep.subr.bf16.mxu0 %v222
  %278 = vmatpush1.bf16.msra.mxu0 %v221
  %279 = vmatprep.subr.bf16.mxu0 %v226
  %280 = vmatpush1.bf16.msra.mxu0 %v225
  %281 = vmatprep.subr.bf16.mxu0 %v230
  %282 = vmatpush1.bf16.msra.mxu0 %v229
  %283 = vmatprep.subr.bf16.mxu0 %v234
  %284 = vmatpush1.bf16.msra.mxu0 %v233
  %285 = vmatprep.subr.bf16.mxu0 0
  %286 = vmatpush1.bf16.msra.mxu0 0
  %287 = vmatprep.subr.bf16.mxu0 0
  %288 = vmatpush1.bf16.msra.mxu0 0
  %289 = vmatprep.subr.bf16.mxu0 0
  %290 = vmatpush1.bf16.msra.mxu0 0
  %291 = vmatprep.subr.bf16.mxu0 0
  %292 = vmatpush1.bf16.msra.mxu0 0
  %293 = vmatprep.subr.bf16.mxu0 0
  %294 = vmatpush1.bf16.msra.mxu0 0
  %295 = vmatprep.subr.bf16.mxu0 0
  %296 = vmatpush1.bf16.msra.mxu0 0
  %297 = vmatprep.subr.bf16.mxu0 0
  %298 = vmatpush1.bf16.msra.mxu0 0
  %299 = vmatprep.subr.bf16.mxu0 0
  %300 = vmatpush1.bf16.msra.mxu0 0
  %301 = vmatprep.mubr.bf16.mxu0 0
  %302 = vmatmul.mubr.bf16.gmra.mrb[0].mxu0 %v73
  %v303 = vpop.f32.mrb[0].mxu0
  %v304 = vadd.f32 0.0, %v303
  %v305 = vpop.f32.mrb[0].mxu0
  %v306 = vadd.f32 0.0, %v305
  %v307 = vpop.f32.mrb[0].mxu0
  %v308 = vadd.f32 0.0, %v307
  %v309 = vpop.f32.mrb[0].mxu0
  %v310 = vadd.f32 0.0, %v309
  %311 = vmatprep.mubr.bf16.mxu0 0
  %312 = vmatmul.mubr.bf16.gmra.mrb[0].mxu0 %v74
  %v313 = vpop.f32.mrb[0].mxu0
  %v314 = vadd.f32 0.0, %v313
  %v315 = vpop.f32.mrb[0].mxu0
  %v316 = vadd.f32 0.0, %v315
  %v317 = vpop.f32.mrb[0].mxu0
  %v318 = vadd.f32 0.0, %v317
  %v319 = vpop.f32.mrb[0].mxu0
  %v320 = vadd.f32 0.0, %v319
  %321 = vmatprep.mubr.bf16.mxu0 0
  %322 = vmatmul.mubr.bf16.gmra.mrb[0].mxu0 %v75
  %v323 = vpop.f32.mrb[0].mxu0
  %v324 = vadd.f32 0.0, %v323
  %v325 = vpop.f32.mrb[0].mxu0
  %v326 = vadd.f32 0.0, %v325
  %v327 = vpop.f32.mrb[0].mxu0
  %v328 = vadd.f32 0.0, %v327
  %v329 = vpop.f32.mrb[0].mxu0
  %v330 = vadd.f32 0.0, %v329
  %331 = vmatprep.mubr.bf16.mxu0 0
  %332 = vmatmul.mubr.bf16.gmra.mrb[0].mxu0 %v76
  %v333 = vpop.f32.mrb[0].mxu0
  %v334 = vadd.f32 0.0, %v333
  %v335 = vpop.f32.mrb[0].mxu0
  %v336 = vadd.f32 0.0, %v335
  %v337 = vpop.f32.mrb[0].mxu0
  %v338 = vadd.f32 0.0, %v337
  %v339 = vpop.f32.mrb[0].mxu0
  %v340 = vadd.f32 0.0, %v339
  %341 = vdwg.mxu0
  %342 = vmatprep.subr.bf16.mxu0 %v208
  %343 = vmatpush1.bf16.msra.mxu0 %v207
  %344 = vmatprep.subr.bf16.mxu0 %v212
  %345 = vmatpush1.bf16.msra.mxu0 %v211
  %346 = vmatprep.subr.bf16.mxu0 %v216
  %347 = vmatpush1.bf16.msra.mxu0 %v215
  %348 = vmatprep.subr.bf16.mxu0 %v220
  %349 = vmatpush1.bf16.msra.mxu0 %v219
  %350 = vmatprep.subr.bf16.mxu0 %v224
  %351 = vmatpush1.bf16.msra.mxu0 %v223
  %352 = vmatprep.subr.bf16.mxu0 %v228
  %353 = vmatpush1.bf16.msra.mxu0 %v227
  %354 = vmatprep.subr.bf16.mxu0 %v232
  %355 = vmatpush1.bf16.msra.mxu0 %v231
  %356 = vmatprep.subr.bf16.mxu0 %v236
  %357 = vmatpush1.bf16.msra.mxu0 %v235
  %358 = vmatprep.subr.bf16.mxu0 0
  %359 = vmatpush1.bf16.msra.mxu0 0
  %360 = vmatprep.subr.bf16.mxu0 0
  %361 = vmatpush1.bf16.msra.mxu0 0
  %362 = vmatprep.subr.bf16.mxu0 0
  %363 = vmatpush1.bf16.msra.mxu0 0
  %364 = vmatprep.subr.bf16.mxu0 0
  %365 = vmatpush1.bf16.msra.mxu0 0
  %366 = vmatprep.subr.bf16.mxu0 0
  %367 = vmatpush1.bf16.msra.mxu0 0
  %368 = vmatprep.subr.bf16.mxu0 0
  %369 = vmatpush1.bf16.msra.mxu0 0
  %370 = vmatprep.subr.bf16.mxu0 0
  %371 = vmatpush1.bf16.msra.mxu0 0
  %372 = vmatprep.subr.bf16.mxu0 0
  %373 = vmatpush1.bf16.msra.mxu0 0
  %374 = vmatprep.mubr.bf16.mxu0 0
  %375 = vmatmul.mubr.bf16.gmra.mrb[0].mxu0 %v73
  %v376 = vpop.f32.mrb[0].mxu0
  %v377 = vadd.f32 0.0, %v376
  %v378 = vpop.f32.mrb[0].mxu0
  %v379 = vadd.f32 0.0, %v378
  %v380 = vpop.f32.mrb[0].mxu0
  %v381 = vadd.f32 0.0, %v380
  %v382 = vpop.f32.mrb[0].mxu0
  %v383 = vadd.f32 0.0, %v382
  %384 = vmatprep.mubr.bf16.mxu0 0
  %385 = vmatmul.mubr.bf16.gmra.mrb[0].mxu0 %v74
  %v386 = vpop.f32.mrb[0].mxu0
  %v387 = vadd.f32 0.0, %v386
  %v388 = vpop.f32.mrb[0].mxu0
  %v389 = vadd.f32 0.0, %v388
  %v390 = vpop.f32.mrb[0].mxu0
  %v391 = vadd.f32 0.0, %v390
  %v392 = vpop.f32.mrb[0].mxu0
  %v393 = vadd.f32 0.0, %v392
  %394 = vmatprep.mubr.bf16.mxu0 0
  %395 = vmatmul.mubr.bf16.gmra.mrb[0].mxu0 %v75
  %v396 = vpop.f32.mrb[0].mxu0
  %v397 = vadd.f32 0.0, %v396
  %v398 = vpop.f32.mrb[0].mxu0
  %v399 = vadd.f32 0.0, %v398
  %v400 = vpop.f32.mrb[0].mxu0
  %v401 = vadd.f32 0.0, %v400
  %v402 = vpop.f32.mrb[0].mxu0
  %v403 = vadd.f32 0.0, %v402
  %404 = vmatprep.mubr.bf16.mxu0 0
  %405 = vmatmul.mubr.bf16.gmra.mrb[0].mxu0 %v76
  %v406 = vpop.f32.mrb[0].mxu0
  %v407 = vadd.f32 0.0, %v406
  %v408 = vpop.f32.mrb[0].mxu0
  %v409 = vadd.f32 0.0, %v408
  %v410 = vpop.f32.mrb[0].mxu0
  %v411 = vadd.f32 0.0, %v410
  %v412 = vpop.f32.mrb[0].mxu0
  %v413 = vadd.f32 0.0, %v412
  %414 = vdwg.mxu0
  %v415 = vld [vmem:[%s2] sm:$0xff]
  %v416 = vld [vmem:[%s2 + $0x8] sm:$0xff]
  %v417 = vld [vmem:[%s2 + $0x10] sm:$0xff]
  %v418 = vld [vmem:[%s2 + $0x18] sm:$0xff]
  %s419 = scalar_lea.vmem %s2, 32
  %v420 = vld [vmem:[%s419] sm:$0xff]
  %v421 = vld [vmem:[%s419 + $0x8] sm:$0xff]
  %v422 = vld [vmem:[%s419 + $0x10] sm:$0xff]
  %v423 = vld [vmem:[%s419 + $0x18] sm:$0xff]
  %vm424 = vcmask 523264
  %v426 = vsel %vm424, %v420, 0
  %v429 = vsel %vm424, %v421, 0
  %v432 = vsel %vm424, %v422, 0
  %v435 = vsel %vm424, %v423, 0
  %437 = vmatprep.subr.mxu0 0.0
  %438 = vmatpush1.msra.mxu0 %v306
  %439 = vmatprep.subr.mxu0 0.0
  %440 = vmatpush1.msra.mxu0 %v310
  %441 = vmatprep.subr.mxu0 0.0
  %442 = vmatpush1.msra.mxu0 %v316
  %443 = vmatprep.subr.mxu0 0.0
  %444 = vmatpush1.msra.mxu0 %v320
  %445 = vmatprep.subr.mxu0 0.0
  %446 = vmatpush1.msra.mxu0 %v326
  %447 = vmatprep.subr.mxu0 0.0
  %448 = vmatpush1.msra.mxu0 %v330
  %449 = vmatprep.subr.mxu0 0.0
  %450 = vmatpush1.msra.mxu0 %v336
  %451 = vmatprep.subr.mxu0 0.0
  %452 = vmatpush1.msra.mxu0 %v340
  %453 = vmatprep.subr.mxu0 0.0
  %454 = vmatpush1.msra.mxu0 0.0
  %455 = vmatprep.subr.mxu0 0.0
  %456 = vmatpush1.msra.mxu0 0.0
  %457 = vmatprep.subr.mxu0 0.0
  %458 = vmatpush1.msra.mxu0 0.0
  %459 = vmatprep.subr.mxu0 0.0
  %460 = vmatpush1.msra.mxu0 0.0
  %461 = vmatprep.subr.mxu0 0.0
  %462 = vmatpush1.msra.mxu0 0.0
  %463 = vmatprep.subr.mxu0 0.0
  %464 = vmatpush1.msra.mxu0 0.0
  %465 = vmatprep.subr.mxu0 0.0
  %466 = vmatpush1.msra.mxu0 0.0
  %467 = vmatprep.subr.mxu0 0.0
  %468 = vmatpush1.msra.mxu0 0.0
  %469 = vmatprep.subr.mxu0 0.0
  %470 = vmatpush1.msra.mxu0 0.0
  %471 = vmatprep.subr.mxu0 0.0
  %472 = vmatpush1.msra.mxu0 0.0
  %473 = vmatprep.subr.mxu0 0.0
  %474 = vmatpush1.msra.mxu0 0.0
  %475 = vmatprep.subr.mxu0 0.0
  %476 = vmatpush1.msra.mxu0 0.0
  %477 = vmatprep.subr.mxu0 0.0
  %478 = vmatpush1.msra.mxu0 0.0
  %479 = vmatprep.subr.mxu0 0.0
  %480 = vmatpush1.msra.mxu0 0.0
  %481 = vmatprep.subr.mxu0 0.0
  %482 = vmatpush1.msra.mxu0 0.0
  %483 = vmatprep.subr.mxu0 0.0
  %484 = vmatpush1.msra.mxu0 0.0
  %485 = vmatprep.subr.mxu0 0.0
  %486 = vmatpush1.msra.mxu0 0.0
  %487 = vmatprep.subr.mxu0 0.0
  %488 = vmatpush1.msra.mxu0 0.0
  %489 = vmatprep.subr.mxu0 0.0
  %490 = vmatpush1.msra.mxu0 0.0
  %491 = vmatprep.subr.mxu0 0.0
  %492 = vmatpush1.msra.mxu0 0.0
  %493 = vmatprep.subr.mxu0 0.0
  %494 = vmatpush1.msra.mxu0 0.0
  %495 = vmatprep.subr.mxu0 0.0
  %496 = vmatpush1.msra.mxu0 0.0
  %497 = vmatprep.subr.mxu0 0.0
  %498 = vmatpush1.msra.mxu0 0.0
  %499 = vmatprep.subr.mxu0 0.0
  %500 = vmatpush1.msra.mxu0 0.0
  %501 = vmatprep.mubr.f32.mxu0 0.0
  %502 = vmatmul.mubr.f32.gmra.mrb[0].mxu0 %v426
  %v503 = vpop.f32.mrb[0].mxu0
  %v504 = vadd.f32 0.0, %v503
  %v505 = vpop.f32.mrb[0].mxu0
  %506 = vmatprep.mubr.f32.mxu0 0.0
  %507 = vmatmul.mubr.f32.gmra.mrb[0].mxu0 %v429
  %v508 = vpop.f32.mrb[0].mxu0
  %v509 = vadd.f32 0.0, %v508
  %v510 = vpop.f32.mrb[0].mxu0
  %511 = vmatprep.mubr.f32.mxu0 0.0
  %512 = vmatmul.mubr.f32.gmra.mrb[0].mxu0 %v432
  %v513 = vpop.f32.mrb[0].mxu0
  %v514 = vadd.f32 0.0, %v513
  %v515 = vpop.f32.mrb[0].mxu0
  %516 = vmatprep.mubr.f32.mxu0 0.0
  %517 = vmatmul.mubr.f32.gmra.mrb[0].mxu0 %v435
  %v518 = vpop.f32.mrb[0].mxu0
  %v519 = vadd.f32 0.0, %v518
  %v520 = vpop.f32.mrb[0].mxu0
  %521 = vdwg.mxu0
  %v523 = vsel %vm424, %v415, 0
  %v526 = vsel %vm424, %v416, 0
  %v529 = vsel %vm424, %v417, 0
  %v532 = vsel %vm424, %v418, 0
  %534 = vmatprep.subr.mxu0 0.0
  %535 = vmatpush1.msra.mxu0 %v304
  %536 = vmatprep.subr.mxu0 0.0
  %537 = vmatpush1.msra.mxu0 %v308
  %538 = vmatprep.subr.mxu0 0.0
  %539 = vmatpush1.msra.mxu0 %v314
  %540 = vmatprep.subr.mxu0 0.0
  %541 = vmatpush1.msra.mxu0 %v318
  %542 = vmatprep.subr.mxu0 0.0
  %543 = vmatpush1.msra.mxu0 %v324
  %544 = vmatprep.subr.mxu0 0.0
  %545 = vmatpush1.msra.mxu0 %v328
  %546 = vmatprep.subr.mxu0 0.0
  %547 = vmatpush1.msra.mxu0 %v334
  %548 = vmatprep.subr.mxu0 0.0
  %549 = vmatpush1.msra.mxu0 %v338
  %550 = vmatprep.subr.mxu0 0.0
  %551 = vmatpush1.msra.mxu0 0.0
  %552 = vmatprep.subr.mxu0 0.0
  %553 = vmatpush1.msra.mxu0 0.0
  %554 = vmatprep.subr.mxu0 0.0
  %555 = vmatpush1.msra.mxu0 0.0
  %556 = vmatprep.subr.mxu0 0.0
  %557 = vmatpush1.msra.mxu0 0.0
  %558 = vmatprep.subr.mxu0 0.0
  %559 = vmatpush1.msra.mxu0 0.0
  %560 = vmatprep.subr.mxu0 0.0
  %561 = vmatpush1.msra.mxu0 0.0
  %562 = vmatprep.subr.mxu0 0.0
  %563 = vmatpush1.msra.mxu0 0.0
  %564 = vmatprep.subr.mxu0 0.0
  %565 = vmatpush1.msra.mxu0 0.0
  %566 = vmatprep.subr.mxu0 0.0
  %567 = vmatpush1.msra.mxu0 0.0
  %568 = vmatprep.subr.mxu0 0.0
  %569 = vmatpush1.msra.mxu0 0.0
  %570 = vmatprep.subr.mxu0 0.0
  %571 = vmatpush1.msra.mxu0 0.0
  %572 = vmatprep.subr.mxu0 0.0
  %573 = vmatpush1.msra.mxu0 0.0
  %574 = vmatprep.subr.mxu0 0.0
  %575 = vmatpush1.msra.mxu0 0.0
  %576 = vmatprep.subr.mxu0 0.0
  %577 = vmatpush1.msra.mxu0 0.0
  %578 = vmatprep.subr.mxu0 0.0
  %579 = vmatpush1.msra.mxu0 0.0
  %580 = vmatprep.subr.mxu0 0.0
  %581 = vmatpush1.msra.mxu0 0.0
  %582 = vmatprep.subr.mxu0 0.0
  %583 = vmatpush1.msra.mxu0 0.0
  %584 = vmatprep.subr.mxu0 0.0
  %585 = vmatpush1.msra.mxu0 0.0
  %586 = vmatprep.subr.mxu0 0.0
  %587 = vmatpush1.msra.mxu0 0.0
  %588 = vmatprep.subr.mxu0 0.0
  %589 = vmatpush1.msra.mxu0 0.0
  %590 = vmatprep.subr.mxu0 0.0
  %591 = vmatpush1.msra.mxu0 0.0
  %592 = vmatprep.subr.mxu0 0.0
  %593 = vmatpush1.msra.mxu0 0.0
  %594 = vmatprep.subr.mxu0 0.0
  %595 = vmatpush1.msra.mxu0 0.0
  %596 = vmatprep.subr.mxu0 0.0
  %597 = vmatpush1.msra.mxu0 0.0
  %598 = vmatprep.mubr.f32.mxu0 0.0
  %599 = vmatmul.mubr.f32.gmra.mrb[0].mxu0 %v523
  %v600 = vpop.f32.mrb[0].mxu0
  %v601 = vadd.f32 %v504, %v600
  %v602 = vpop.f32.mrb[0].mxu0
  %603 = vmatprep.mubr.f32.mxu0 0.0
  %604 = vmatmul.mubr.f32.gmra.mrb[0].mxu0 %v526
  %v605 = vpop.f32.mrb[0].mxu0
  %v606 = vadd.f32 %v509, %v605
  %v607 = vpop.f32.mrb[0].mxu0
  %608 = vmatprep.mubr.f32.mxu0 0.0
  %609 = vmatmul.mubr.f32.gmra.mrb[0].mxu0 %v529
  %v610 = vpop.f32.mrb[0].mxu0
  %v611 = vadd.f32 %v514, %v610
  %v612 = vpop.f32.mrb[0].mxu0
  %613 = vmatprep.mubr.f32.mxu0 0.0
  %614 = vmatmul.mubr.f32.gmra.mrb[0].mxu0 %v532
  %v615 = vpop.f32.mrb[0].mxu0
  %v616 = vadd.f32 %v519, %v615
  %v617 = vpop.f32.mrb[0].mxu0
  %618 = vdwg.mxu0
  %s619 = scalar_lea.vmem %s2, 64
  %v620 = vld [vmem:[%s619] sm:$0xff]
  %v621 = vld [vmem:[%s619 + $0x8] sm:$0xff]
  %v622 = vld [vmem:[%s619 + $0x10] sm:$0xff]
  %v623 = vld [vmem:[%s619 + $0x18] sm:$0xff]
  %v625 = vsel %vm424, %v620, 0
  %v628 = vsel %vm424, %v621, 0
  %v631 = vsel %vm424, %v622, 0
  %v634 = vsel %vm424, %v623, 0
  %636 = vmatprep.subr.mxu0 0.0
  %637 = vmatpush1.msra.mxu0 %v377
  %638 = vmatprep.subr.mxu0 0.0
  %639 = vmatpush1.msra.mxu0 %v381
  %640 = vmatprep.subr.mxu0 0.0
  %641 = vmatpush1.msra.mxu0 %v387
  %642 = vmatprep.subr.mxu0 0.0
  %643 = vmatpush1.msra.mxu0 %v391
  %644 = vmatprep.subr.mxu0 0.0
  %645 = vmatpush1.msra.mxu0 %v397
  %646 = vmatprep.subr.mxu0 0.0
  %647 = vmatpush1.msra.mxu0 %v401
  %648 = vmatprep.subr.mxu0 0.0
  %649 = vmatpush1.msra.mxu0 %v407
  %650 = vmatprep.subr.mxu0 0.0
  %651 = vmatpush1.msra.mxu0 %v411
  %652 = vmatprep.subr.mxu0 0.0
  %653 = vmatpush1.msra.mxu0 0.0
  %654 = vmatprep.subr.mxu0 0.0
  %655 = vmatpush1.msra.mxu0 0.0
  %656 = vmatprep.subr.mxu0 0.0
  %657 = vmatpush1.msra.mxu0 0.0
  %658 = vmatprep.subr.mxu0 0.0
  %659 = vmatpush1.msra.mxu0 0.0
  %660 = vmatprep.subr.mxu0 0.0
  %661 = vmatpush1.msra.mxu0 0.0
  %662 = vmatprep.subr.mxu0 0.0
  %663 = vmatpush1.msra.mxu0 0.0
  %664 = vmatprep.subr.mxu0 0.0
  %665 = vmatpush1.msra.mxu0 0.0
  %666 = vmatprep.subr.mxu0 0.0
  %667 = vmatpush1.msra.mxu0 0.0
  %668 = vmatprep.subr.mxu0 0.0
  %669 = vmatpush1.msra.mxu0 0.0
  %670 = vmatprep.subr.mxu0 0.0
  %671 = vmatpush1.msra.mxu0 0.0
  %672 = vmatprep.subr.mxu0 0.0
  %673 = vmatpush1.msra.mxu0 0.0
  %674 = vmatprep.subr.mxu0 0.0
  %675 = vmatpush1.msra.mxu0 0.0
  %676 = vmatprep.subr.mxu0 0.0
  %677 = vmatpush1.msra.mxu0 0.0
  %678 = vmatprep.subr.mxu0 0.0
  %679 = vmatpush1.msra.mxu0 0.0
  %680 = vmatprep.subr.mxu0 0.0
  %681 = vmatpush1.msra.mxu0 0.0
  %682 = vmatprep.subr.mxu0 0.0
  %683 = vmatpush1.msra.mxu0 0.0
  %684 = vmatprep.subr.mxu0 0.0
  %685 = vmatpush1.msra.mxu0 0.0
  %686 = vmatprep.subr.mxu0 0.0
  %687 = vmatpush1.msra.mxu0 0.0
  %688 = vmatprep.subr.mxu0 0.0
  %689 = vmatpush1.msra.mxu0 0.0
  %690 = vmatprep.subr.mxu0 0.0
  %691 = vmatpush1.msra.mxu0 0.0
  %692 = vmatprep.subr.mxu0 0.0
  %693 = vmatpush1.msra.mxu0 0.0
  %694 = vmatprep.subr.mxu0 0.0
  %695 = vmatpush1.msra.mxu0 0.0
  %696 = vmatprep.subr.mxu0 0.0
  %697 = vmatpush1.msra.mxu0 0.0
  %698 = vmatprep.subr.mxu0 0.0
  %699 = vmatpush1.msra.mxu0 0.0
  %700 = vmatprep.mubr.f32.mxu0 0.0
  %701 = vmatmul.mubr.f32.gmra.mrb[0].mxu0 %v625
  %v702 = vpop.f32.mrb[0].mxu0
  %v703 = vadd.f32 0.0, %v702
  %v704 = vpop.f32.mrb[0].mxu0
  %705 = vmatprep.mubr.f32.mxu0 0.0
  %706 = vmatmul.mubr.f32.gmra.mrb[0].mxu0 %v628
  %v707 = vpop.f32.mrb[0].mxu0
  %v708 = vadd.f32 0.0, %v707
  %v709 = vpop.f32.mrb[0].mxu0
  %710 = vmatprep.mubr.f32.mxu0 0.0
  %711 = vmatmul.mubr.f32.gmra.mrb[0].mxu0 %v631
  %v712 = vpop.f32.mrb[0].mxu0
  %v713 = vadd.f32 0.0, %v712
  %v714 = vpop.f32.mrb[0].mxu0
  %715 = vmatprep.mubr.f32.mxu0 0.0
  %716 = vmatmul.mubr.f32.gmra.mrb[0].mxu0 %v634
  %v717 = vpop.f32.mrb[0].mxu0
  %v718 = vadd.f32 0.0, %v717
  %v719 = vpop.f32.mrb[0].mxu0
  %720 = vdwg.mxu0
  %v721 = vadd.f32 %v601, %v703
  %v722 = vadd.f32 %v606, %v708
  %v723 = vadd.f32 %v611, %v713
  %v724 = vadd.f32 %v616, %v718
  %s725 = scalar_lea.vmem %s2, 96
  %v726 = vld [vmem:[%s725] sm:$0xff]
  %v727 = vld [vmem:[%s725 + $0x8] sm:$0xff]
  %v728 = vld [vmem:[%s725 + $0x10] sm:$0xff]
  %v729 = vld [vmem:[%s725 + $0x18] sm:$0xff]
  %v731 = vsel %vm424, %v726, 0
  %v734 = vsel %vm424, %v727, 0
  %v737 = vsel %vm424, %v728, 0
  %v740 = vsel %vm424, %v729, 0
  %742 = vmatprep.subr.mxu0 0.0
  %743 = vmatpush1.msra.mxu0 %v379
  %744 = vmatprep.subr.mxu0 0.0
  %745 = vmatpush1.msra.mxu0 %v383
  %746 = vmatprep.subr.mxu0 0.0
  %747 = vmatpush1.msra.mxu0 %v389
  %748 = vmatprep.subr.mxu0 0.0
  %749 = vmatpush1.msra.mxu0 %v393
  %750 = vmatprep.subr.mxu0 0.0
  %751 = vmatpush1.msra.mxu0 %v399
  %752 = vmatprep.subr.mxu0 0.0
  %753 = vmatpush1.msra.mxu0 %v403
  %754 = vmatprep.subr.mxu0 0.0
  %755 = vmatpush1.msra.mxu0 %v409
  %756 = vmatprep.subr.mxu0 0.0
  %757 = vmatpush1.msra.mxu0 %v413
  %758 = vmatprep.subr.mxu0 0.0
  %759 = vmatpush1.msra.mxu0 0.0
  %760 = vmatprep.subr.mxu0 0.0
  %761 = vmatpush1.msra.mxu0 0.0
  %762 = vmatprep.subr.mxu0 0.0
  %763 = vmatpush1.msra.mxu0 0.0
  %764 = vmatprep.subr.mxu0 0.0
  %765 = vmatpush1.msra.mxu0 0.0
  %766 = vmatprep.subr.mxu0 0.0
  %767 = vmatpush1.msra.mxu0 0.0
  %768 = vmatprep.subr.mxu0 0.0
  %769 = vmatpush1.msra.mxu0 0.0
  %770 = vmatprep.subr.mxu0 0.0
  %771 = vmatpush1.msra.mxu0 0.0
  %772 = vmatprep.subr.mxu0 0.0
  %773 = vmatpush1.msra.mxu0 0.0
  %774 = vmatprep.subr.mxu0 0.0
  %775 = vmatpush1.msra.mxu0 0.0
  %776 = vmatprep.subr.mxu0 0.0
  %777 = vmatpush1.msra.mxu0 0.0
  %778 = vmatprep.subr.mxu0 0.0
  %779 = vmatpush1.msra.mxu0 0.0
  %780 = vmatprep.subr.mxu0 0.0
  %781 = vmatpush1.msra.mxu0 0.0
  %782 = vmatprep.subr.mxu0 0.0
  %783 = vmatpush1.msra.mxu0 0.0
  %784 = vmatprep.subr.mxu0 0.0
  %785 = vmatpush1.msra.mxu0 0.0
  %786 = vmatprep.subr.mxu0 0.0
  %787 = vmatpush1.msra.mxu0 0.0
  %788 = vmatprep.subr.mxu0 0.0
  %789 = vmatpush1.msra.mxu0 0.0
  %790 = vmatprep.subr.mxu0 0.0
  %791 = vmatpush1.msra.mxu0 0.0
  %792 = vmatprep.subr.mxu0 0.0
  %793 = vmatpush1.msra.mxu0 0.0
  %794 = vmatprep.subr.mxu0 0.0
  %795 = vmatpush1.msra.mxu0 0.0
  %796 = vmatprep.subr.mxu0 0.0
  %797 = vmatpush1.msra.mxu0 0.0
  %798 = vmatprep.subr.mxu0 0.0
  %799 = vmatpush1.msra.mxu0 0.0
  %800 = vmatprep.subr.mxu0 0.0
  %801 = vmatpush1.msra.mxu0 0.0
  %802 = vmatprep.subr.mxu0 0.0
  %803 = vmatpush1.msra.mxu0 0.0
  %804 = vmatprep.subr.mxu0 0.0
  %805 = vmatpush1.msra.mxu0 0.0
  %806 = vmatprep.mubr.f32.mxu0 0.0
  %807 = vmatmul.mubr.f32.gmra.mrb[0].mxu0 %v731
  %v808 = vpop.f32.mrb[0].mxu0
  %v809 = vadd.f32 0.0, %v808
  %v810 = vpop.f32.mrb[0].mxu0
  %811 = vmatprep.mubr.f32.mxu0 0.0
  %812 = vmatmul.mubr.f32.gmra.mrb[0].mxu0 %v734
  %v813 = vpop.f32.mrb[0].mxu0
  %v814 = vadd.f32 0.0, %v813
  %v815 = vpop.f32.mrb[0].mxu0
  %816 = vmatprep.mubr.f32.mxu0 0.0
  %817 = vmatmul.mubr.f32.gmra.mrb[0].mxu0 %v737
  %v818 = vpop.f32.mrb[0].mxu0
  %v819 = vadd.f32 0.0, %v818
  %v820 = vpop.f32.mrb[0].mxu0
  %821 = vmatprep.mubr.f32.mxu0 0.0
  %822 = vmatmul.mubr.f32.gmra.mrb[0].mxu0 %v740
  %v823 = vpop.f32.mrb[0].mxu0
  %v824 = vadd.f32 0.0, %v823
  %v825 = vpop.f32.mrb[0].mxu0
  %826 = vdwg.mxu0
  %v827 = vadd.f32 %v721, %v809
  %v828 = vadd.f32 %v722, %v814
  %v829 = vadd.f32 %v723, %v819
  %v830 = vadd.f32 %v724, %v824
  %v831 = vld [vmem:[%s1] sm:$0x3]
  %v833 = vlaneseq
  %v834 = vshrl.u32 %v833, 7
  %v835 = vsub.s32 0, %v834
  %v836 = vrot.slane %v831, %v835
  %v838 = vadd.f32 %v827, %v836
  %v839 = vadd.f32 %v828, %v836
  %v840 = vadd.f32 %v829, %v836
  %v841 = vadd.f32 %v830, %v836
  %v842 = vmul.f32 %v838, 0.2
  %v843 = vmul.f32 %v839, 0.2
  %v844 = vmul.f32 %v840, 0.2
  %v845 = vmul.f32 %v841, 0.2
  %v846 = vmax.f32 %v838, %v842
  %v847 = vmax.f32 %v839, %v843
  %v848 = vmax.f32 %v840, %v844
  %v849 = vmax.f32 %v841, %v845
  %v850 = vpack.c.bf16 %v847, %v846
  %v851 = vpack.c.bf16 %v849, %v848
  %v852 = vld [vmem:[%s5] sm:$0xff]
  %v853 = vld [vmem:[%s5 + $0x8] sm:$0xff]
  %v854 = vld [vmem:[%s5 + $0x10] sm:$0xff]
  %v855 = vld [vmem:[%s5 + $0x18] sm:$0xff]
  %v856 = vld [vmem:[%s5 + $0x20] sm:$0xff]
  %v857 = vld [vmem:[%s5 + $0x28] sm:$0xff]
  %v858 = vld [vmem:[%s5 + $0x30] sm:$0xff]
  %v859 = vld [vmem:[%s5 + $0x38] sm:$0xff]
  %v860 = vld [vmem:[%s5 + $0x40] sm:$0xff]
  %v861 = vld [vmem:[%s5 + $0x48] sm:$0xff]
  %v862 = vld [vmem:[%s5 + $0x50] sm:$0xff]
  %v863 = vld [vmem:[%s5 + $0x58] sm:$0xff]
  %v864 = vld [vmem:[%s5 + $0x60] sm:$0xff]
  %v865 = vld [vmem:[%s5 + $0x68] sm:$0xff]
  %v866 = vld [vmem:[%s5 + $0x70] sm:$0xff]
  %v867 = vld [vmem:[%s5 + $0x78] sm:$0xff]
  %v868 = vld [vmem:[%s5 + $0x80] sm:$0xff]
  %v869 = vld [vmem:[%s5 + $0x88] sm:$0xff]
  %v870 = vld [vmem:[%s5 + $0x90] sm:$0xff]
  %v871 = vld [vmem:[%s5 + $0x98] sm:$0xff]
  %v872 = vld [vmem:[%s5 + $0xa0] sm:$0xff]
  %v873 = vld [vmem:[%s5 + $0xa8] sm:$0xff]
  %v874 = vld [vmem:[%s5 + $0xb0] sm:$0xff]
  %v875 = vld [vmem:[%s5 + $0xb8] sm:$0xff]
  %v876 = vld [vmem:[%s5 + $0xc0] sm:$0xff]
  %v877 = vld [vmem:[%s5 + $0xc8] sm:$0xff]
  %v878 = vld [vmem:[%s5 + $0xd0] sm:$0xff]
  %v879 = vld [vmem:[%s5 + $0xd8] sm:$0xff]
  %v880 = vld [vmem:[%s5 + $0xe0] sm:$0xff]
  %v881 = vld [vmem:[%s5 + $0xe8] sm:$0xff]
  %v882 = vld [vmem:[%s5 + $0xf0] sm:$0xff]
  %v883 = vld [vmem:[%s5 + $0xf8] sm:$0xff]
  %v916 = vunpack.c.l.b16 %v852
  %v917 = vunpack.c.h.b16 %v852
  %v918 = vunpack.c.l.b16 %v853
  %v919 = vunpack.c.h.b16 %v853
  %v920 = vunpack.c.l.b16 %v854
  %v921 = vunpack.c.h.b16 %v854
  %v922 = vunpack.c.l.b16 %v855
  %v923 = vunpack.c.h.b16 %v855
  %v924 = vunpack.c.l.b16 %v856
  %v925 = vunpack.c.h.b16 %v856
  %v926 = vunpack.c.l.b16 %v857
  %v927 = vunpack.c.h.b16 %v857
  %v928 = vunpack.c.l.b16 %v858
  %v929 = vunpack.c.h.b16 %v858
  %v930 = vunpack.c.l.b16 %v859
  %v931 = vunpack.c.h.b16 %v859
  %v932 = vunpack.c.l.b16 %v860
  %v933 = vunpack.c.h.b16 %v860
  %v934 = vunpack.c.l.b16 %v861
  %v935 = vunpack.c.h.b16 %v861
  %v936 = vunpack.c.l.b16 %v862
  %v937 = vunpack.c.h.b16 %v862
  %v938 = vunpack.c.l.b16 %v863
  %v939 = vunpack.c.h.b16 %v863
  %v940 = vunpack.c.l.b16 %v864
  %v941 = vunpack.c.h.b16 %v864
  %v942 = vunpack.c.l.b16 %v865
  %v943 = vunpack.c.h.b16 %v865
  %v944 = vunpack.c.l.b16 %v866
  %v945 = vunpack.c.h.b16 %v866
  %v946 = vunpack.c.l.b16 %v867
  %v947 = vunpack.c.h.b16 %v867
  %v948 = vunpack.c.l.b16 %v868
  %v949 = vunpack.c.h.b16 %v868
  %v950 = vunpack.c.l.b16 %v869
  %v951 = vunpack.c.h.b16 %v869
  %v952 = vunpack.c.l.b16 %v870
  %v953 = vunpack.c.h.b16 %v870
  %v954 = vunpack.c.l.b16 %v871
  %v955 = vunpack.c.h.b16 %v871
  %v956 = vunpack.c.l.b16 %v872
  %v957 = vunpack.c.h.b16 %v872
  %v958 = vunpack.c.l.b16 %v873
  %v959 = vunpack.c.h.b16 %v873
  %v960 = vunpack.c.l.b16 %v874
  %v961 = vunpack.c.h.b16 %v874
  %v962 = vunpack.c.l.b16 %v875
  %v963 = vunpack.c.h.b16 %v875
  %v964 = vunpack.c.l.b16 %v876
  %v965 = vunpack.c.h.b16 %v876
  %v966 = vunpack.c.l.b16 %v877
  %v967 = vunpack.c.h.b16 %v877
  %v968 = vunpack.c.l.b16 %v878
  %v969 = vunpack.c.h.b16 %v878
  %v970 = vunpack.c.l.b16 %v879
  %v971 = vunpack.c.h.b16 %v879
  %v972 = vunpack.c.l.b16 %v880
  %v973 = vunpack.c.h.b16 %v880
  %v974 = vunpack.c.l.b16 %v881
  %v975 = vunpack.c.h.b16 %v881
  %v976 = vunpack.c.l.b16 %v882
  %v977 = vunpack.c.h.b16 %v882
  %v978 = vunpack.c.l.b16 %v883
  %v979 = vunpack.c.h.b16 %v883
  %v980 = vpack.c.b16 %v920, %v916
  %v981 = vpack.c.b16 %v921, %v917
  %v982 = vpack.c.b16 %v922, %v918
  %v983 = vpack.c.b16 %v923, %v919
  %v984 = vpack.c.b16 %v928, %v924
  %v985 = vpack.c.b16 %v929, %v925
  %v986 = vpack.c.b16 %v930, %v926
  %v987 = vpack.c.b16 %v931, %v927
  %v988 = vpack.c.b16 %v936, %v932
  %v989 = vpack.c.b16 %v937, %v933
  %v990 = vpack.c.b16 %v938, %v934
  %v991 = vpack.c.b16 %v939, %v935
  %v992 = vpack.c.b16 %v944, %v940
  %v993 = vpack.c.b16 %v945, %v941
  %v994 = vpack.c.b16 %v946, %v942
  %v995 = vpack.c.b16 %v947, %v943
  %v996 = vpack.c.b16 %v952, %v948
  %v997 = vpack.c.b16 %v953, %v949
  %v998 = vpack.c.b16 %v954, %v950
  %v999 = vpack.c.b16 %v955, %v951
  %v1000 = vpack.c.b16 %v960, %v956
  %v1001 = vpack.c.b16 %v961, %v957
  %v1002 = vpack.c.b16 %v962, %v958
  %v1003 = vpack.c.b16 %v963, %v959
  %v1004 = vpack.c.b16 %v968, %v964
  %v1005 = vpack.c.b16 %v969, %v965
  %v1006 = vpack.c.b16 %v970, %v966
  %v1007 = vpack.c.b16 %v971, %v967
  %v1008 = vpack.c.b16 %v976, %v972
  %v1009 = vpack.c.b16 %v977, %v973
  %v1010 = vpack.c.b16 %v978, %v974
  %v1011 = vpack.c.b16 %v979, %v975
  %1044 = vmatprep.subr.bf16.mxu0 %v981
  %1045 = vmatpush1.bf16.msra.mxu0 %v980
  %1046 = vmatprep.subr.bf16.mxu0 %v985
  %1047 = vmatpush1.bf16.msra.mxu0 %v984
  %1048 = vmatprep.subr.bf16.mxu0 %v989
  %1049 = vmatpush1.bf16.msra.mxu0 %v988
  %1050 = vmatprep.subr.bf16.mxu0 %v993
  %1051 = vmatpush1.bf16.msra.mxu0 %v992
  %1052 = vmatprep.subr.bf16.mxu0 %v997
  %1053 = vmatpush1.bf16.msra.mxu0 %v996
  %1054 = vmatprep.subr.bf16.mxu0 %v1001
  %1055 = vmatpush1.bf16.msra.mxu0 %v1000
  %1056 = vmatprep.subr.bf16.mxu0 %v1005
  %1057 = vmatpush1.bf16.msra.mxu0 %v1004
  %1058 = vmatprep.subr.bf16.mxu0 %v1009
  %1059 = vmatpush1.bf16.msra.mxu0 %v1008
  %1060 = vmatprep.subr.bf16.mxu0 0
  %1061 = vmatpush1.bf16.msra.mxu0 0
  %1062 = vmatprep.subr.bf16.mxu0 0
  %1063 = vmatpush1.bf16.msra.mxu0 0
  %1064 = vmatprep.subr.bf16.mxu0 0
  %1065 = vmatpush1.bf16.msra.mxu0 0
  %1066 = vmatprep.subr.bf16.mxu0 0
  %1067 = vmatpush1.bf16.msra.mxu0 0
  %1068 = vmatprep.subr.bf16.mxu0 0
  %1069 = vmatpush1.bf16.msra.mxu0 0
  %1070 = vmatprep.subr.bf16.mxu0 0
  %1071 = vmatpush1.bf16.msra.mxu0 0
  %1072 = vmatprep.subr.bf16.mxu0 0
  %1073 = vmatpush1.bf16.msra.mxu0 0
  %1074 = vmatprep.subr.bf16.mxu0 0
  %1075 = vmatpush1.bf16.msra.mxu0 0
  %1076 = vmatprep.mubr.bf16.mxu0 0
  %1077 = vmatmul.mubr.bf16.gmra.mrb[0].mxu0 %v850
  %v1078 = vpop.f32.mrb[0].mxu0
  %v1079 = vadd.f32 0.0, %v1078
  %v1080 = vpop.f32.mrb[0].mxu0
  %v1081 = vadd.f32 0.0, %v1080
  %v1082 = vpop.f32.mrb[0].mxu0
  %v1083 = vadd.f32 0.0, %v1082
  %v1084 = vpop.f32.mrb[0].mxu0
  %v1085 = vadd.f32 0.0, %v1084
  %1086 = vmatprep.mubr.bf16.mxu0 0
  %1087 = vmatmul.mubr.bf16.gmra.mrb[0].mxu0 %v851
  %v1088 = vpop.f32.mrb[0].mxu0
  %v1089 = vadd.f32 0.0, %v1088
  %v1090 = vpop.f32.mrb[0].mxu0
  %v1091 = vadd.f32 0.0, %v1090
  %v1092 = vpop.f32.mrb[0].mxu0
  %v1093 = vadd.f32 0.0, %v1092
  %v1094 = vpop.f32.mrb[0].mxu0
  %v1095 = vadd.f32 0.0, %v1094
  %1096 = vdwg.mxu0
  %1097 = vmatprep.subr.bf16.mxu0 %v983
  %1098 = vmatpush1.bf16.msra.mxu0 %v982
  %1099 = vmatprep.subr.bf16.mxu0 %v987
  %1100 = vmatpush1.bf16.msra.mxu0 %v986
  %1101 = vmatprep.subr.bf16.mxu0 %v991
  %1102 = vmatpush1.bf16.msra.mxu0 %v990
  %1103 = vmatprep.subr.bf16.mxu0 %v995
  %1104 = vmatpush1.bf16.msra.mxu0 %v994
  %1105 = vmatprep.subr.bf16.mxu0 %v999
  %1106 = vmatpush1.bf16.msra.mxu0 %v998
  %1107 = vmatprep.subr.bf16.mxu0 %v1003
  %1108 = vmatpush1.bf16.msra.mxu0 %v1002
  %1109 = vmatprep.subr.bf16.mxu0 %v1007
  %1110 = vmatpush1.bf16.msra.mxu0 %v1006
  %1111 = vmatprep.subr.bf16.mxu0 %v1011
  %1112 = vmatpush1.bf16.msra.mxu0 %v1010
  %1113 = vmatprep.subr.bf16.mxu0 0
  %1114 = vmatpush1.bf16.msra.mxu0 0
  %1115 = vmatprep.subr.bf16.mxu0 0
  %1116 = vmatpush1.bf16.msra.mxu0 0
  %1117 = vmatprep.subr.bf16.mxu0 0
  %1118 = vmatpush1.bf16.msra.mxu0 0
  %1119 = vmatprep.subr.bf16.mxu0 0
  %1120 = vmatpush1.bf16.msra.mxu0 0
  %1121 = vmatprep.subr.bf16.mxu0 0
  %1122 = vmatpush1.bf16.msra.mxu0 0
  %1123 = vmatprep.subr.bf16.mxu0 0
  %1124 = vmatpush1.bf16.msra.mxu0 0
  %1125 = vmatprep.subr.bf16.mxu0 0
  %1126 = vmatpush1.bf16.msra.mxu0 0
  %1127 = vmatprep.subr.bf16.mxu0 0
  %1128 = vmatpush1.bf16.msra.mxu0 0
  %1129 = vmatprep.mubr.bf16.mxu0 0
  %1130 = vmatmul.mubr.bf16.gmra.mrb[0].mxu0 %v850
  %v1131 = vpop.f32.mrb[0].mxu0
  %v1132 = vadd.f32 0.0, %v1131
  %v1133 = vpop.f32.mrb[0].mxu0
  %v1134 = vadd.f32 0.0, %v1133
  %v1135 = vpop.f32.mrb[0].mxu0
  %v1136 = vadd.f32 0.0, %v1135
  %v1137 = vpop.f32.mrb[0].mxu0
  %v1138 = vadd.f32 0.0, %v1137
  %1139 = vmatprep.mubr.bf16.mxu0 0
  %1140 = vmatmul.mubr.bf16.gmra.mrb[0].mxu0 %v851
  %v1141 = vpop.f32.mrb[0].mxu0
  %v1142 = vadd.f32 0.0, %v1141
  %v1143 = vpop.f32.mrb[0].mxu0
  %v1144 = vadd.f32 0.0, %v1143
  %v1145 = vpop.f32.mrb[0].mxu0
  %v1146 = vadd.f32 0.0, %v1145
  %v1147 = vpop.f32.mrb[0].mxu0
  %v1148 = vadd.f32 0.0, %v1147
  %1149 = vdwg.mxu0
  %v1150 = vld [vmem:[%s4] sm:$0xff]
  %v1151 = vld [vmem:[%s4 + $0x8] sm:$0xff]
  %s1152 = scalar_lea.vmem %s4, 16
  %v1153 = vld [vmem:[%s1152] sm:$0xff]
  %v1154 = vld [vmem:[%s1152 + $0x8] sm:$0xff]
  %vm1155 = vcmask 261120
  %v1157 = vsel %vm1155, %v1153, 0
  %v1160 = vsel %vm1155, %v1154, 0
  %1162 = vmatprep.subr.mxu0 0.0
  %1163 = vmatpush1.msra.mxu0 %v1081
  %1164 = vmatprep.subr.mxu0 0.0
  %1165 = vmatpush1.msra.mxu0 %v1085
  %1166 = vmatprep.subr.mxu0 0.0
  %1167 = vmatpush1.msra.mxu0 %v1091
  %1168 = vmatprep.subr.mxu0 0.0
  %1169 = vmatpush1.msra.mxu0 %v1095
  %1170 = vmatprep.subr.mxu0 0.0
  %1171 = vmatpush1.msra.mxu0 0.0
  %1172 = vmatprep.subr.mxu0 0.0
  %1173 = vmatpush1.msra.mxu0 0.0
  %1174 = vmatprep.subr.mxu0 0.0
  %1175 = vmatpush1.msra.mxu0 0.0
  %1176 = vmatprep.subr.mxu0 0.0
  %1177 = vmatpush1.msra.mxu0 0.0
  %1178 = vmatprep.subr.mxu0 0.0
  %1179 = vmatpush1.msra.mxu0 0.0
  %1180 = vmatprep.subr.mxu0 0.0
  %1181 = vmatpush1.msra.mxu0 0.0
  %1182 = vmatprep.subr.mxu0 0.0
  %1183 = vmatpush1.msra.mxu0 0.0
  %1184 = vmatprep.subr.mxu0 0.0
  %1185 = vmatpush1.msra.mxu0 0.0
  %1186 = vmatprep.subr.mxu0 0.0
  %1187 = vmatpush1.msra.mxu0 0.0
  %1188 = vmatprep.subr.mxu0 0.0
  %1189 = vmatpush1.msra.mxu0 0.0
  %1190 = vmatprep.subr.mxu0 0.0
  %1191 = vmatpush1.msra.mxu0 0.0
  %1192 = vmatprep.subr.mxu0 0.0
  %1193 = vmatpush1.msra.mxu0 0.0
  %1194 = vmatprep.subr.mxu0 0.0
  %1195 = vmatpush1.msra.mxu0 0.0
  %1196 = vmatprep.subr.mxu0 0.0
  %1197 = vmatpush1.msra.mxu0 0.0
  %1198 = vmatprep.subr.mxu0 0.0
  %1199 = vmatpush1.msra.mxu0 0.0
  %1200 = vmatprep.subr.mxu0 0.0
  %1201 = vmatpush1.msra.mxu0 0.0
  %1202 = vmatprep.subr.mxu0 0.0
  %1203 = vmatpush1.msra.mxu0 0.0
  %1204 = vmatprep.subr.mxu0 0.0
  %1205 = vmatpush1.msra.mxu0 0.0
  %1206 = vmatprep.subr.mxu0 0.0
  %1207 = vmatpush1.msra.mxu0 0.0
  %1208 = vmatprep.subr.mxu0 0.0
  %1209 = vmatpush1.msra.mxu0 0.0
  %1210 = vmatprep.subr.mxu0 0.0
  %1211 = vmatpush1.msra.mxu0 0.0
  %1212 = vmatprep.subr.mxu0 0.0
  %1213 = vmatpush1.msra.mxu0 0.0
  %1214 = vmatprep.subr.mxu0 0.0
  %1215 = vmatpush1.msra.mxu0 0.0
  %1216 = vmatprep.subr.mxu0 0.0
  %1217 = vmatpush1.msra.mxu0 0.0
  %1218 = vmatprep.subr.mxu0 0.0
  %1219 = vmatpush1.msra.mxu0 0.0
  %1220 = vmatprep.subr.mxu0 0.0
  %1221 = vmatpush1.msra.mxu0 0.0
  %1222 = vmatprep.subr.mxu0 0.0
  %1223 = vmatpush1.msra.mxu0 0.0
  %1224 = vmatprep.subr.mxu0 0.0
  %1225 = vmatpush1.msra.mxu0 0.0
  %1226 = vmatprep.mubr.f32.mxu0 0.0
  %1227 = vmatmul.mubr.f32.gmra.mrb[0].mxu0 %v1157
  %v1228 = vpop.f32.mrb[0].mxu0
  %v1229 = vadd.f32 0.0, %v1228
  %v1230 = vpop.f32.mrb[0].mxu0
  %1231 = vmatprep.mubr.f32.mxu0 0.0
  %1232 = vmatmul.mubr.f32.gmra.mrb[0].mxu0 %v1160
  %v1233 = vpop.f32.mrb[0].mxu0
  %v1234 = vadd.f32 0.0, %v1233
  %v1235 = vpop.f32.mrb[0].mxu0
  %1236 = vdwg.mxu0
  %v1238 = vsel %vm1155, %v1150, 0
  %v1241 = vsel %vm1155, %v1151, 0
  %1243 = vmatprep.subr.mxu0 0.0
  %1244 = vmatpush1.msra.mxu0 %v1079
  %1245 = vmatprep.subr.mxu0 0.0
  %1246 = vmatpush1.msra.mxu0 %v1083
  %1247 = vmatprep.subr.mxu0 0.0
  %1248 = vmatpush1.msra.mxu0 %v1089
  %1249 = vmatprep.subr.mxu0 0.0
  %1250 = vmatpush1.msra.mxu0 %v1093
  %1251 = vmatprep.subr.mxu0 0.0
  %1252 = vmatpush1.msra.mxu0 0.0
  %1253 = vmatprep.subr.mxu0 0.0
  %1254 = vmatpush1.msra.mxu0 0.0
  %1255 = vmatprep.subr.mxu0 0.0
  %1256 = vmatpush1.msra.mxu0 0.0
  %1257 = vmatprep.subr.mxu0 0.0
  %1258 = vmatpush1.msra.mxu0 0.0
  %1259 = vmatprep.subr.mxu0 0.0
  %1260 = vmatpush1.msra.mxu0 0.0
  %1261 = vmatprep.subr.mxu0 0.0
  %1262 = vmatpush1.msra.mxu0 0.0
  %1263 = vmatprep.subr.mxu0 0.0
  %1264 = vmatpush1.msra.mxu0 0.0
  %1265 = vmatprep.subr.mxu0 0.0
  %1266 = vmatpush1.msra.mxu0 0.0
  %1267 = vmatprep.subr.mxu0 0.0
  %1268 = vmatpush1.msra.mxu0 0.0
  %1269 = vmatprep.subr.mxu0 0.0
  %1270 = vmatpush1.msra.mxu0 0.0
  %1271 = vmatprep.subr.mxu0 0.0
  %1272 = vmatpush1.msra.mxu0 0.0
  %1273 = vmatprep.subr.mxu0 0.0
  %1274 = vmatpush1.msra.mxu0 0.0
  %1275 = vmatprep.subr.mxu0 0.0
  %1276 = vmatpush1.msra.mxu0 0.0
  %1277 = vmatprep.subr.mxu0 0.0
  %1278 = vmatpush1.msra.mxu0 0.0
  %1279 = vmatprep.subr.mxu0 0.0
  %1280 = vmatpush1.msra.mxu0 0.0
  %1281 = vmatprep.subr.mxu0 0.0
  %1282 = vmatpush1.msra.mxu0 0.0
  %1283 = vmatprep.subr.mxu0 0.0
  %1284 = vmatpush1.msra.mxu0 0.0
  %1285 = vmatprep.subr.mxu0 0.0
  %1286 = vmatpush1.msra.mxu0 0.0
  %1287 = vmatprep.subr.mxu0 0.0
  %1288 = vmatpush1.msra.mxu0 0.0
  %1289 = vmatprep.subr.mxu0 0.0
  %1290 = vmatpush1.msra.mxu0 0.0
  %1291 = vmatprep.subr.mxu0 0.0
  %1292 = vmatpush1.msra.mxu0 0.0
  %1293 = vmatprep.subr.mxu0 0.0
  %1294 = vmatpush1.msra.mxu0 0.0
  %1295 = vmatprep.subr.mxu0 0.0
  %1296 = vmatpush1.msra.mxu0 0.0
  %1297 = vmatprep.subr.mxu0 0.0
  %1298 = vmatpush1.msra.mxu0 0.0
  %1299 = vmatprep.subr.mxu0 0.0
  %1300 = vmatpush1.msra.mxu0 0.0
  %1301 = vmatprep.subr.mxu0 0.0
  %1302 = vmatpush1.msra.mxu0 0.0
  %1303 = vmatprep.subr.mxu0 0.0
  %1304 = vmatpush1.msra.mxu0 0.0
  %1305 = vmatprep.subr.mxu0 0.0
  %1306 = vmatpush1.msra.mxu0 0.0
  %1307 = vmatprep.mubr.f32.mxu0 0.0
  %1308 = vmatmul.mubr.f32.gmra.mrb[0].mxu0 %v1238
  %v1309 = vpop.f32.mrb[0].mxu0
  %v1310 = vadd.f32 %v1229, %v1309
  %v1311 = vpop.f32.mrb[0].mxu0
  %1312 = vmatprep.mubr.f32.mxu0 0.0
  %1313 = vmatmul.mubr.f32.gmra.mrb[0].mxu0 %v1241
  %v1314 = vpop.f32.mrb[0].mxu0
  %v1315 = vadd.f32 %v1234, %v1314
  %v1316 = vpop.f32.mrb[0].mxu0
  %1317 = vdwg.mxu0
  %s1318 = scalar_lea.vmem %s4, 32
  %v1319 = vld [vmem:[%s1318] sm:$0xff]
  %v1320 = vld [vmem:[%s1318 + $0x8] sm:$0xff]
  %v1322 = vsel %vm1155, %v1319, 0
  %v1325 = vsel %vm1155, %v1320, 0
  %1327 = vmatprep.subr.mxu0 0.0
  %1328 = vmatpush1.msra.mxu0 %v1132
  %1329 = vmatprep.subr.mxu0 0.0
  %1330 = vmatpush1.msra.mxu0 %v1136
  %1331 = vmatprep.subr.mxu0 0.0
  %1332 = vmatpush1.msra.mxu0 %v1142
  %1333 = vmatprep.subr.mxu0 0.0
  %1334 = vmatpush1.msra.mxu0 %v1146
  %1335 = vmatprep.subr.mxu0 0.0
  %1336 = vmatpush1.msra.mxu0 0.0
  %1337 = vmatprep.subr.mxu0 0.0
  %1338 = vmatpush1.msra.mxu0 0.0
  %1339 = vmatprep.subr.mxu0 0.0
  %1340 = vmatpush1.msra.mxu0 0.0
  %1341 = vmatprep.subr.mxu0 0.0
  %1342 = vmatpush1.msra.mxu0 0.0
  %1343 = vmatprep.subr.mxu0 0.0
  %1344 = vmatpush1.msra.mxu0 0.0
  %1345 = vmatprep.subr.mxu0 0.0
  %1346 = vmatpush1.msra.mxu0 0.0
  %1347 = vmatprep.subr.mxu0 0.0
  %1348 = vmatpush1.msra.mxu0 0.0
  %1349 = vmatprep.subr.mxu0 0.0
  %1350 = vmatpush1.msra.mxu0 0.0
  %1351 = vmatprep.subr.mxu0 0.0
  %1352 = vmatpush1.msra.mxu0 0.0
  %1353 = vmatprep.subr.mxu0 0.0
  %1354 = vmatpush1.msra.mxu0 0.0
  %1355 = vmatprep.subr.mxu0 0.0
  %1356 = vmatpush1.msra.mxu0 0.0
  %1357 = vmatprep.subr.mxu0 0.0
  %1358 = vmatpush1.msra.mxu0 0.0
  %1359 = vmatprep.subr.mxu0 0.0
  %1360 = vmatpush1.msra.mxu0 0.0
  %1361 = vmatprep.subr.mxu0 0.0
  %1362 = vmatpush1.msra.mxu0 0.0
  %1363 = vmatprep.subr.mxu0 0.0
  %1364 = vmatpush1.msra.mxu0 0.0
  %1365 = vmatprep.subr.mxu0 0.0
  %1366 = vmatpush1.msra.mxu0 0.0
  %1367 = vmatprep.subr.mxu0 0.0
  %1368 = vmatpush1.msra.mxu0 0.0
  %1369 = vmatprep.subr.mxu0 0.0
  %1370 = vmatpush1.msra.mxu0 0.0
  %1371 = vmatprep.subr.mxu0 0.0
  %1372 = vmatpush1.msra.mxu0 0.0
  %1373 = vmatprep.subr.mxu0 0.0
  %1374 = vmatpush1.msra.mxu0 0.0
  %1375 = vmatprep.subr.mxu0 0.0
  %1376 = vmatpush1.msra.mxu0 0.0
  %1377 = vmatprep.subr.mxu0 0.0
  %1378 = vmatpush1.msra.mxu0 0.0
  %1379 = vmatprep.subr.mxu0 0.0
  %1380 = vmatpush1.msra.mxu0 0.0
  %1381 = vmatprep.subr.mxu0 0.0
  %1382 = vmatpush1.msra.mxu0 0.0
  %1383 = vmatprep.subr.mxu0 0.0
  %1384 = vmatpush1.msra.mxu0 0.0
  %1385 = vmatprep.subr.mxu0 0.0
  %1386 = vmatpush1.msra.mxu0 0.0
  %1387 = vmatprep.subr.mxu0 0.0
  %1388 = vmatpush1.msra.mxu0 0.0
  %1389 = vmatprep.subr.mxu0 0.0
  %1390 = vmatpush1.msra.mxu0 0.0
  %1391 = vmatprep.mubr.f32.mxu0 0.0
  %1392 = vmatmul.mubr.f32.gmra.mrb[0].mxu0 %v1322
  %v1393 = vpop.f32.mrb[0].mxu0
  %v1394 = vadd.f32 0.0, %v1393
  %v1395 = vpop.f32.mrb[0].mxu0
  %1396 = vmatprep.mubr.f32.mxu0 0.0
  %1397 = vmatmul.mubr.f32.gmra.mrb[0].mxu0 %v1325
  %v1398 = vpop.f32.mrb[0].mxu0
  %v1399 = vadd.f32 0.0, %v1398
  %v1400 = vpop.f32.mrb[0].mxu0
  %1401 = vdwg.mxu0
  %v1402 = vadd.f32 %v1310, %v1394
  %v1403 = vadd.f32 %v1315, %v1399
  %s1404 = scalar_lea.vmem %s4, 48
  %v1405 = vld [vmem:[%s1404] sm:$0xff]
  %v1406 = vld [vmem:[%s1404 + $0x8] sm:$0xff]
  %v1408 = vsel %vm1155, %v1405, 0
  %v1411 = vsel %vm1155, %v1406, 0
  %1413 = vmatprep.subr.mxu0 0.0
  %1414 = vmatpush1.msra.mxu0 %v1134
  %1415 = vmatprep.subr.mxu0 0.0
  %1416 = vmatpush1.msra.mxu0 %v1138
  %1417 = vmatprep.subr.mxu0 0.0
  %1418 = vmatpush1.msra.mxu0 %v1144
  %1419 = vmatprep.subr.mxu0 0.0
  %1420 = vmatpush1.msra.mxu0 %v1148
  %1421 = vmatprep.subr.mxu0 0.0
  %1422 = vmatpush1.msra.mxu0 0.0
  %1423 = vmatprep.subr.mxu0 0.0
  %1424 = vmatpush1.msra.mxu0 0.0
  %1425 = vmatprep.subr.mxu0 0.0
  %1426 = vmatpush1.msra.mxu0 0.0
  %1427 = vmatprep.subr.mxu0 0.0
  %1428 = vmatpush1.msra.mxu0 0.0
  %1429 = vmatprep.subr.mxu0 0.0
  %1430 = vmatpush1.msra.mxu0 0.0
  %1431 = vmatprep.subr.mxu0 0.0
  %1432 = vmatpush1.msra.mxu0 0.0
  %1433 = vmatprep.subr.mxu0 0.0
  %1434 = vmatpush1.msra.mxu0 0.0
  %1435 = vmatprep.subr.mxu0 0.0
  %1436 = vmatpush1.msra.mxu0 0.0
  %1437 = vmatprep.subr.mxu0 0.0
  %1438 = vmatpush1.msra.mxu0 0.0
  %1439 = vmatprep.subr.mxu0 0.0
  %1440 = vmatpush1.msra.mxu0 0.0
  %1441 = vmatprep.subr.mxu0 0.0
  %1442 = vmatpush1.msra.mxu0 0.0
  %1443 = vmatprep.subr.mxu0 0.0
  %1444 = vmatpush1.msra.mxu0 0.0
  %1445 = vmatprep.subr.mxu0 0.0
  %1446 = vmatpush1.msra.mxu0 0.0
  %1447 = vmatprep.subr.mxu0 0.0
  %1448 = vmatpush1.msra.mxu0 0.0
  %1449 = vmatprep.subr.mxu0 0.0
  %1450 = vmatpush1.msra.mxu0 0.0
  %1451 = vmatprep.subr.mxu0 0.0
  %1452 = vmatpush1.msra.mxu0 0.0
  %1453 = vmatprep.subr.mxu0 0.0
  %1454 = vmatpush1.msra.mxu0 0.0
  %1455 = vmatprep.subr.mxu0 0.0
  %1456 = vmatpush1.msra.mxu0 0.0
  %1457 = vmatprep.subr.mxu0 0.0
  %1458 = vmatpush1.msra.mxu0 0.0
  %1459 = vmatprep.subr.mxu0 0.0
  %1460 = vmatpush1.msra.mxu0 0.0
  %1461 = vmatprep.subr.mxu0 0.0
  %1462 = vmatpush1.msra.mxu0 0.0
  %1463 = vmatprep.subr.mxu0 0.0
  %1464 = vmatpush1.msra.mxu0 0.0
  %1465 = vmatprep.subr.mxu0 0.0
  %1466 = vmatpush1.msra.mxu0 0.0
  %1467 = vmatprep.subr.mxu0 0.0
  %1468 = vmatpush1.msra.mxu0 0.0
  %1469 = vmatprep.subr.mxu0 0.0
  %1470 = vmatpush1.msra.mxu0 0.0
  %1471 = vmatprep.subr.mxu0 0.0
  %1472 = vmatpush1.msra.mxu0 0.0
  %1473 = vmatprep.subr.mxu0 0.0
  %1474 = vmatpush1.msra.mxu0 0.0
  %1475 = vmatprep.subr.mxu0 0.0
  %1476 = vmatpush1.msra.mxu0 0.0
  %1477 = vmatprep.mubr.f32.mxu0 0.0
  %1478 = vmatmul.mubr.f32.gmra.mrb[0].mxu0 %v1408
  %v1479 = vpop.f32.mrb[0].mxu0
  %v1480 = vadd.f32 0.0, %v1479
  %v1481 = vpop.f32.mrb[0].mxu0
  %1482 = vmatprep.mubr.f32.mxu0 0.0
  %1483 = vmatmul.mubr.f32.gmra.mrb[0].mxu0 %v1411
  %v1484 = vpop.f32.mrb[0].mxu0
  %v1485 = vadd.f32 0.0, %v1484
  %v1486 = vpop.f32.mrb[0].mxu0
  %1487 = vdwg.mxu0
  %v1488 = vadd.f32 %v1402, %v1480
  %v1489 = vadd.f32 %v1403, %v1485
  %s1490 = scalar_lea.vmem %s1, 2
  %v1491 = vld [vmem:[%s1490] sm:$0x3]
  %v1493 = vlaneseq
  %v1494 = vshrl.u32 %v1493, 7
  %v1495 = vsub.s32 0, %v1494
  %v1496 = vrot.slane %v1491, %v1495
  %v1498 = vadd.f32 %v1488, %v1496
  %v1499 = vadd.f32 %v1489, %v1496
  %v1500 = vmul.f32 %v1498, 0.2
  %v1501 = vmul.f32 %v1499, 0.2
  %v1502 = vmax.f32 %v1498, %v1500
  %v1503 = vmax.f32 %v1499, %v1501
  %v1504 = vpack.c.bf16 %v1503, %v1502
  %v1505 = vld [vmem:[%s7] sm:$0xff]
  %v1506 = vld [vmem:[%s7 + $0x8] sm:$0xff]
  %v1507 = vld [vmem:[%s7 + $0x10] sm:$0xff]
  %v1508 = vld [vmem:[%s7 + $0x18] sm:$0xff]
  %v1509 = vld [vmem:[%s7 + $0x20] sm:$0xff]
  %v1510 = vld [vmem:[%s7 + $0x28] sm:$0xff]
  %v1511 = vld [vmem:[%s7 + $0x30] sm:$0xff]
  %v1512 = vld [vmem:[%s7 + $0x38] sm:$0xff]
  %v1513 = vld [vmem:[%s7 + $0x40] sm:$0xff]
  %v1514 = vld [vmem:[%s7 + $0x48] sm:$0xff]
  %v1515 = vld [vmem:[%s7 + $0x50] sm:$0xff]
  %v1516 = vld [vmem:[%s7 + $0x58] sm:$0xff]
  %v1517 = vld [vmem:[%s7 + $0x60] sm:$0xff]
  %v1518 = vld [vmem:[%s7 + $0x68] sm:$0xff]
  %v1519 = vld [vmem:[%s7 + $0x70] sm:$0xff]
  %v1520 = vld [vmem:[%s7 + $0x78] sm:$0xff]
  %v1521 = vld [vmem:[%s7 + $0x80] sm:$0xff]
  %v1522 = vld [vmem:[%s7 + $0x88] sm:$0xff]
  %v1523 = vld [vmem:[%s7 + $0x90] sm:$0xff]
  %v1524 = vld [vmem:[%s7 + $0x98] sm:$0xff]
  %v1525 = vld [vmem:[%s7 + $0xa0] sm:$0xff]
  %v1526 = vld [vmem:[%s7 + $0xa8] sm:$0xff]
  %v1527 = vld [vmem:[%s7 + $0xb0] sm:$0xff]
  %v1528 = vld [vmem:[%s7 + $0xb8] sm:$0xff]
  %v1529 = vld [vmem:[%s7 + $0xc0] sm:$0xff]
  %v1530 = vld [vmem:[%s7 + $0xc8] sm:$0xff]
  %v1531 = vld [vmem:[%s7 + $0xd0] sm:$0xff]
  %v1532 = vld [vmem:[%s7 + $0xd8] sm:$0xff]
  %v1533 = vld [vmem:[%s7 + $0xe0] sm:$0xff]
  %v1534 = vld [vmem:[%s7 + $0xe8] sm:$0xff]
  %v1535 = vld [vmem:[%s7 + $0xf0] sm:$0xff]
  %v1536 = vld [vmem:[%s7 + $0xf8] sm:$0xff]
  %v1537 = vld [vmem:[%s7 + $0x100] sm:$0xff]
  %v1538 = vld [vmem:[%s7 + $0x108] sm:$0xff]
  %v1539 = vld [vmem:[%s7 + $0x110] sm:$0xff]
  %v1540 = vld [vmem:[%s7 + $0x118] sm:$0xff]
  %v1541 = vld [vmem:[%s7 + $0x120] sm:$0xff]
  %v1542 = vld [vmem:[%s7 + $0x128] sm:$0xff]
  %v1543 = vld [vmem:[%s7 + $0x130] sm:$0xff]
  %v1544 = vld [vmem:[%s7 + $0x138] sm:$0xff]
  %v1545 = vld [vmem:[%s7 + $0x140] sm:$0xff]
  %v1546 = vld [vmem:[%s7 + $0x148] sm:$0xff]
  %v1547 = vld [vmem:[%s7 + $0x150] sm:$0xff]
  %v1548 = vld [vmem:[%s7 + $0x158] sm:$0xff]
  %v1549 = vld [vmem:[%s7 + $0x160] sm:$0xff]
  %v1550 = vld [vmem:[%s7 + $0x168] sm:$0xff]
  %v1551 = vld [vmem:[%s7 + $0x170] sm:$0xff]
  %v1552 = vld [vmem:[%s7 + $0x178] sm:$0xff]
  %v1553 = vld [vmem:[%s7 + $0x180] sm:$0xff]
  %v1554 = vld [vmem:[%s7 + $0x188] sm:$0xff]
  %v1555 = vld [vmem:[%s7 + $0x190] sm:$0xff]
  %v1556 = vld [vmem:[%s7 + $0x198] sm:$0xff]
  %v1557 = vld [vmem:[%s7 + $0x1a0] sm:$0xff]
  %v1558 = vld [vmem:[%s7 + $0x1a8] sm:$0xff]
  %v1559 = vld [vmem:[%s7 + $0x1b0] sm:$0xff]
  %v1560 = vld [vmem:[%s7 + $0x1b8] sm:$0xff]
  %v1561 = vld [vmem:[%s7 + $0x1c0] sm:$0xff]
  %v1562 = vld [vmem:[%s7 + $0x1c8] sm:$0xff]
  %v1563 = vld [vmem:[%s7 + $0x1d0] sm:$0xff]
  %v1564 = vld [vmem:[%s7 + $0x1d8] sm:$0xff]
  %v1565 = vld [vmem:[%s7 + $0x1e0] sm:$0xff]
  %v1566 = vld [vmem:[%s7 + $0x1e8] sm:$0xff]
  %v1567 = vld [vmem:[%s7 + $0x1f0] sm:$0xff]
  %v1568 = vld [vmem:[%s7 + $0x1f8] sm:$0xff]
  %v1633 = vunpack.c.l.b16 %v1505
  %v1634 = vunpack.c.h.b16 %v1505
  %v1635 = vunpack.c.l.b16 %v1506
  %v1636 = vunpack.c.h.b16 %v1506
  %v1637 = vunpack.c.l.b16 %v1507
  %v1638 = vunpack.c.h.b16 %v1507
  %v1639 = vunpack.c.l.b16 %v1508
  %v1640 = vunpack.c.h.b16 %v1508
  %v1641 = vunpack.c.l.b16 %v1509
  %v1642 = vunpack.c.h.b16 %v1509
  %v1643 = vunpack.c.l.b16 %v1510
  %v1644 = vunpack.c.h.b16 %v1510
  %v1645 = vunpack.c.l.b16 %v1511
  %v1646 = vunpack.c.h.b16 %v1511
  %v1647 = vunpack.c.l.b16 %v1512
  %v1648 = vunpack.c.h.b16 %v1512
  %v1649 = vunpack.c.l.b16 %v1513
  %v1650 = vunpack.c.h.b16 %v1513
  %v1651 = vunpack.c.l.b16 %v1514
  %v1652 = vunpack.c.h.b16 %v1514
  %v1653 = vunpack.c.l.b16 %v1515
  %v1654 = vunpack.c.h.b16 %v1515
  %v1655 = vunpack.c.l.b16 %v1516
  %v1656 = vunpack.c.h.b16 %v1516
  %v1657 = vunpack.c.l.b16 %v1517
  %v1658 = vunpack.c.h.b16 %v1517
  %v1659 = vunpack.c.l.b16 %v1518
  %v1660 = vunpack.c.h.b16 %v1518
  %v1661 = vunpack.c.l.b16 %v1519
  %v1662 = vunpack.c.h.b16 %v1519
  %v1663 = vunpack.c.l.b16 %v1520
  %v1664 = vunpack.c.h.b16 %v1520
  %v1665 = vunpack.c.l.b16 %v1521
  %v1666 = vunpack.c.h.b16 %v1521
  %v1667 = vunpack.c.l.b16 %v1522
  %v1668 = vunpack.c.h.b16 %v1522
  %v1669 = vunpack.c.l.b16 %v1523
  %v1670 = vunpack.c.h.b16 %v1523
  %v1671 = vunpack.c.l.b16 %v1524
  %v1672 = vunpack.c.h.b16 %v1524
  %v1673 = vunpack.c.l.b16 %v1525
  %v1674 = vunpack.c.h.b16 %v1525
  %v1675 = vunpack.c.l.b16 %v1526
  %v1676 = vunpack.c.h.b16 %v1526
  %v1677 = vunpack.c.l.b16 %v1527
  %v1678 = vunpack.c.h.b16 %v1527
  %v1679 = vunpack.c.l.b16 %v1528
  %v1680 = vunpack.c.h.b16 %v1528
  %v1681 = vunpack.c.l.b16 %v1529
  %v1682 = vunpack.c.h.b16 %v1529
  %v1683 = vunpack.c.l.b16 %v1530
  %v1684 = vunpack.c.h.b16 %v1530
  %v1685 = vunpack.c.l.b16 %v1531
  %v1686 = vunpack.c.h.b16 %v1531
  %v1687 = vunpack.c.l.b16 %v1532
  %v1688 = vunpack.c.h.b16 %v1532
  %v1689 = vunpack.c.l.b16 %v1533
  %v1690 = vunpack.c.h.b16 %v1533
  %v1691 = vunpack.c.l.b16 %v1534
  %v1692 = vunpack.c.h.b16 %v1534
  %v1693 = vunpack.c.l.b16 %v1535
  %v1694 = vunpack.c.h.b16 %v1535
  %v1695 = vunpack.c.l.b16 %v1536
  %v1696 = vunpack.c.h.b16 %v1536
  %v1697 = vunpack.c.l.b16 %v1537
  %v1698 = vunpack.c.h.b16 %v1537
  %v1699 = vunpack.c.l.b16 %v1538
  %v1700 = vunpack.c.h.b16 %v1538
  %v1701 = vunpack.c.l.b16 %v1539
  %v1702 = vunpack.c.h.b16 %v1539
  %v1703 = vunpack.c.l.b16 %v1540
  %v1704 = vunpack.c.h.b16 %v1540
  %v1705 = vunpack.c.l.b16 %v1541
  %v1706 = vunpack.c.h.b16 %v1541
  %v1707 = vunpack.c.l.b16 %v1542
  %v1708 = vunpack.c.h.b16 %v1542
  %v1709 = vunpack.c.l.b16 %v1543
  %v1710 = vunpack.c.h.b16 %v1543
  %v1711 = vunpack.c.l.b16 %v1544
  %v1712 = vunpack.c.h.b16 %v1544
  %v1713 = vunpack.c.l.b16 %v1545
  %v1714 = vunpack.c.h.b16 %v1545
  %v1715 = vunpack.c.l.b16 %v1546
  %v1716 = vunpack.c.h.b16 %v1546
  %v1717 = vunpack.c.l.b16 %v1547
  %v1718 = vunpack.c.h.b16 %v1547
  %v1719 = vunpack.c.l.b16 %v1548
  %v1720 = vunpack.c.h.b16 %v1548
  %v1721 = vunpack.c.l.b16 %v1549
  %v1722 = vunpack.c.h.b16 %v1549
  %v1723 = vunpack.c.l.b16 %v1550
  %v1724 = vunpack.c.h.b16 %v1550
  %v1725 = vunpack.c.l.b16 %v1551
  %v1726 = vunpack.c.h.b16 %v1551
  %v1727 = vunpack.c.l.b16 %v1552
  %v1728 = vunpack.c.h.b16 %v1552
  %v1729 = vunpack.c.l.b16 %v1553
  %v1730 = vunpack.c.h.b16 %v1553
  %v1731 = vunpack.c.l.b16 %v1554
  %v1732 = vunpack.c.h.b16 %v1554
  %v1733 = vunpack.c.l.b16 %v1555
  %v1734 = vunpack.c.h.b16 %v1555
  %v1735 = vunpack.c.l.b16 %v1556
  %v1736 = vunpack.c.h.b16 %v1556
  %v1737 = vunpack.c.l.b16 %v1557
  %v1738 = vunpack.c.h.b16 %v1557
  %v1739 = vunpack.c.l.b16 %v1558
  %v1740 = vunpack.c.h.b16 %v1558
  %v1741 = vunpack.c.l.b16 %v1559
  %v1742 = vunpack.c.h.b16 %v1559
  %v1743 = vunpack.c.l.b16 %v1560
  %v1744 = vunpack.c.h.b16 %v1560
  %v1745 = vunpack.c.l.b16 %v1561
  %v1746 = vunpack.c.h.b16 %v1561
  %v1747 = vunpack.c.l.b16 %v1562
  %v1748 = vunpack.c.h.b16 %v1562
  %v1749 = vunpack.c.l.b16 %v1563
  %v1750 = vunpack.c.h.b16 %v1563
  %v1751 = vunpack.c.l.b16 %v1564
  %v1752 = vunpack.c.h.b16 %v1564
  %v1753 = vunpack.c.l.b16 %v1565
  %v1754 = vunpack.c.h.b16 %v1565
  %v1755 = vunpack.c.l.b16 %v1566
  %v1756 = vunpack.c.h.b16 %v1566
  %v1757 = vunpack.c.l.b16 %v1567
  %v1758 = vunpack.c.h.b16 %v1567
  %v1759 = vunpack.c.l.b16 %v1568
  %v1760 = vunpack.c.h.b16 %v1568
  %v1761 = vpack.c.b16 %v1641, %v1633
  %v1762 = vpack.c.b16 %v1642, %v1634
  %v1763 = vpack.c.b16 %v1643, %v1635
  %v1764 = vpack.c.b16 %v1644, %v1636
  %v1765 = vpack.c.b16 %v1645, %v1637
  %v1766 = vpack.c.b16 %v1646, %v1638
  %v1767 = vpack.c.b16 %v1647, %v1639
  %v1768 = vpack.c.b16 %v1648, %v1640
  %v1769 = vpack.c.b16 %v1657, %v1649
  %v1770 = vpack.c.b16 %v1658, %v1650
  %v1771 = vpack.c.b16 %v1659, %v1651
  %v1772 = vpack.c.b16 %v1660, %v1652
  %v1773 = vpack.c.b16 %v1661, %v1653
  %v1774 = vpack.c.b16 %v1662, %v1654
  %v1775 = vpack.c.b16 %v1663, %v1655
  %v1776 = vpack.c.b16 %v1664, %v1656
  %v1777 = vpack.c.b16 %v1673, %v1665
  %v1778 = vpack.c.b16 %v1674, %v1666
  %v1779 = vpack.c.b16 %v1675, %v1667
  %v1780 = vpack.c.b16 %v1676, %v1668
  %v1781 = vpack.c.b16 %v1677, %v1669
  %v1782 = vpack.c.b16 %v1678, %v1670
  %v1783 = vpack.c.b16 %v1679, %v1671
  %v1784 = vpack.c.b16 %v1680, %v1672
  %v1785 = vpack.c.b16 %v1689, %v1681
  %v1786 = vpack.c.b16 %v1690, %v1682
  %v1787 = vpack.c.b16 %v1691, %v1683
  %v1788 = vpack.c.b16 %v1692, %v1684
  %v1789 = vpack.c.b16 %v1693, %v1685
  %v1790 = vpack.c.b16 %v1694, %v1686
  %v1791 = vpack.c.b16 %v1695, %v1687
  %v1792 = vpack.c.b16 %v1696, %v1688
  %v1793 = vpack.c.b16 %v1705, %v1697
  %v1794 = vpack.c.b16 %v1706, %v1698
  %v1795 = vpack.c.b16 %v1707, %v1699
  %v1796 = vpack.c.b16 %v1708, %v1700
  %v1797 = vpack.c.b16 %v1709, %v1701
  %v1798 = vpack.c.b16 %v1710, %v1702
  %v1799 = vpack.c.b16 %v1711, %v1703
  %v1800 = vpack.c.b16 %v1712, %v1704
  %v1801 = vpack.c.b16 %v1721, %v1713
  %v1802 = vpack.c.b16 %v1722, %v1714
  %v1803 = vpack.c.b16 %v1723, %v1715
  %v1804 = vpack.c.b16 %v1724, %v1716
  %v1805 = vpack.c.b16 %v1725, %v1717
  %v1806 = vpack.c.b16 %v1726, %v1718
  %v1807 = vpack.c.b16 %v1727, %v1719
  %v1808 = vpack.c.b16 %v1728, %v1720
  %v1809 = vpack.c.b16 %v1737, %v1729
  %v1810 = vpack.c.b16 %v1738, %v1730
  %v1811 = vpack.c.b16 %v1739, %v1731
  %v1812 = vpack.c.b16 %v1740, %v1732
  %v1813 = vpack.c.b16 %v1741, %v1733
  %v1814 = vpack.c.b16 %v1742, %v1734
  %v1815 = vpack.c.b16 %v1743, %v1735
  %v1816 = vpack.c.b16 %v1744, %v1736
  %v1817 = vpack.c.b16 %v1753, %v1745
  %v1818 = vpack.c.b16 %v1754, %v1746
  %v1819 = vpack.c.b16 %v1755, %v1747
  %v1820 = vpack.c.b16 %v1756, %v1748
  %v1821 = vpack.c.b16 %v1757, %v1749
  %v1822 = vpack.c.b16 %v1758, %v1750
  %v1823 = vpack.c.b16 %v1759, %v1751
  %v1824 = vpack.c.b16 %v1760, %v1752
  %1889 = vmatprep.subr.bf16.mxu0 %v1762
  %1890 = vmatpush1.bf16.msra.mxu0 %v1761
  %1891 = vmatprep.subr.bf16.mxu0 %v1770
  %1892 = vmatpush1.bf16.msra.mxu0 %v1769
  %1893 = vmatprep.subr.bf16.mxu0 %v1778
  %1894 = vmatpush1.bf16.msra.mxu0 %v1777
  %1895 = vmatprep.subr.bf16.mxu0 %v1786
  %1896 = vmatpush1.bf16.msra.mxu0 %v1785
  %1897 = vmatprep.subr.bf16.mxu0 %v1794
  %1898 = vmatpush1.bf16.msra.mxu0 %v1793
  %1899 = vmatprep.subr.bf16.mxu0 %v1802
  %1900 = vmatpush1.bf16.msra.mxu0 %v1801
  %1901 = vmatprep.subr.bf16.mxu0 %v1810
  %1902 = vmatpush1.bf16.msra.mxu0 %v1809
  %1903 = vmatprep.subr.bf16.mxu0 %v1818
  %1904 = vmatpush1.bf16.msra.mxu0 %v1817
  %1905 = vmatprep.subr.bf16.mxu0 0
  %1906 = vmatpush1.bf16.msra.mxu0 0
  %1907 = vmatprep.subr.bf16.mxu0 0
  %1908 = vmatpush1.bf16.msra.mxu0 0
  %1909 = vmatprep.subr.bf16.mxu0 0
  %1910 = vmatpush1.bf16.msra.mxu0 0
  %1911 = vmatprep.subr.bf16.mxu0 0
  %1912 = vmatpush1.bf16.msra.mxu0 0
  %1913 = vmatprep.subr.bf16.mxu0 0
  %1914 = vmatpush1.bf16.msra.mxu0 0
  %1915 = vmatprep.subr.bf16.mxu0 0
  %1916 = vmatpush1.bf16.msra.mxu0 0
  %1917 = vmatprep.subr.bf16.mxu0 0
  %1918 = vmatpush1.bf16.msra.mxu0 0
  %1919 = vmatprep.subr.bf16.mxu0 0
  %1920 = vmatpush1.bf16.msra.mxu0 0
  %1921 = vmatprep.mubr.bf16.mxu0 0
  %1922 = vmatmul.mubr.bf16.gmra.mrb[0].mxu0 %v1504
  %v1923 = vpop.f32.mrb[0].mxu0
  %v1924 = vadd.f32 0.0, %v1923
  %v1925 = vpop.f32.mrb[0].mxu0
  %v1926 = vadd.f32 0.0, %v1925
  %v1927 = vpop.f32.mrb[0].mxu0
  %v1928 = vadd.f32 0.0, %v1927
  %v1929 = vpop.f32.mrb[0].mxu0
  %v1930 = vadd.f32 0.0, %v1929
  %1931 = vdwg.mxu0
  %1932 = vmatprep.subr.bf16.mxu0 %v1764
  %1933 = vmatpush1.bf16.msra.mxu0 %v1763
  %1934 = vmatprep.subr.bf16.mxu0 %v1772
  %1935 = vmatpush1.bf16.msra.mxu0 %v1771
  %1936 = vmatprep.subr.bf16.mxu0 %v1780
  %1937 = vmatpush1.bf16.msra.mxu0 %v1779
  %1938 = vmatprep.subr.bf16.mxu0 %v1788
  %1939 = vmatpush1.bf16.msra.mxu0 %v1787
  %1940 = vmatprep.subr.bf16.mxu0 %v1796
  %1941 = vmatpush1.bf16.msra.mxu0 %v1795
  %1942 = vmatprep.subr.bf16.mxu0 %v1804
  %1943 = vmatpush1.bf16.msra.mxu0 %v1803
  %1944 = vmatprep.subr.bf16.mxu0 %v1812
  %1945 = vmatpush1.bf16.msra.mxu0 %v1811
  %1946 = vmatprep.subr.bf16.mxu0 %v1820
  %1947 = vmatpush1.bf16.msra.mxu0 %v1819
  %1948 = vmatprep.subr.bf16.mxu0 0
  %1949 = vmatpush1.bf16.msra.mxu0 0
  %1950 = vmatprep.subr.bf16.mxu0 0
  %1951 = vmatpush1.bf16.msra.mxu0 0
  %1952 = vmatprep.subr.bf16.mxu0 0
  %1953 = vmatpush1.bf16.msra.mxu0 0
  %1954 = vmatprep.subr.bf16.mxu0 0
  %1955 = vmatpush1.bf16.msra.mxu0 0
  %1956 = vmatprep.subr.bf16.mxu0 0
  %1957 = vmatpush1.bf16.msra.mxu0 0
  %1958 = vmatprep.subr.bf16.mxu0 0
  %1959 = vmatpush1.bf16.msra.mxu0 0
  %1960 = vmatprep.subr.bf16.mxu0 0
  %1961 = vmatpush1.bf16.msra.mxu0 0
  %1962 = vmatprep.subr.bf16.mxu0 0
  %1963 = vmatpush1.bf16.msra.mxu0 0
  %1964 = vmatprep.mubr.bf16.mxu0 0
  %1965 = vmatmul.mubr.bf16.gmra.mrb[0].mxu0 %v1504
  %v1966 = vpop.f32.mrb[0].mxu0
  %v1967 = vadd.f32 0.0, %v1966
  %v1968 = vpop.f32.mrb[0].mxu0
  %v1969 = vadd.f32 0.0, %v1968
  %v1970 = vpop.f32.mrb[0].mxu0
  %v1971 = vadd.f32 0.0, %v1970
  %v1972 = vpop.f32.mrb[0].mxu0
  %v1973 = vadd.f32 0.0, %v1972
  %1974 = vdwg.mxu0
  %1975 = vmatprep.subr.bf16.mxu0 %v1766
  %1976 = vmatpush1.bf16.msra.mxu0 %v1765
  %1977 = vmatprep.subr.bf16.mxu0 %v1774
  %1978 = vmatpush1.bf16.msra.mxu0 %v1773
  %1979 = vmatprep.subr.bf16.mxu0 %v1782
  %1980 = vmatpush1.bf16.msra.mxu0 %v1781
  %1981 = vmatprep.subr.bf16.mxu0 %v1790
  %1982 = vmatpush1.bf16.msra.mxu0 %v1789
  %1983 = vmatprep.subr.bf16.mxu0 %v1798
  %1984 = vmatpush1.bf16.msra.mxu0 %v1797
  %1985 = vmatprep.subr.bf16.mxu0 %v1806
  %1986 = vmatpush1.bf16.msra.mxu0 %v1805
  %1987 = vmatprep.subr.bf16.mxu0 %v1814
  %1988 = vmatpush1.bf16.msra.mxu0 %v1813
  %1989 = vmatprep.subr.bf16.mxu0 %v1822
  %1990 = vmatpush1.bf16.msra.mxu0 %v1821
  %1991 = vmatprep.subr.bf16.mxu0 0
  %1992 = vmatpush1.bf16.msra.mxu0 0
  %1993 = vmatprep.subr.bf16.mxu0 0
  %1994 = vmatpush1.bf16.msra.mxu0 0
  %1995 = vmatprep.subr.bf16.mxu0 0
  %1996 = vmatpush1.bf16.msra.mxu0 0
  %1997 = vmatprep.subr.bf16.mxu0 0
  %1998 = vmatpush1.bf16.msra.mxu0 0
  %1999 = vmatprep.subr.bf16.mxu0 0
  %2000 = vmatpush1.bf16.msra.mxu0 0
  %2001 = vmatprep.subr.bf16.mxu0 0
  %2002 = vmatpush1.bf16.msra.mxu0 0
  %2003 = vmatprep.subr.bf16.mxu0 0
  %2004 = vmatpush1.bf16.msra.mxu0 0
  %2005 = vmatprep.subr.bf16.mxu0 0
  %2006 = vmatpush1.bf16.msra.mxu0 0
  %2007 = vmatprep.mubr.bf16.mxu0 0
  %2008 = vmatmul.mubr.bf16.gmra.mrb[0].mxu0 %v1504
  %v2009 = vpop.f32.mrb[0].mxu0
  %v2010 = vadd.f32 0.0, %v2009
  %v2011 = vpop.f32.mrb[0].mxu0
  %v2012 = vadd.f32 0.0, %v2011
  %v2013 = vpop.f32.mrb[0].mxu0
  %v2014 = vadd.f32 0.0, %v2013
  %v2015 = vpop.f32.mrb[0].mxu0
  %v2016 = vadd.f32 0.0, %v2015
  %2017 = vdwg.mxu0
  %2018 = vmatprep.subr.bf16.mxu0 %v1768
  %2019 = vmatpush1.bf16.msra.mxu0 %v1767
  %2020 = vmatprep.subr.bf16.mxu0 %v1776
  %2021 = vmatpush1.bf16.msra.mxu0 %v1775
  %2022 = vmatprep.subr.bf16.mxu0 %v1784
  %2023 = vmatpush1.bf16.msra.mxu0 %v1783
  %2024 = vmatprep.subr.bf16.mxu0 %v1792
  %2025 = vmatpush1.bf16.msra.mxu0 %v1791
  %2026 = vmatprep.subr.bf16.mxu0 %v1800
  %2027 = vmatpush1.bf16.msra.mxu0 %v1799
  %2028 = vmatprep.subr.bf16.mxu0 %v1808
  %2029 = vmatpush1.bf16.msra.mxu0 %v1807
  %2030 = vmatprep.subr.bf16.mxu0 %v1816
  %2031 = vmatpush1.bf16.msra.mxu0 %v1815
  %2032 = vmatprep.subr.bf16.mxu0 %v1824
  %2033 = vmatpush1.bf16.msra.mxu0 %v1823
  %2034 = vmatprep.subr.bf16.mxu0 0
  %2035 = vmatpush1.bf16.msra.mxu0 0
  %2036 = vmatprep.subr.bf16.mxu0 0
  %2037 = vmatpush1.bf16.msra.mxu0 0
  %2038 = vmatprep.subr.bf16.mxu0 0
  %2039 = vmatpush1.bf16.msra.mxu0 0
  %2040 = vmatprep.subr.bf16.mxu0 0
  %2041 = vmatpush1.bf16.msra.mxu0 0
  %2042 = vmatprep.subr.bf16.mxu0 0
  %2043 = vmatpush1.bf16.msra.mxu0 0
  %2044 = vmatprep.subr.bf16.mxu0 0
  %2045 = vmatpush1.bf16.msra.mxu0 0
  %2046 = vmatprep.subr.bf16.mxu0 0
  %2047 = vmatpush1.bf16.msra.mxu0 0
  %2048 = vmatprep.subr.bf16.mxu0 0
  %2049 = vmatpush1.bf16.msra.mxu0 0
  %2050 = vmatprep.mubr.bf16.mxu0 0
  %2051 = vmatmul.mubr.bf16.gmra.mrb[0].mxu0 %v1504
  %v2052 = vpop.f32.mrb[0].mxu0
  %v2053 = vadd.f32 0.0, %v2052
  %v2054 = vpop.f32.mrb[0].mxu0
  %v2055 = vadd.f32 0.0, %v2054
  %v2056 = vpop.f32.mrb[0].mxu0
  %v2057 = vadd.f32 0.0, %v2056
  %v2058 = vpop.f32.mrb[0].mxu0
  %v2059 = vadd.f32 0.0, %v2058
  %2060 = vdwg.mxu0
  %v2061 = vld [vmem:[%s6] sm:$0xff]
  %v2062 = vld [vmem:[%s6 + $0x8] sm:$0xff]
  %s2063 = scalar_lea.vmem %s6, 16
  %v2064 = vld [vmem:[%s2063] sm:$0xff]
  %v2065 = vld [vmem:[%s2063 + $0x8] sm:$0xff]
  %vm2066 = vcmask 130048
  %v2068 = vsel %vm2066, %v2064, 0
  %v2071 = vsel %vm2066, %v2065, 0
  %2073 = vmatprep.subr.mxu0 %v1969
  %2074 = vmatpush1.msra.mxu0 %v1967
  %2075 = vmatprep.subr.mxu0 %v1973
  %2076 = vmatpush1.msra.mxu0 %v1971
  %2077 = vmatprep.subr.mxu0 0.0
  %2078 = vmatpush1.msra.mxu0 0.0
  %2079 = vmatprep.subr.mxu0 0.0
  %2080 = vmatpush1.msra.mxu0 0.0
  %2081 = vmatprep.subr.mxu0 0.0
  %2082 = vmatpush1.msra.mxu0 0.0
  %2083 = vmatprep.subr.mxu0 0.0
  %2084 = vmatpush1.msra.mxu0 0.0
  %2085 = vmatprep.subr.mxu0 0.0
  %2086 = vmatpush1.msra.mxu0 0.0
  %2087 = vmatprep.subr.mxu0 0.0
  %2088 = vmatpush1.msra.mxu0 0.0
  %2089 = vmatprep.subr.mxu0 0.0
  %2090 = vmatpush1.msra.mxu0 0.0
  %2091 = vmatprep.subr.mxu0 0.0
  %2092 = vmatpush1.msra.mxu0 0.0
  %2093 = vmatprep.subr.mxu0 0.0
  %2094 = vmatpush1.msra.mxu0 0.0
  %2095 = vmatprep.subr.mxu0 0.0
  %2096 = vmatpush1.msra.mxu0 0.0
  %2097 = vmatprep.subr.mxu0 0.0
  %2098 = vmatpush1.msra.mxu0 0.0
  %2099 = vmatprep.subr.mxu0 0.0
  %2100 = vmatpush1.msra.mxu0 0.0
  %2101 = vmatprep.subr.mxu0 0.0
  %2102 = vmatpush1.msra.mxu0 0.0
  %2103 = vmatprep.subr.mxu0 0.0
  %2104 = vmatpush1.msra.mxu0 0.0
  %2105 = vmatprep.subr.mxu0 0.0
  %2106 = vmatpush1.msra.mxu0 0.0
  %2107 = vmatprep.subr.mxu0 0.0
  %2108 = vmatpush1.msra.mxu0 0.0
  %2109 = vmatprep.subr.mxu0 0.0
  %2110 = vmatpush1.msra.mxu0 0.0
  %2111 = vmatprep.subr.mxu0 0.0
  %2112 = vmatpush1.msra.mxu0 0.0
  %2113 = vmatprep.subr.mxu0 0.0
  %2114 = vmatpush1.msra.mxu0 0.0
  %2115 = vmatprep.subr.mxu0 0.0
  %2116 = vmatpush1.msra.mxu0 0.0
  %2117 = vmatprep.subr.mxu0 0.0
  %2118 = vmatpush1.msra.mxu0 0.0
  %2119 = vmatprep.subr.mxu0 0.0
  %2120 = vmatpush1.msra.mxu0 0.0
  %2121 = vmatprep.subr.mxu0 0.0
  %2122 = vmatpush1.msra.mxu0 0.0
  %2123 = vmatprep.subr.mxu0 0.0
  %2124 = vmatpush1.msra.mxu0 0.0
  %2125 = vmatprep.subr.mxu0 0.0
  %2126 = vmatpush1.msra.mxu0 0.0
  %2127 = vmatprep.subr.mxu0 0.0
  %2128 = vmatpush1.msra.mxu0 0.0
  %2129 = vmatprep.subr.mxu0 0.0
  %2130 = vmatpush1.msra.mxu0 0.0
  %2131 = vmatprep.subr.mxu0 0.0
  %2132 = vmatpush1.msra.mxu0 0.0
  %2133 = vmatprep.subr.mxu0 0.0
  %2134 = vmatpush1.msra.mxu0 0.0
  %2135 = vmatprep.subr.mxu0 0.0
  %2136 = vmatpush1.msra.mxu0 0.0
  %2137 = vmatprep.mubr.f32.mxu0 0.0
  %2138 = vmatmul.mubr.f32.gmra.mrb[0].mxu0 %v2068
  %v2139 = vpop.f32.mrb[0].mxu0
  %v2140 = vadd.f32 0.0, %v2139
  %v2141 = vpop.f32.mrb[0].mxu0
  %v2142 = vadd.f32 0.0, %v2141
  %2143 = vmatprep.mubr.f32.mxu0 0.0
  %2144 = vmatmul.mubr.f32.gmra.mrb[0].mxu0 %v2071
  %v2145 = vpop.f32.mrb[0].mxu0
  %v2146 = vadd.f32 0.0, %v2145
  %v2147 = vpop.f32.mrb[0].mxu0
  %v2148 = vadd.f32 0.0, %v2147
  %2149 = vdwg.mxu0
  %v2151 = vsel %vm2066, %v2061, 0
  %v2154 = vsel %vm2066, %v2062, 0
  %2156 = vmatprep.subr.mxu0 %v1926
  %2157 = vmatpush1.msra.mxu0 %v1924
  %2158 = vmatprep.subr.mxu0 %v1930
  %2159 = vmatpush1.msra.mxu0 %v1928
  %2160 = vmatprep.subr.mxu0 0.0
  %2161 = vmatpush1.msra.mxu0 0.0
  %2162 = vmatprep.subr.mxu0 0.0
  %2163 = vmatpush1.msra.mxu0 0.0
  %2164 = vmatprep.subr.mxu0 0.0
  %2165 = vmatpush1.msra.mxu0 0.0
  %2166 = vmatprep.subr.mxu0 0.0
  %2167 = vmatpush1.msra.mxu0 0.0
  %2168 = vmatprep.subr.mxu0 0.0
  %2169 = vmatpush1.msra.mxu0 0.0
  %2170 = vmatprep.subr.mxu0 0.0
  %2171 = vmatpush1.msra.mxu0 0.0
  %2172 = vmatprep.subr.mxu0 0.0
  %2173 = vmatpush1.msra.mxu0 0.0
  %2174 = vmatprep.subr.mxu0 0.0
  %2175 = vmatpush1.msra.mxu0 0.0
  %2176 = vmatprep.subr.mxu0 0.0
  %2177 = vmatpush1.msra.mxu0 0.0
  %2178 = vmatprep.subr.mxu0 0.0
  %2179 = vmatpush1.msra.mxu0 0.0
  %2180 = vmatprep.subr.mxu0 0.0
  %2181 = vmatpush1.msra.mxu0 0.0
  %2182 = vmatprep.subr.mxu0 0.0
  %2183 = vmatpush1.msra.mxu0 0.0
  %2184 = vmatprep.subr.mxu0 0.0
  %2185 = vmatpush1.msra.mxu0 0.0
  %2186 = vmatprep.subr.mxu0 0.0
  %2187 = vmatpush1.msra.mxu0 0.0
  %2188 = vmatprep.subr.mxu0 0.0
  %2189 = vmatpush1.msra.mxu0 0.0
  %2190 = vmatprep.subr.mxu0 0.0
  %2191 = vmatpush1.msra.mxu0 0.0
  %2192 = vmatprep.subr.mxu0 0.0
  %2193 = vmatpush1.msra.mxu0 0.0
  %2194 = vmatprep.subr.mxu0 0.0
  %2195 = vmatpush1.msra.mxu0 0.0
  %2196 = vmatprep.subr.mxu0 0.0
  %2197 = vmatpush1.msra.mxu0 0.0
  %2198 = vmatprep.subr.mxu0 0.0
  %2199 = vmatpush1.msra.mxu0 0.0
  %2200 = vmatprep.subr.mxu0 0.0
  %2201 = vmatpush1.msra.mxu0 0.0
  %2202 = vmatprep.subr.mxu0 0.0
  %2203 = vmatpush1.msra.mxu0 0.0
  %2204 = vmatprep.subr.mxu0 0.0
  %2205 = vmatpush1.msra.mxu0 0.0
  %2206 = vmatprep.subr.mxu0 0.0
  %2207 = vmatpush1.msra.mxu0 0.0
  %2208 = vmatprep.subr.mxu0 0.0
  %2209 = vmatpush1.msra.mxu0 0.0
  %2210 = vmatprep.subr.mxu0 0.0
  %2211 = vmatpush1.msra.mxu0 0.0
  %2212 = vmatprep.subr.mxu0 0.0
  %2213 = vmatpush1.msra.mxu0 0.0
  %2214 = vmatprep.subr.mxu0 0.0
  %2215 = vmatpush1.msra.mxu0 0.0
  %2216 = vmatprep.subr.mxu0 0.0
  %2217 = vmatpush1.msra.mxu0 0.0
  %2218 = vmatprep.subr.mxu0 0.0
  %2219 = vmatpush1.msra.mxu0 0.0
  %2220 = vmatprep.mubr.f32.mxu0 0.0
  %2221 = vmatmul.mubr.f32.gmra.mrb[0].mxu0 %v2151
  %v2222 = vpop.f32.mrb[0].mxu0
  %v2223 = vadd.f32 %v2140, %v2222
  %v2224 = vpop.f32.mrb[0].mxu0
  %v2225 = vadd.f32 %v2142, %v2224
  %2226 = vmatprep.mubr.f32.mxu0 0.0
  %2227 = vmatmul.mubr.f32.gmra.mrb[0].mxu0 %v2154
  %v2228 = vpop.f32.mrb[0].mxu0
  %v2229 = vadd.f32 %v2146, %v2228
  %v2230 = vpop.f32.mrb[0].mxu0
  %v2231 = vadd.f32 %v2148, %v2230
  %2232 = vdwg.mxu0
  %s2233 = scalar_lea.vmem %s6, 32
  %v2234 = vld [vmem:[%s2233] sm:$0xff]
  %v2235 = vld [vmem:[%s2233 + $0x8] sm:$0xff]
  %v2237 = vsel %vm2066, %v2234, 0
  %v2240 = vsel %vm2066, %v2235, 0
  %2242 = vmatprep.subr.mxu0 %v2012
  %2243 = vmatpush1.msra.mxu0 %v2010
  %2244 = vmatprep.subr.mxu0 %v2016
  %2245 = vmatpush1.msra.mxu0 %v2014
  %2246 = vmatprep.subr.mxu0 0.0
  %2247 = vmatpush1.msra.mxu0 0.0
  %2248 = vmatprep.subr.mxu0 0.0
  %2249 = vmatpush1.msra.mxu0 0.0
  %2250 = vmatprep.subr.mxu0 0.0
  %2251 = vmatpush1.msra.mxu0 0.0
  %2252 = vmatprep.subr.mxu0 0.0
  %2253 = vmatpush1.msra.mxu0 0.0
  %2254 = vmatprep.subr.mxu0 0.0
  %2255 = vmatpush1.msra.mxu0 0.0
  %2256 = vmatprep.subr.mxu0 0.0
  %2257 = vmatpush1.msra.mxu0 0.0
  %2258 = vmatprep.subr.mxu0 0.0
  %2259 = vmatpush1.msra.mxu0 0.0
  %2260 = vmatprep.subr.mxu0 0.0
  %2261 = vmatpush1.msra.mxu0 0.0
  %2262 = vmatprep.subr.mxu0 0.0
  %2263 = vmatpush1.msra.mxu0 0.0
  %2264 = vmatprep.subr.mxu0 0.0
  %2265 = vmatpush1.msra.mxu0 0.0
  %2266 = vmatprep.subr.mxu0 0.0
  %2267 = vmatpush1.msra.mxu0 0.0
  %2268 = vmatprep.subr.mxu0 0.0
  %2269 = vmatpush1.msra.mxu0 0.0
  %2270 = vmatprep.subr.mxu0 0.0
  %2271 = vmatpush1.msra.mxu0 0.0
  %2272 = vmatprep.subr.mxu0 0.0
  %2273 = vmatpush1.msra.mxu0 0.0
  %2274 = vmatprep.subr.mxu0 0.0
  %2275 = vmatpush1.msra.mxu0 0.0
  %2276 = vmatprep.subr.mxu0 0.0
  %2277 = vmatpush1.msra.mxu0 0.0
  %2278 = vmatprep.subr.mxu0 0.0
  %2279 = vmatpush1.msra.mxu0 0.0
  %2280 = vmatprep.subr.mxu0 0.0
  %2281 = vmatpush1.msra.mxu0 0.0
  %2282 = vmatprep.subr.mxu0 0.0
  %2283 = vmatpush1.msra.mxu0 0.0
  %2284 = vmatprep.subr.mxu0 0.0
  %2285 = vmatpush1.msra.mxu0 0.0
  %2286 = vmatprep.subr.mxu0 0.0
  %2287 = vmatpush1.msra.mxu0 0.0
  %2288 = vmatprep.subr.mxu0 0.0
  %2289 = vmatpush1.msra.mxu0 0.0
  %2290 = vmatprep.subr.mxu0 0.0
  %2291 = vmatpush1.msra.mxu0 0.0
  %2292 = vmatprep.subr.mxu0 0.0
  %2293 = vmatpush1.msra.mxu0 0.0
  %2294 = vmatprep.subr.mxu0 0.0
  %2295 = vmatpush1.msra.mxu0 0.0
  %2296 = vmatprep.subr.mxu0 0.0
  %2297 = vmatpush1.msra.mxu0 0.0
  %2298 = vmatprep.subr.mxu0 0.0
  %2299 = vmatpush1.msra.mxu0 0.0
  %2300 = vmatprep.subr.mxu0 0.0
  %2301 = vmatpush1.msra.mxu0 0.0
  %2302 = vmatprep.subr.mxu0 0.0
  %2303 = vmatpush1.msra.mxu0 0.0
  %2304 = vmatprep.subr.mxu0 0.0
  %2305 = vmatpush1.msra.mxu0 0.0
  %2306 = vmatprep.mubr.f32.mxu0 0.0
  %2307 = vmatmul.mubr.f32.gmra.mrb[0].mxu0 %v2237
  %v2308 = vpop.f32.mrb[0].mxu0
  %v2309 = vadd.f32 0.0, %v2308
  %v2310 = vpop.f32.mrb[0].mxu0
  %v2311 = vadd.f32 0.0, %v2310
  %2312 = vmatprep.mubr.f32.mxu0 0.0
  %2313 = vmatmul.mubr.f32.gmra.mrb[0].mxu0 %v2240
  %v2314 = vpop.f32.mrb[0].mxu0
  %v2315 = vadd.f32 0.0, %v2314
  %v2316 = vpop.f32.mrb[0].mxu0
  %v2317 = vadd.f32 0.0, %v2316
  %2318 = vdwg.mxu0
  %v2319 = vadd.f32 %v2223, %v2309
  %v2320 = vadd.f32 %v2225, %v2311
  %v2321 = vadd.f32 %v2229, %v2315
  %v2322 = vadd.f32 %v2231, %v2317
  %s2323 = scalar_lea.vmem %s6, 48
  %v2324 = vld [vmem:[%s2323] sm:$0xff]
  %v2325 = vld [vmem:[%s2323 + $0x8] sm:$0xff]
  %v2327 = vsel %vm2066, %v2324, 0
  %v2330 = vsel %vm2066, %v2325, 0
  %2332 = vmatprep.subr.mxu0 %v2055
  %2333 = vmatpush1.msra.mxu0 %v2053
  %2334 = vmatprep.subr.mxu0 %v2059
  %2335 = vmatpush1.msra.mxu0 %v2057
  %2336 = vmatprep.subr.mxu0 0.0
  %2337 = vmatpush1.msra.mxu0 0.0
  %2338 = vmatprep.subr.mxu0 0.0
  %2339 = vmatpush1.msra.mxu0 0.0
  %2340 = vmatprep.subr.mxu0 0.0
  %2341 = vmatpush1.msra.mxu0 0.0
  %2342 = vmatprep.subr.mxu0 0.0
  %2343 = vmatpush1.msra.mxu0 0.0
  %2344 = vmatprep.subr.mxu0 0.0
  %2345 = vmatpush1.msra.mxu0 0.0
  %2346 = vmatprep.subr.mxu0 0.0
  %2347 = vmatpush1.msra.mxu0 0.0
  %2348 = vmatprep.subr.mxu0 0.0
  %2349 = vmatpush1.msra.mxu0 0.0
  %2350 = vmatprep.subr.mxu0 0.0
  %2351 = vmatpush1.msra.mxu0 0.0
  %2352 = vmatprep.subr.mxu0 0.0
  %2353 = vmatpush1.msra.mxu0 0.0
  %2354 = vmatprep.subr.mxu0 0.0
  %2355 = vmatpush1.msra.mxu0 0.0
  %2356 = vmatprep.subr.mxu0 0.0
  %2357 = vmatpush1.msra.mxu0 0.0
  %2358 = vmatprep.subr.mxu0 0.0
  %2359 = vmatpush1.msra.mxu0 0.0
  %2360 = vmatprep.subr.mxu0 0.0
  %2361 = vmatpush1.msra.mxu0 0.0
  %2362 = vmatprep.subr.mxu0 0.0
  %2363 = vmatpush1.msra.mxu0 0.0
  %2364 = vmatprep.subr.mxu0 0.0
  %2365 = vmatpush1.msra.mxu0 0.0
  %2366 = vmatprep.subr.mxu0 0.0
  %2367 = vmatpush1.msra.mxu0 0.0
  %2368 = vmatprep.subr.mxu0 0.0
  %2369 = vmatpush1.msra.mxu0 0.0
  %2370 = vmatprep.subr.mxu0 0.0
  %2371 = vmatpush1.msra.mxu0 0.0
  %2372 = vmatprep.subr.mxu0 0.0
  %2373 = vmatpush1.msra.mxu0 0.0
  %2374 = vmatprep.subr.mxu0 0.0
  %2375 = vmatpush1.msra.mxu0 0.0
  %2376 = vmatprep.subr.mxu0 0.0
  %2377 = vmatpush1.msra.mxu0 0.0
  %2378 = vmatprep.subr.mxu0 0.0
  %2379 = vmatpush1.msra.mxu0 0.0
  %2380 = vmatprep.subr.mxu0 0.0
  %2381 = vmatpush1.msra.mxu0 0.0
  %2382 = vmatprep.subr.mxu0 0.0
  %2383 = vmatpush1.msra.mxu0 0.0
  %2384 = vmatprep.subr.mxu0 0.0
  %2385 = vmatpush1.msra.mxu0 0.0
  %2386 = vmatprep.subr.mxu0 0.0
  %2387 = vmatpush1.msra.mxu0 0.0
  %2388 = vmatprep.subr.mxu0 0.0
  %2389 = vmatpush1.msra.mxu0 0.0
  %2390 = vmatprep.subr.mxu0 0.0
  %2391 = vmatpush1.msra.mxu0 0.0
  %2392 = vmatprep.subr.mxu0 0.0
  %2393 = vmatpush1.msra.mxu0 0.0
  %2394 = vmatprep.subr.mxu0 0.0
  %2395 = vmatpush1.msra.mxu0 0.0
  %2396 = vmatprep.mubr.f32.mxu0 0.0
  %2397 = vmatmul.mubr.f32.gmra.mrb[0].mxu0 %v2327
  %v2398 = vpop.f32.mrb[0].mxu0
  %v2399 = vadd.f32 0.0, %v2398
  %v2400 = vpop.f32.mrb[0].mxu0
  %v2401 = vadd.f32 0.0, %v2400
  %2402 = vmatprep.mubr.f32.mxu0 0.0
  %2403 = vmatmul.mubr.f32.gmra.mrb[0].mxu0 %v2330
  %v2404 = vpop.f32.mrb[0].mxu0
  %v2405 = vadd.f32 0.0, %v2404
  %v2406 = vpop.f32.mrb[0].mxu0
  %v2407 = vadd.f32 0.0, %v2406
  %2408 = vdwg.mxu0
  %v2409 = vadd.f32 %v2319, %v2399
  %v2410 = vadd.f32 %v2320, %v2401
  %v2411 = vadd.f32 %v2321, %v2405
  %v2412 = vadd.f32 %v2322, %v2407
  %s2413 = scalar_lea.vmem %s1, 4
  %v2414 = vld [vmem:[%s2413] sm:$0x3]
  %v2416 = vlaneseq
  %v2417 = vshrl.u32 %v2416, 7
  %v2418 = vsub.s32 0, %v2417
  %v2419 = vrot.slane %v2414, %v2418
  %v2420 = vlaneseq
  %v2421 = vshrl.u32 %v2420, 7
  %v2422 = vsub.s32 1, %v2421
  %v2423 = vrot.slane %v2414, %v2422
  %v2426 = vadd.f32 %v2409, %v2419
  %v2427 = vadd.f32 %v2410, %v2423
  %v2428 = vadd.f32 %v2411, %v2419
  %v2429 = vadd.f32 %v2412, %v2423
  %v2430 = vmul.f32 %v2426, 0.2
  %v2431 = vmul.f32 %v2427, 0.2
  %v2432 = vmul.f32 %v2428, 0.2
  %v2433 = vmul.f32 %v2429, 0.2
  %v2434 = vmax.f32 %v2426, %v2430
  %v2435 = vmax.f32 %v2427, %v2431
  %v2436 = vmax.f32 %v2428, %v2432
  %v2437 = vmax.f32 %v2429, %v2433
  %v2438 = vpack.c.bf16 %v2436, %v2434
  %v2439 = vpack.c.bf16 %v2437, %v2435
  %v2440 = vld [vmem:[%s9] sm:$0xff]
  %v2441 = vld [vmem:[%s9 + $0x8] sm:$0xff]
  %v2442 = vld [vmem:[%s9 + $0x10] sm:$0xff]
  %v2443 = vld [vmem:[%s9 + $0x18] sm:$0xff]
  %v2444 = vld [vmem:[%s9 + $0x20] sm:$0xff]
  %v2445 = vld [vmem:[%s9 + $0x28] sm:$0xff]
  %v2446 = vld [vmem:[%s9 + $0x30] sm:$0xff]
  %v2447 = vld [vmem:[%s9 + $0x38] sm:$0xff]
  %v2448 = vld [vmem:[%s9 + $0x40] sm:$0xff]
  %v2449 = vld [vmem:[%s9 + $0x48] sm:$0xff]
  %v2450 = vld [vmem:[%s9 + $0x50] sm:$0xff]
  %v2451 = vld [vmem:[%s9 + $0x58] sm:$0xff]
  %v2452 = vld [vmem:[%s9 + $0x60] sm:$0xff]
  %v2453 = vld [vmem:[%s9 + $0x68] sm:$0xff]
  %v2454 = vld [vmem:[%s9 + $0x70] sm:$0xff]
  %v2455 = vld [vmem:[%s9 + $0x78] sm:$0xff]
  %v2456 = vld [vmem:[%s9 + $0x80] sm:$0xff]
  %v2457 = vld [vmem:[%s9 + $0x88] sm:$0xff]
  %v2458 = vld [vmem:[%s9 + $0x90] sm:$0xff]
  %v2459 = vld [vmem:[%s9 + $0x98] sm:$0xff]
  %v2460 = vld [vmem:[%s9 + $0xa0] sm:$0xff]
  %v2461 = vld [vmem:[%s9 + $0xa8] sm:$0xff]
  %v2462 = vld [vmem:[%s9 + $0xb0] sm:$0xff]
  %v2463 = vld [vmem:[%s9 + $0xb8] sm:$0xff]
  %v2464 = vld [vmem:[%s9 + $0xc0] sm:$0xff]
  %v2465 = vld [vmem:[%s9 + $0xc8] sm:$0xff]
  %v2466 = vld [vmem:[%s9 + $0xd0] sm:$0xff]
  %v2467 = vld [vmem:[%s9 + $0xd8] sm:$0xff]
  %v2468 = vld [vmem:[%s9 + $0xe0] sm:$0xff]
  %v2469 = vld [vmem:[%s9 + $0xe8] sm:$0xff]
  %v2470 = vld [vmem:[%s9 + $0xf0] sm:$0xff]
  %v2471 = vld [vmem:[%s9 + $0xf8] sm:$0xff]
  %v2472 = vld [vmem:[%s9 + $0x100] sm:$0xff]
  %v2473 = vld [vmem:[%s9 + $0x108] sm:$0xff]
  %v2474 = vld [vmem:[%s9 + $0x110] sm:$0xff]
  %v2475 = vld [vmem:[%s9 + $0x118] sm:$0xff]
  %v2476 = vld [vmem:[%s9 + $0x120] sm:$0xff]
  %v2477 = vld [vmem:[%s9 + $0x128] sm:$0xff]
  %v2478 = vld [vmem:[%s9 + $0x130] sm:$0xff]
  %v2479 = vld [vmem:[%s9 + $0x138] sm:$0xff]
  %v2480 = vld [vmem:[%s9 + $0x140] sm:$0xff]
  %v2481 = vld [vmem:[%s9 + $0x148] sm:$0xff]
  %v2482 = vld [vmem:[%s9 + $0x150] sm:$0xff]
  %v2483 = vld [vmem:[%s9 + $0x158] sm:$0xff]
  %v2484 = vld [vmem:[%s9 + $0x160] sm:$0xff]
  %v2485 = vld [vmem:[%s9 + $0x168] sm:$0xff]
  %v2486 = vld [vmem:[%s9 + $0x170] sm:$0xff]
  %v2487 = vld [vmem:[%s9 + $0x178] sm:$0xff]
  %v2488 = vld [vmem:[%s9 + $0x180] sm:$0xff]
  %v2489 = vld [vmem:[%s9 + $0x188] sm:$0xff]
  %v2490 = vld [vmem:[%s9 + $0x190] sm:$0xff]
  %v2491 = vld [vmem:[%s9 + $0x198] sm:$0xff]
  %v2492 = vld [vmem:[%s9 + $0x1a0] sm:$0xff]
  %v2493 = vld [vmem:[%s9 + $0x1a8] sm:$0xff]
  %v2494 = vld [vmem:[%s9 + $0x1b0] sm:$0xff]
  %v2495 = vld [vmem:[%s9 + $0x1b8] sm:$0xff]
  %v2496 = vld [vmem:[%s9 + $0x1c0] sm:$0xff]
  %v2497 = vld [vmem:[%s9 + $0x1c8] sm:$0xff]
  %v2498 = vld [vmem:[%s9 + $0x1d0] sm:$0xff]
  %v2499 = vld [vmem:[%s9 + $0x1d8] sm:$0xff]
  %v2500 = vld [vmem:[%s9 + $0x1e0] sm:$0xff]
  %v2501 = vld [vmem:[%s9 + $0x1e8] sm:$0xff]
  %v2502 = vld [vmem:[%s9 + $0x1f0] sm:$0xff]
  %v2503 = vld [vmem:[%s9 + $0x1f8] sm:$0xff]
  %v2568 = vunpack.c.l.b16 %v2440
  %v2569 = vunpack.c.h.b16 %v2440
  %v2570 = vunpack.c.l.b16 %v2441
  %v2571 = vunpack.c.h.b16 %v2441
  %v2572 = vunpack.c.l.b16 %v2442
  %v2573 = vunpack.c.h.b16 %v2442
  %v2574 = vunpack.c.l.b16 %v2443
  %v2575 = vunpack.c.h.b16 %v2443
  %v2576 = vunpack.c.l.b16 %v2444
  %v2577 = vunpack.c.h.b16 %v2444
  %v2578 = vunpack.c.l.b16 %v2445
  %v2579 = vunpack.c.h.b16 %v2445
  %v2580 = vunpack.c.l.b16 %v2446
  %v2581 = vunpack.c.h.b16 %v2446
  %v2582 = vunpack.c.l.b16 %v2447
  %v2583 = vunpack.c.h.b16 %v2447
  %v2584 = vunpack.c.l.b16 %v2448
  %v2585 = vunpack.c.h.b16 %v2448
  %v2586 = vunpack.c.l.b16 %v2449
  %v2587 = vunpack.c.h.b16 %v2449
  %v2588 = vunpack.c.l.b16 %v2450
  %v2589 = vunpack.c.h.b16 %v2450
  %v2590 = vunpack.c.l.b16 %v2451
  %v2591 = vunpack.c.h.b16 %v2451
  %v2592 = vunpack.c.l.b16 %v2452
  %v2593 = vunpack.c.h.b16 %v2452
  %v2594 = vunpack.c.l.b16 %v2453
  %v2595 = vunpack.c.h.b16 %v2453
  %v2596 = vunpack.c.l.b16 %v2454
  %v2597 = vunpack.c.h.b16 %v2454
  %v2598 = vunpack.c.l.b16 %v2455
  %v2599 = vunpack.c.h.b16 %v2455
  %v2600 = vunpack.c.l.b16 %v2456
  %v2601 = vunpack.c.h.b16 %v2456
  %v2602 = vunpack.c.l.b16 %v2457
  %v2603 = vunpack.c.h.b16 %v2457
  %v2604 = vunpack.c.l.b16 %v2458
  %v2605 = vunpack.c.h.b16 %v2458
  %v2606 = vunpack.c.l.b16 %v2459
  %v2607 = vunpack.c.h.b16 %v2459
  %v2608 = vunpack.c.l.b16 %v2460
  %v2609 = vunpack.c.h.b16 %v2460
  %v2610 = vunpack.c.l.b16 %v2461
  %v2611 = vunpack.c.h.b16 %v2461
  %v2612 = vunpack.c.l.b16 %v2462
  %v2613 = vunpack.c.h.b16 %v2462
  %v2614 = vunpack.c.l.b16 %v2463
  %v2615 = vunpack.c.h.b16 %v2463
  %v2616 = vunpack.c.l.b16 %v2464
  %v2617 = vunpack.c.h.b16 %v2464
  %v2618 = vunpack.c.l.b16 %v2465
  %v2619 = vunpack.c.h.b16 %v2465
  %v2620 = vunpack.c.l.b16 %v2466
  %v2621 = vunpack.c.h.b16 %v2466
  %v2622 = vunpack.c.l.b16 %v2467
  %v2623 = vunpack.c.h.b16 %v2467
  %v2624 = vunpack.c.l.b16 %v2468
  %v2625 = vunpack.c.h.b16 %v2468
  %v2626 = vunpack.c.l.b16 %v2469
  %v2627 = vunpack.c.h.b16 %v2469
  %v2628 = vunpack.c.l.b16 %v2470
  %v2629 = vunpack.c.h.b16 %v2470
  %v2630 = vunpack.c.l.b16 %v2471
  %v2631 = vunpack.c.h.b16 %v2471
  %v2632 = vunpack.c.l.b16 %v2472
  %v2633 = vunpack.c.h.b16 %v2472
  %v2634 = vunpack.c.l.b16 %v2473
  %v2635 = vunpack.c.h.b16 %v2473
  %v2636 = vunpack.c.l.b16 %v2474
  %v2637 = vunpack.c.h.b16 %v2474
  %v2638 = vunpack.c.l.b16 %v2475
  %v2639 = vunpack.c.h.b16 %v2475
  %v2640 = vunpack.c.l.b16 %v2476
  %v2641 = vunpack.c.h.b16 %v2476
  %v2642 = vunpack.c.l.b16 %v2477
  %v2643 = vunpack.c.h.b16 %v2477
  %v2644 = vunpack.c.l.b16 %v2478
  %v2645 = vunpack.c.h.b16 %v2478
  %v2646 = vunpack.c.l.b16 %v2479
  %v2647 = vunpack.c.h.b16 %v2479
  %v2648 = vunpack.c.l.b16 %v2480
  %v2649 = vunpack.c.h.b16 %v2480
  %v2650 = vunpack.c.l.b16 %v2481
  %v2651 = vunpack.c.h.b16 %v2481
  %v2652 = vunpack.c.l.b16 %v2482
  %v2653 = vunpack.c.h.b16 %v2482
  %v2654 = vunpack.c.l.b16 %v2483
  %v2655 = vunpack.c.h.b16 %v2483
  %v2656 = vunpack.c.l.b16 %v2484
  %v2657 = vunpack.c.h.b16 %v2484
  %v2658 = vunpack.c.l.b16 %v2485
  %v2659 = vunpack.c.h.b16 %v2485
  %v2660 = vunpack.c.l.b16 %v2486
  %v2661 = vunpack.c.h.b16 %v2486
  %v2662 = vunpack.c.l.b16 %v2487
  %v2663 = vunpack.c.h.b16 %v2487
  %v2664 = vunpack.c.l.b16 %v2488
  %v2665 = vunpack.c.h.b16 %v2488
  %v2666 = vunpack.c.l.b16 %v2489
  %v2667 = vunpack.c.h.b16 %v2489
  %v2668 = vunpack.c.l.b16 %v2490
  %v2669 = vunpack.c.h.b16 %v2490
  %v2670 = vunpack.c.l.b16 %v2491
  %v2671 = vunpack.c.h.b16 %v2491
  %v2672 = vunpack.c.l.b16 %v2492
  %v2673 = vunpack.c.h.b16 %v2492
  %v2674 = vunpack.c.l.b16 %v2493
  %v2675 = vunpack.c.h.b16 %v2493
  %v2676 = vunpack.c.l.b16 %v2494
  %v2677 = vunpack.c.h.b16 %v2494
  %v2678 = vunpack.c.l.b16 %v2495
  %v2679 = vunpack.c.h.b16 %v2495
  %v2680 = vunpack.c.l.b16 %v2496
  %v2681 = vunpack.c.h.b16 %v2496
  %v2682 = vunpack.c.l.b16 %v2497
  %v2683 = vunpack.c.h.b16 %v2497
  %v2684 = vunpack.c.l.b16 %v2498
  %v2685 = vunpack.c.h.b16 %v2498
  %v2686 = vunpack.c.l.b16 %v2499
  %v2687 = vunpack.c.h.b16 %v2499
  %v2688 = vunpack.c.l.b16 %v2500
  %v2689 = vunpack.c.h.b16 %v2500
  %v2690 = vunpack.c.l.b16 %v2501
  %v2691 = vunpack.c.h.b16 %v2501
  %v2692 = vunpack.c.l.b16 %v2502
  %v2693 = vunpack.c.h.b16 %v2502
  %v2694 = vunpack.c.l.b16 %v2503
  %v2695 = vunpack.c.h.b16 %v2503
  %v2696 = vpack.c.b16 %v2572, %v2568
  %v2697 = vpack.c.b16 %v2573, %v2569
  %v2698 = vpack.c.b16 %v2574, %v2570
  %v2699 = vpack.c.b16 %v2575, %v2571
  %v2700 = vpack.c.b16 %v2580, %v2576
  %v2701 = vpack.c.b16 %v2581, %v2577
  %v2702 = vpack.c.b16 %v2582, %v2578
  %v2703 = vpack.c.b16 %v2583, %v2579
  %v2704 = vpack.c.b16 %v2588, %v2584
  %v2705 = vpack.c.b16 %v2589, %v2585
  %v2706 = vpack.c.b16 %v2590, %v2586
  %v2707 = vpack.c.b16 %v2591, %v2587
  %v2708 = vpack.c.b16 %v2596, %v2592
  %v2709 = vpack.c.b16 %v2597, %v2593
  %v2710 = vpack.c.b16 %v2598, %v2594
  %v2711 = vpack.c.b16 %v2599, %v2595
  %v2712 = vpack.c.b16 %v2604, %v2600
  %v2713 = vpack.c.b16 %v2605, %v2601
  %v2714 = vpack.c.b16 %v2606, %v2602
  %v2715 = vpack.c.b16 %v2607, %v2603
  %v2716 = vpack.c.b16 %v2612, %v2608
  %v2717 = vpack.c.b16 %v2613, %v2609
  %v2718 = vpack.c.b16 %v2614, %v2610
  %v2719 = vpack.c.b16 %v2615, %v2611
  %v2720 = vpack.c.b16 %v2620, %v2616
  %v2721 = vpack.c.b16 %v2621, %v2617
  %v2722 = vpack.c.b16 %v2622, %v2618
  %v2723 = vpack.c.b16 %v2623, %v2619
  %v2724 = vpack.c.b16 %v2628, %v2624
  %v2725 = vpack.c.b16 %v2629, %v2625
  %v2726 = vpack.c.b16 %v2630, %v2626
  %v2727 = vpack.c.b16 %v2631, %v2627
  %v2728 = vpack.c.b16 %v2636, %v2632
  %v2729 = vpack.c.b16 %v2637, %v2633
  %v2730 = vpack.c.b16 %v2638, %v2634
  %v2731 = vpack.c.b16 %v2639, %v2635
  %v2732 = vpack.c.b16 %v2644, %v2640
  %v2733 = vpack.c.b16 %v2645, %v2641
  %v2734 = vpack.c.b16 %v2646, %v2642
  %v2735 = vpack.c.b16 %v2647, %v2643
  %v2736 = vpack.c.b16 %v2652, %v2648
  %v2737 = vpack.c.b16 %v2653, %v2649
  %v2738 = vpack.c.b16 %v2654, %v2650
  %v2739 = vpack.c.b16 %v2655, %v2651
  %v2740 = vpack.c.b16 %v2660, %v2656
  %v2741 = vpack.c.b16 %v2661, %v2657
  %v2742 = vpack.c.b16 %v2662, %v2658
  %v2743 = vpack.c.b16 %v2663, %v2659
  %v2744 = vpack.c.b16 %v2668, %v2664
  %v2745 = vpack.c.b16 %v2669, %v2665
  %v2746 = vpack.c.b16 %v2670, %v2666
  %v2747 = vpack.c.b16 %v2671, %v2667
  %v2748 = vpack.c.b16 %v2676, %v2672
  %v2749 = vpack.c.b16 %v2677, %v2673
  %v2750 = vpack.c.b16 %v2678, %v2674
  %v2751 = vpack.c.b16 %v2679, %v2675
  %v2752 = vpack.c.b16 %v2684, %v2680
  %v2753 = vpack.c.b16 %v2685, %v2681
  %v2754 = vpack.c.b16 %v2686, %v2682
  %v2755 = vpack.c.b16 %v2687, %v2683
  %v2756 = vpack.c.b16 %v2692, %v2688
  %v2757 = vpack.c.b16 %v2693, %v2689
  %v2758 = vpack.c.b16 %v2694, %v2690
  %v2759 = vpack.c.b16 %v2695, %v2691
  %2824 = vmatprep.subr.bf16.mxu0 %v2697
  %2825 = vmatpush1.bf16.msra.mxu0 %v2696
  %2826 = vmatprep.subr.bf16.mxu0 %v2701
  %2827 = vmatpush1.bf16.msra.mxu0 %v2700
  %2828 = vmatprep.subr.bf16.mxu0 %v2705
  %2829 = vmatpush1.bf16.msra.mxu0 %v2704
  %2830 = vmatprep.subr.bf16.mxu0 %v2709
  %2831 = vmatpush1.bf16.msra.mxu0 %v2708
  %2832 = vmatprep.subr.bf16.mxu0 %v2713
  %2833 = vmatpush1.bf16.msra.mxu0 %v2712
  %2834 = vmatprep.subr.bf16.mxu0 %v2717
  %2835 = vmatpush1.bf16.msra.mxu0 %v2716
  %2836 = vmatprep.subr.bf16.mxu0 %v2721
  %2837 = vmatpush1.bf16.msra.mxu0 %v2720
  %2838 = vmatprep.subr.bf16.mxu0 %v2725
  %2839 = vmatpush1.bf16.msra.mxu0 %v2724
  %2840 = vmatprep.subr.bf16.mxu0 %v2729
  %2841 = vmatpush1.bf16.msra.mxu0 %v2728
  %2842 = vmatprep.subr.bf16.mxu0 %v2733
  %2843 = vmatpush1.bf16.msra.mxu0 %v2732
  %2844 = vmatprep.subr.bf16.mxu0 %v2737
  %2845 = vmatpush1.bf16.msra.mxu0 %v2736
  %2846 = vmatprep.subr.bf16.mxu0 %v2741
  %2847 = vmatpush1.bf16.msra.mxu0 %v2740
  %2848 = vmatprep.subr.bf16.mxu0 %v2745
  %2849 = vmatpush1.bf16.msra.mxu0 %v2744
  %2850 = vmatprep.subr.bf16.mxu0 %v2749
  %2851 = vmatpush1.bf16.msra.mxu0 %v2748
  %2852 = vmatprep.subr.bf16.mxu0 %v2753
  %2853 = vmatpush1.bf16.msra.mxu0 %v2752
  %2854 = vmatprep.subr.bf16.mxu0 %v2757
  %2855 = vmatpush1.bf16.msra.mxu0 %v2756
  %2856 = vmatprep.mubr.bf16.mxu0 %v2439
  %2857 = vmatmul.mubr.bf16.gmra.mrb[0].mxu0 %v2438
  %v2858 = vpop.f32.mrb[0].mxu0
  %v2859 = vadd.f32 0.0, %v2858
  %v2860 = vpop.f32.mrb[0].mxu0
  %v2861 = vadd.f32 0.0, %v2860
  %v2862 = vpop.f32.mrb[0].mxu0
  %v2863 = vadd.f32 0.0, %v2862
  %v2864 = vpop.f32.mrb[0].mxu0
  %v2865 = vadd.f32 0.0, %v2864
  %2866 = vdwg.mxu0
  %2867 = vmatprep.subr.bf16.mxu0 %v2699
  %2868 = vmatpush1.bf16.msra.mxu0 %v2698
  %2869 = vmatprep.subr.bf16.mxu0 %v2703
  %2870 = vmatpush1.bf16.msra.mxu0 %v2702
  %2871 = vmatprep.subr.bf16.mxu0 %v2707
  %2872 = vmatpush1.bf16.msra.mxu0 %v2706
  %2873 = vmatprep.subr.bf16.mxu0 %v2711
  %2874 = vmatpush1.bf16.msra.mxu0 %v2710
  %2875 = vmatprep.subr.bf16.mxu0 %v2715
  %2876 = vmatpush1.bf16.msra.mxu0 %v2714
  %2877 = vmatprep.subr.bf16.mxu0 %v2719
  %2878 = vmatpush1.bf16.msra.mxu0 %v2718
  %2879 = vmatprep.subr.bf16.mxu0 %v2723
  %2880 = vmatpush1.bf16.msra.mxu0 %v2722
  %2881 = vmatprep.subr.bf16.mxu0 %v2727
  %2882 = vmatpush1.bf16.msra.mxu0 %v2726
  %2883 = vmatprep.subr.bf16.mxu0 %v2731
  %2884 = vmatpush1.bf16.msra.mxu0 %v2730
  %2885 = vmatprep.subr.bf16.mxu0 %v2735
  %2886 = vmatpush1.bf16.msra.mxu0 %v2734
  %2887 = vmatprep.subr.bf16.mxu0 %v2739
  %2888 = vmatpush1.bf16.msra.mxu0 %v2738
  %2889 = vmatprep.subr.bf16.mxu0 %v2743
  %2890 = vmatpush1.bf16.msra.mxu0 %v2742
  %2891 = vmatprep.subr.bf16.mxu0 %v2747
  %2892 = vmatpush1.bf16.msra.mxu0 %v2746
  %2893 = vmatprep.subr.bf16.mxu0 %v2751
  %2894 = vmatpush1.bf16.msra.mxu0 %v2750
  %2895 = vmatprep.subr.bf16.mxu0 %v2755
  %2896 = vmatpush1.bf16.msra.mxu0 %v2754
  %2897 = vmatprep.subr.bf16.mxu0 %v2759
  %2898 = vmatpush1.bf16.msra.mxu0 %v2758
  %2899 = vmatprep.mubr.bf16.mxu0 %v2439
  %2900 = vmatmul.mubr.bf16.gmra.mrb[0].mxu0 %v2438
  %v2901 = vpop.f32.mrb[0].mxu0
  %v2902 = vadd.f32 0.0, %v2901
  %v2903 = vpop.f32.mrb[0].mxu0
  %v2904 = vadd.f32 0.0, %v2903
  %v2905 = vpop.f32.mrb[0].mxu0
  %v2906 = vadd.f32 0.0, %v2905
  %v2907 = vpop.f32.mrb[0].mxu0
  %v2908 = vadd.f32 0.0, %v2907
  %2909 = vdwg.mxu0
  %v2910 = vld [vmem:[%s8] sm:$0xff]
  %v2911 = vld [vmem:[%s8 + $0x8] sm:$0xff]
  %s2912 = scalar_lea.vmem %s8, 16
  %v2913 = vld [vmem:[%s2912] sm:$0xff]
  %v2914 = vld [vmem:[%s2912 + $0x8] sm:$0xff]
  %v2916 = vsel %vm2066, %v2913, 0
  %v2919 = vsel %vm2066, %v2914, 0
  %2921 = vmatprep.subr.mxu0 0.0
  %2922 = vmatpush1.msra.mxu0 %v2861
  %2923 = vmatprep.subr.mxu0 0.0
  %2924 = vmatpush1.msra.mxu0 %v2865
  %2925 = vmatprep.subr.mxu0 0.0
  %2926 = vmatpush1.msra.mxu0 0.0
  %2927 = vmatprep.subr.mxu0 0.0
  %2928 = vmatpush1.msra.mxu0 0.0
  %2929 = vmatprep.subr.mxu0 0.0
  %2930 = vmatpush1.msra.mxu0 0.0
  %2931 = vmatprep.subr.mxu0 0.0
  %2932 = vmatpush1.msra.mxu0 0.0
  %2933 = vmatprep.subr.mxu0 0.0
  %2934 = vmatpush1.msra.mxu0 0.0
  %2935 = vmatprep.subr.mxu0 0.0
  %2936 = vmatpush1.msra.mxu0 0.0
  %2937 = vmatprep.subr.mxu0 0.0
  %2938 = vmatpush1.msra.mxu0 0.0
  %2939 = vmatprep.subr.mxu0 0.0
  %2940 = vmatpush1.msra.mxu0 0.0
  %2941 = vmatprep.subr.mxu0 0.0
  %2942 = vmatpush1.msra.mxu0 0.0
  %2943 = vmatprep.subr.mxu0 0.0
  %2944 = vmatpush1.msra.mxu0 0.0
  %2945 = vmatprep.subr.mxu0 0.0
  %2946 = vmatpush1.msra.mxu0 0.0
  %2947 = vmatprep.subr.mxu0 0.0
  %2948 = vmatpush1.msra.mxu0 0.0
  %2949 = vmatprep.subr.mxu0 0.0
  %2950 = vmatpush1.msra.mxu0 0.0
  %2951 = vmatprep.subr.mxu0 0.0
  %2952 = vmatpush1.msra.mxu0 0.0
  %2953 = vmatprep.subr.mxu0 0.0
  %2954 = vmatpush1.msra.mxu0 0.0
  %2955 = vmatprep.subr.mxu0 0.0
  %2956 = vmatpush1.msra.mxu0 0.0
  %2957 = vmatprep.subr.mxu0 0.0
  %2958 = vmatpush1.msra.mxu0 0.0
  %2959 = vmatprep.subr.mxu0 0.0
  %2960 = vmatpush1.msra.mxu0 0.0
  %2961 = vmatprep.subr.mxu0 0.0
  %2962 = vmatpush1.msra.mxu0 0.0
  %2963 = vmatprep.subr.mxu0 0.0
  %2964 = vmatpush1.msra.mxu0 0.0
  %2965 = vmatprep.subr.mxu0 0.0
  %2966 = vmatpush1.msra.mxu0 0.0
  %2967 = vmatprep.subr.mxu0 0.0
  %2968 = vmatpush1.msra.mxu0 0.0
  %2969 = vmatprep.subr.mxu0 0.0
  %2970 = vmatpush1.msra.mxu0 0.0
  %2971 = vmatprep.subr.mxu0 0.0
  %2972 = vmatpush1.msra.mxu0 0.0
  %2973 = vmatprep.subr.mxu0 0.0
  %2974 = vmatpush1.msra.mxu0 0.0
  %2975 = vmatprep.subr.mxu0 0.0
  %2976 = vmatpush1.msra.mxu0 0.0
  %2977 = vmatprep.subr.mxu0 0.0
  %2978 = vmatpush1.msra.mxu0 0.0
  %2979 = vmatprep.subr.mxu0 0.0
  %2980 = vmatpush1.msra.mxu0 0.0
  %2981 = vmatprep.subr.mxu0 0.0
  %2982 = vmatpush1.msra.mxu0 0.0
  %2983 = vmatprep.subr.mxu0 0.0
  %2984 = vmatpush1.msra.mxu0 0.0
  %2985 = vmatprep.mubr.f32.mxu0 0.0
  %2986 = vmatmul.mubr.f32.gmra.mrb[0].mxu0 %v2916
  %v2987 = vpop.f32.mrb[0].mxu0
  %v2988 = vadd.f32 0.0, %v2987
  %v2989 = vpop.f32.mrb[0].mxu0
  %2990 = vmatprep.mubr.f32.mxu0 0.0
  %2991 = vmatmul.mubr.f32.gmra.mrb[0].mxu0 %v2919
  %v2992 = vpop.f32.mrb[0].mxu0
  %v2993 = vadd.f32 0.0, %v2992
  %v2994 = vpop.f32.mrb[0].mxu0
  %2995 = vdwg.mxu0
  %v2997 = vsel %vm2066, %v2910, 0
  %v3000 = vsel %vm2066, %v2911, 0
  %3002 = vmatprep.subr.mxu0 0.0
  %3003 = vmatpush1.msra.mxu0 %v2859
  %3004 = vmatprep.subr.mxu0 0.0
  %3005 = vmatpush1.msra.mxu0 %v2863
  %3006 = vmatprep.subr.mxu0 0.0
  %3007 = vmatpush1.msra.mxu0 0.0
  %3008 = vmatprep.subr.mxu0 0.0
  %3009 = vmatpush1.msra.mxu0 0.0
  %3010 = vmatprep.subr.mxu0 0.0
  %3011 = vmatpush1.msra.mxu0 0.0
  %3012 = vmatprep.subr.mxu0 0.0
  %3013 = vmatpush1.msra.mxu0 0.0
  %3014 = vmatprep.subr.mxu0 0.0
  %3015 = vmatpush1.msra.mxu0 0.0
  %3016 = vmatprep.subr.mxu0 0.0
  %3017 = vmatpush1.msra.mxu0 0.0
  %3018 = vmatprep.subr.mxu0 0.0
  %3019 = vmatpush1.msra.mxu0 0.0
  %3020 = vmatprep.subr.mxu0 0.0
  %3021 = vmatpush1.msra.mxu0 0.0
  %3022 = vmatprep.subr.mxu0 0.0
  %3023 = vmatpush1.msra.mxu0 0.0
  %3024 = vmatprep.subr.mxu0 0.0
  %3025 = vmatpush1.msra.mxu0 0.0
  %3026 = vmatprep.subr.mxu0 0.0
  %3027 = vmatpush1.msra.mxu0 0.0
  %3028 = vmatprep.subr.mxu0 0.0
  %3029 = vmatpush1.msra.mxu0 0.0
  %3030 = vmatprep.subr.mxu0 0.0
  %3031 = vmatpush1.msra.mxu0 0.0
  %3032 = vmatprep.subr.mxu0 0.0
  %3033 = vmatpush1.msra.mxu0 0.0
  %3034 = vmatprep.subr.mxu0 0.0
  %3035 = vmatpush1.msra.mxu0 0.0
  %3036 = vmatprep.subr.mxu0 0.0
  %3037 = vmatpush1.msra.mxu0 0.0
  %3038 = vmatprep.subr.mxu0 0.0
  %3039 = vmatpush1.msra.mxu0 0.0
  %3040 = vmatprep.subr.mxu0 0.0
  %3041 = vmatpush1.msra.mxu0 0.0
  %3042 = vmatprep.subr.mxu0 0.0
  %3043 = vmatpush1.msra.mxu0 0.0
  %3044 = vmatprep.subr.mxu0 0.0
  %3045 = vmatpush1.msra.mxu0 0.0
  %3046 = vmatprep.subr.mxu0 0.0
  %3047 = vmatpush1.msra.mxu0 0.0
  %3048 = vmatprep.subr.mxu0 0.0
  %3049 = vmatpush1.msra.mxu0 0.0
  %3050 = vmatprep.subr.mxu0 0.0
  %3051 = vmatpush1.msra.mxu0 0.0
  %3052 = vmatprep.subr.mxu0 0.0
  %3053 = vmatpush1.msra.mxu0 0.0
  %3054 = vmatprep.subr.mxu0 0.0
  %3055 = vmatpush1.msra.mxu0 0.0
  %3056 = vmatprep.subr.mxu0 0.0
  %3057 = vmatpush1.msra.mxu0 0.0
  %3058 = vmatprep.subr.mxu0 0.0
  %3059 = vmatpush1.msra.mxu0 0.0
  %3060 = vmatprep.subr.mxu0 0.0
  %3061 = vmatpush1.msra.mxu0 0.0
  %3062 = vmatprep.subr.mxu0 0.0
  %3063 = vmatpush1.msra.mxu0 0.0
  %3064 = vmatprep.subr.mxu0 0.0
  %3065 = vmatpush1.msra.mxu0 0.0
  %3066 = vmatprep.mubr.f32.mxu0 0.0
  %3067 = vmatmul.mubr.f32.gmra.mrb[0].mxu0 %v2997
  %v3068 = vpop.f32.mrb[0].mxu0
  %v3069 = vadd.f32 %v2988, %v3068
  %v3070 = vpop.f32.mrb[0].mxu0
  %3071 = vmatprep.mubr.f32.mxu0 0.0
  %3072 = vmatmul.mubr.f32.gmra.mrb[0].mxu0 %v3000
  %v3073 = vpop.f32.mrb[0].mxu0
  %v3074 = vadd.f32 %v2993, %v3073
  %v3075 = vpop.f32.mrb[0].mxu0
  %3076 = vdwg.mxu0
  %s3077 = scalar_lea.vmem %s8, 32
  %v3078 = vld [vmem:[%s3077] sm:$0xff]
  %v3079 = vld [vmem:[%s3077 + $0x8] sm:$0xff]
  %v3081 = vsel %vm2066, %v3078, 0
  %v3084 = vsel %vm2066, %v3079, 0
  %3086 = vmatprep.subr.mxu0 0.0
  %3087 = vmatpush1.msra.mxu0 %v2902
  %3088 = vmatprep.subr.mxu0 0.0
  %3089 = vmatpush1.msra.mxu0 %v2906
  %3090 = vmatprep.subr.mxu0 0.0
  %3091 = vmatpush1.msra.mxu0 0.0
  %3092 = vmatprep.subr.mxu0 0.0
  %3093 = vmatpush1.msra.mxu0 0.0
  %3094 = vmatprep.subr.mxu0 0.0
  %3095 = vmatpush1.msra.mxu0 0.0
  %3096 = vmatprep.subr.mxu0 0.0
  %3097 = vmatpush1.msra.mxu0 0.0
  %3098 = vmatprep.subr.mxu0 0.0
  %3099 = vmatpush1.msra.mxu0 0.0
  %3100 = vmatprep.subr.mxu0 0.0
  %3101 = vmatpush1.msra.mxu0 0.0
  %3102 = vmatprep.subr.mxu0 0.0
  %3103 = vmatpush1.msra.mxu0 0.0
  %3104 = vmatprep.subr.mxu0 0.0
  %3105 = vmatpush1.msra.mxu0 0.0
  %3106 = vmatprep.subr.mxu0 0.0
  %3107 = vmatpush1.msra.mxu0 0.0
  %3108 = vmatprep.subr.mxu0 0.0
  %3109 = vmatpush1.msra.mxu0 0.0
  %3110 = vmatprep.subr.mxu0 0.0
  %3111 = vmatpush1.msra.mxu0 0.0
  %3112 = vmatprep.subr.mxu0 0.0
  %3113 = vmatpush1.msra.mxu0 0.0
  %3114 = vmatprep.subr.mxu0 0.0
  %3115 = vmatpush1.msra.mxu0 0.0
  %3116 = vmatprep.subr.mxu0 0.0
  %3117 = vmatpush1.msra.mxu0 0.0
  %3118 = vmatprep.subr.mxu0 0.0
  %3119 = vmatpush1.msra.mxu0 0.0
  %3120 = vmatprep.subr.mxu0 0.0
  %3121 = vmatpush1.msra.mxu0 0.0
  %3122 = vmatprep.subr.mxu0 0.0
  %3123 = vmatpush1.msra.mxu0 0.0
  %3124 = vmatprep.subr.mxu0 0.0
  %3125 = vmatpush1.msra.mxu0 0.0
  %3126 = vmatprep.subr.mxu0 0.0
  %3127 = vmatpush1.msra.mxu0 0.0
  %3128 = vmatprep.subr.mxu0 0.0
  %3129 = vmatpush1.msra.mxu0 0.0
  %3130 = vmatprep.subr.mxu0 0.0
  %3131 = vmatpush1.msra.mxu0 0.0
  %3132 = vmatprep.subr.mxu0 0.0
  %3133 = vmatpush1.msra.mxu0 0.0
  %3134 = vmatprep.subr.mxu0 0.0
  %3135 = vmatpush1.msra.mxu0 0.0
  %3136 = vmatprep.subr.mxu0 0.0
  %3137 = vmatpush1.msra.mxu0 0.0
  %3138 = vmatprep.subr.mxu0 0.0
  %3139 = vmatpush1.msra.mxu0 0.0
  %3140 = vmatprep.subr.mxu0 0.0
  %3141 = vmatpush1.msra.mxu0 0.0
  %3142 = vmatprep.subr.mxu0 0.0
  %3143 = vmatpush1.msra.mxu0 0.0
  %3144 = vmatprep.subr.mxu0 0.0
  %3145 = vmatpush1.msra.mxu0 0.0
  %3146 = vmatprep.subr.mxu0 0.0
  %3147 = vmatpush1.msra.mxu0 0.0
  %3148 = vmatprep.subr.mxu0 0.0
  %3149 = vmatpush1.msra.mxu0 0.0
  %3150 = vmatprep.mubr.f32.mxu0 0.0
  %3151 = vmatmul.mubr.f32.gmra.mrb[0].mxu0 %v3081
  %v3152 = vpop.f32.mrb[0].mxu0
  %v3153 = vadd.f32 0.0, %v3152
  %v3154 = vpop.f32.mrb[0].mxu0
  %3155 = vmatprep.mubr.f32.mxu0 0.0
  %3156 = vmatmul.mubr.f32.gmra.mrb[0].mxu0 %v3084
  %v3157 = vpop.f32.mrb[0].mxu0
  %v3158 = vadd.f32 0.0, %v3157
  %v3159 = vpop.f32.mrb[0].mxu0
  %3160 = vdwg.mxu0
  %v3161 = vadd.f32 %v3069, %v3153
  %v3162 = vadd.f32 %v3074, %v3158
  %s3163 = scalar_lea.vmem %s8, 48
  %v3164 = vld [vmem:[%s3163] sm:$0xff]
  %v3165 = vld [vmem:[%s3163 + $0x8] sm:$0xff]
  %v3167 = vsel %vm2066, %v3164, 0
  %v3170 = vsel %vm2066, %v3165, 0
  %3172 = vmatprep.subr.mxu0 0.0
  %3173 = vmatpush1.msra.mxu0 %v2904
  %3174 = vmatprep.subr.mxu0 0.0
  %3175 = vmatpush1.msra.mxu0 %v2908
  %3176 = vmatprep.subr.mxu0 0.0
  %3177 = vmatpush1.msra.mxu0 0.0
  %3178 = vmatprep.subr.mxu0 0.0
  %3179 = vmatpush1.msra.mxu0 0.0
  %3180 = vmatprep.subr.mxu0 0.0
  %3181 = vmatpush1.msra.mxu0 0.0
  %3182 = vmatprep.subr.mxu0 0.0
  %3183 = vmatpush1.msra.mxu0 0.0
  %3184 = vmatprep.subr.mxu0 0.0
  %3185 = vmatpush1.msra.mxu0 0.0
  %3186 = vmatprep.subr.mxu0 0.0
  %3187 = vmatpush1.msra.mxu0 0.0
  %3188 = vmatprep.subr.mxu0 0.0
  %3189 = vmatpush1.msra.mxu0 0.0
  %3190 = vmatprep.subr.mxu0 0.0
  %3191 = vmatpush1.msra.mxu0 0.0
  %3192 = vmatprep.subr.mxu0 0.0
  %3193 = vmatpush1.msra.mxu0 0.0
  %3194 = vmatprep.subr.mxu0 0.0
  %3195 = vmatpush1.msra.mxu0 0.0
  %3196 = vmatprep.subr.mxu0 0.0
  %3197 = vmatpush1.msra.mxu0 0.0
  %3198 = vmatprep.subr.mxu0 0.0
  %3199 = vmatpush1.msra.mxu0 0.0
  %3200 = vmatprep.subr.mxu0 0.0
  %3201 = vmatpush1.msra.mxu0 0.0
  %3202 = vmatprep.subr.mxu0 0.0
  %3203 = vmatpush1.msra.mxu0 0.0
  %3204 = vmatprep.subr.mxu0 0.0
  %3205 = vmatpush1.msra.mxu0 0.0
  %3206 = vmatprep.subr.mxu0 0.0
  %3207 = vmatpush1.msra.mxu0 0.0
  %3208 = vmatprep.subr.mxu0 0.0
  %3209 = vmatpush1.msra.mxu0 0.0
  %3210 = vmatprep.subr.mxu0 0.0
  %3211 = vmatpush1.msra.mxu0 0.0
  %3212 = vmatprep.subr.mxu0 0.0
  %3213 = vmatpush1.msra.mxu0 0.0
  %3214 = vmatprep.subr.mxu0 0.0
  %3215 = vmatpush1.msra.mxu0 0.0
  %3216 = vmatprep.subr.mxu0 0.0
  %3217 = vmatpush1.msra.mxu0 0.0
  %3218 = vmatprep.subr.mxu0 0.0
  %3219 = vmatpush1.msra.mxu0 0.0
  %3220 = vmatprep.subr.mxu0 0.0
  %3221 = vmatpush1.msra.mxu0 0.0
  %3222 = vmatprep.subr.mxu0 0.0
  %3223 = vmatpush1.msra.mxu0 0.0
  %3224 = vmatprep.subr.mxu0 0.0
  %3225 = vmatpush1.msra.mxu0 0.0
  %3226 = vmatprep.subr.mxu0 0.0
  %3227 = vmatpush1.msra.mxu0 0.0
  %3228 = vmatprep.subr.mxu0 0.0
  %3229 = vmatpush1.msra.mxu0 0.0
  %3230 = vmatprep.subr.mxu0 0.0
  %3231 = vmatpush1.msra.mxu0 0.0
  %3232 = vmatprep.subr.mxu0 0.0
  %3233 = vmatpush1.msra.mxu0 0.0
  %3234 = vmatprep.subr.mxu0 0.0
  %3235 = vmatpush1.msra.mxu0 0.0
  %3236 = vmatprep.mubr.f32.mxu0 0.0
  %3237 = vmatmul.mubr.f32.gmra.mrb[0].mxu0 %v3167
  %v3238 = vpop.f32.mrb[0].mxu0
  %v3239 = vadd.f32 0.0, %v3238
  %v3240 = vpop.f32.mrb[0].mxu0
  %3241 = vmatprep.mubr.f32.mxu0 0.0
  %3242 = vmatmul.mubr.f32.gmra.mrb[0].mxu0 %v3170
  %v3243 = vpop.f32.mrb[0].mxu0
  %v3244 = vadd.f32 0.0, %v3243
  %v3245 = vpop.f32.mrb[0].mxu0
  %3246 = vdwg.mxu0
  %v3247 = vadd.f32 %v3161, %v3239
  %v3248 = vadd.f32 %v3162, %v3244
  %s3249 = scalar_lea.vmem %s1, 6
  %v3250 = vld [vmem:[%s3249] sm:$0x3]
  %v3252 = vlaneseq
  %v3253 = vshrl.u32 %v3252, 7
  %v3254 = vsub.s32 0, %v3253
  %v3255 = vrot.slane %v3250, %v3254
  %v3257 = vadd.f32 %v3247, %v3255
  %v3258 = vadd.f32 %v3248, %v3255
  %3259 = vst [vmem:[%s19] sm:$0xff] %v3257
  %3260 = vst [vmem:[%s19 + $0x8] sm:$0xff] %v3258
  %v3261 = vld [vmem:[%s12] sm:$0xff]
  %v3262 = vld [vmem:[%s12 + $0x8] sm:$0xff]
  %v3263 = vld [vmem:[%s12 + $0x10] sm:$0xff]
  %v3264 = vld [vmem:[%s12 + $0x18] sm:$0xff]
  %v3265 = vld [vmem:[%s12 + $0x20] sm:$0xff]
  %v3266 = vld [vmem:[%s12 + $0x28] sm:$0xff]
  %v3267 = vld [vmem:[%s12 + $0x30] sm:$0xff]
  %v3268 = vld [vmem:[%s12 + $0x38] sm:$0xff]
  %v3269 = vld [vmem:[%s12 + $0x40] sm:$0xff]
  %v3270 = vld [vmem:[%s12 + $0x48] sm:$0xff]
  %v3271 = vld [vmem:[%s12 + $0x50] sm:$0xff]
  %v3272 = vld [vmem:[%s12 + $0x58] sm:$0xff]
  %v3273 = vld [vmem:[%s12 + $0x60] sm:$0xff]
  %v3274 = vld [vmem:[%s12 + $0x68] sm:$0xff]
  %v3275 = vld [vmem:[%s12 + $0x70] sm:$0xff]
  %v3276 = vld [vmem:[%s12 + $0x78] sm:$0xff]
  %v3277 = vld [vmem:[%s12 + $0x80] sm:$0xff]
  %v3278 = vld [vmem:[%s12 + $0x88] sm:$0xff]
  %v3279 = vld [vmem:[%s12 + $0x90] sm:$0xff]
  %v3280 = vld [vmem:[%s12 + $0x98] sm:$0xff]
  %v3281 = vld [vmem:[%s12 + $0xa0] sm:$0xff]
  %v3282 = vld [vmem:[%s12 + $0xa8] sm:$0xff]
  %v3283 = vld [vmem:[%s12 + $0xb0] sm:$0xff]
  %v3284 = vld [vmem:[%s12 + $0xb8] sm:$0xff]
  %v3285 = vld [vmem:[%s12 + $0xc0] sm:$0xff]
  %v3286 = vld [vmem:[%s12 + $0xc8] sm:$0xff]
  %v3287 = vld [vmem:[%s12 + $0xd0] sm:$0xff]
  %v3288 = vld [vmem:[%s12 + $0xd8] sm:$0xff]
  %v3289 = vld [vmem:[%s12 + $0xe0] sm:$0xff]
  %v3290 = vld [vmem:[%s12 + $0xe8] sm:$0xff]
  %v3291 = vld [vmem:[%s12 + $0xf0] sm:$0xff]
  %v3292 = vld [vmem:[%s12 + $0xf8] sm:$0xff]
  %v3325 = vunpack.c.l.b16 %v3261
  %v3326 = vunpack.c.h.b16 %v3261
  %v3327 = vunpack.c.l.b16 %v3262
  %v3328 = vunpack.c.h.b16 %v3262
  %v3329 = vunpack.c.l.b16 %v3263
  %v3330 = vunpack.c.h.b16 %v3263
  %v3331 = vunpack.c.l.b16 %v3264
  %v3332 = vunpack.c.h.b16 %v3264
  %v3333 = vunpack.c.l.b16 %v3265
  %v3334 = vunpack.c.h.b16 %v3265
  %v3335 = vunpack.c.l.b16 %v3266
  %v3336 = vunpack.c.h.b16 %v3266
  %v3337 = vunpack.c.l.b16 %v3267
  %v3338 = vunpack.c.h.b16 %v3267
  %v3339 = vunpack.c.l.b16 %v3268
  %v3340 = vunpack.c.h.b16 %v3268
  %v3341 = vunpack.c.l.b16 %v3269
  %v3342 = vunpack.c.h.b16 %v3269
  %v3343 = vunpack.c.l.b16 %v3270
  %v3344 = vunpack.c.h.b16 %v3270
  %v3345 = vunpack.c.l.b16 %v3271
  %v3346 = vunpack.c.h.b16 %v3271
  %v3347 = vunpack.c.l.b16 %v3272
  %v3348 = vunpack.c.h.b16 %v3272
  %v3349 = vunpack.c.l.b16 %v3273
  %v3350 = vunpack.c.h.b16 %v3273
  %v3351 = vunpack.c.l.b16 %v3274
  %v3352 = vunpack.c.h.b16 %v3274
  %v3353 = vunpack.c.l.b16 %v3275
  %v3354 = vunpack.c.h.b16 %v3275
  %v3355 = vunpack.c.l.b16 %v3276
  %v3356 = vunpack.c.h.b16 %v3276
  %v3357 = vunpack.c.l.b16 %v3277
  %v3358 = vunpack.c.h.b16 %v3277
  %v3359 = vunpack.c.l.b16 %v3278
  %v3360 = vunpack.c.h.b16 %v3278
  %v3361 = vunpack.c.l.b16 %v3279
  %v3362 = vunpack.c.h.b16 %v3279
  %v3363 = vunpack.c.l.b16 %v3280
  %v3364 = vunpack.c.h.b16 %v3280
  %v3365 = vunpack.c.l.b16 %v3281
  %v3366 = vunpack.c.h.b16 %v3281
  %v3367 = vunpack.c.l.b16 %v3282
  %v3368 = vunpack.c.h.b16 %v3282
  %v3369 = vunpack.c.l.b16 %v3283
  %v3370 = vunpack.c.h.b16 %v3283
  %v3371 = vunpack.c.l.b16 %v3284
  %v3372 = vunpack.c.h.b16 %v3284
  %v3373 = vunpack.c.l.b16 %v3285
  %v3374 = vunpack.c.h.b16 %v3285
  %v3375 = vunpack.c.l.b16 %v3286
  %v3376 = vunpack.c.h.b16 %v3286
  %v3377 = vunpack.c.l.b16 %v3287
  %v3378 = vunpack.c.h.b16 %v3287
  %v3379 = vunpack.c.l.b16 %v3288
  %v3380 = vunpack.c.h.b16 %v3288
  %v3381 = vunpack.c.l.b16 %v3289
  %v3382 = vunpack.c.h.b16 %v3289
  %v3383 = vunpack.c.l.b16 %v3290
  %v3384 = vunpack.c.h.b16 %v3290
  %v3385 = vunpack.c.l.b16 %v3291
  %v3386 = vunpack.c.h.b16 %v3291
  %v3387 = vunpack.c.l.b16 %v3292
  %v3388 = vunpack.c.h.b16 %v3292
  %v3389 = vpack.c.b16 %v3329, %v3325
  %v3390 = vpack.c.b16 %v3330, %v3326
  %v3391 = vpack.c.b16 %v3331, %v3327
  %v3392 = vpack.c.b16 %v3332, %v3328
  %v3393 = vpack.c.b16 %v3337, %v3333
  %v3394 = vpack.c.b16 %v3338, %v3334
  %v3395 = vpack.c.b16 %v3339, %v3335
  %v3396 = vpack.c.b16 %v3340, %v3336
  %v3397 = vpack.c.b16 %v3345, %v3341
  %v3398 = vpack.c.b16 %v3346, %v3342
  %v3399 = vpack.c.b16 %v3347, %v3343
  %v3400 = vpack.c.b16 %v3348, %v3344
  %v3401 = vpack.c.b16 %v3353, %v3349
  %v3402 = vpack.c.b16 %v3354, %v3350
  %v3403 = vpack.c.b16 %v3355, %v3351
  %v3404 = vpack.c.b16 %v3356, %v3352
  %v3405 = vpack.c.b16 %v3361, %v3357
  %v3406 = vpack.c.b16 %v3362, %v3358
  %v3407 = vpack.c.b16 %v3363, %v3359
  %v3408 = vpack.c.b16 %v3364, %v3360
  %v3409 = vpack.c.b16 %v3369, %v3365
  %v3410 = vpack.c.b16 %v3370, %v3366
  %v3411 = vpack.c.b16 %v3371, %v3367
  %v3412 = vpack.c.b16 %v3372, %v3368
  %v3413 = vpack.c.b16 %v3377, %v3373
  %v3414 = vpack.c.b16 %v3378, %v3374
  %v3415 = vpack.c.b16 %v3379, %v3375
  %v3416 = vpack.c.b16 %v3380, %v3376
  %v3417 = vpack.c.b16 %v3385, %v3381
  %v3418 = vpack.c.b16 %v3386, %v3382
  %v3419 = vpack.c.b16 %v3387, %v3383
  %v3420 = vpack.c.b16 %v3388, %v3384
  %3453 = vmatprep.subr.bf16.mxu0 %v3390
  %3454 = vmatpush1.bf16.msra.mxu0 %v3389
  %3455 = vmatprep.subr.bf16.mxu0 %v3394
  %3456 = vmatpush1.bf16.msra.mxu0 %v3393
  %3457 = vmatprep.subr.bf16.mxu0 %v3398
  %3458 = vmatpush1.bf16.msra.mxu0 %v3397
  %3459 = vmatprep.subr.bf16.mxu0 %v3402
  %3460 = vmatpush1.bf16.msra.mxu0 %v3401
  %3461 = vmatprep.subr.bf16.mxu0 %v3406
  %3462 = vmatpush1.bf16.msra.mxu0 %v3405
  %3463 = vmatprep.subr.bf16.mxu0 %v3410
  %3464 = vmatpush1.bf16.msra.mxu0 %v3409
  %3465 = vmatprep.subr.bf16.mxu0 %v3414
  %3466 = vmatpush1.bf16.msra.mxu0 %v3413
  %3467 = vmatprep.subr.bf16.mxu0 %v3418
  %3468 = vmatpush1.bf16.msra.mxu0 %v3417
  %3469 = vmatprep.subr.bf16.mxu0 0
  %3470 = vmatpush1.bf16.msra.mxu0 0
  %3471 = vmatprep.subr.bf16.mxu0 0
  %3472 = vmatpush1.bf16.msra.mxu0 0
  %3473 = vmatprep.subr.bf16.mxu0 0
  %3474 = vmatpush1.bf16.msra.mxu0 0
  %3475 = vmatprep.subr.bf16.mxu0 0
  %3476 = vmatpush1.bf16.msra.mxu0 0
  %3477 = vmatprep.subr.bf16.mxu0 0
  %3478 = vmatpush1.bf16.msra.mxu0 0
  %3479 = vmatprep.subr.bf16.mxu0 0
  %3480 = vmatpush1.bf16.msra.mxu0 0
  %3481 = vmatprep.subr.bf16.mxu0 0
  %3482 = vmatpush1.bf16.msra.mxu0 0
  %3483 = vmatprep.subr.bf16.mxu0 0
  %3484 = vmatpush1.bf16.msra.mxu0 0
  %3485 = vmatprep.mubr.bf16.mxu0 0
  %3486 = vmatmul.mubr.bf16.gmra.mrb[0].mxu0 %v73
  %v3487 = vpop.f32.mrb[0].mxu0
  %v3488 = vadd.f32 0.0, %v3487
  %v3489 = vpop.f32.mrb[0].mxu0
  %v3490 = vadd.f32 0.0, %v3489
  %v3491 = vpop.f32.mrb[0].mxu0
  %v3492 = vadd.f32 0.0, %v3491
  %v3493 = vpop.f32.mrb[0].mxu0
  %v3494 = vadd.f32 0.0, %v3493
  %3495 = vmatprep.mubr.bf16.mxu0 0
  %3496 = vmatmul.mubr.bf16.gmra.mrb[0].mxu0 %v74
  %v3497 = vpop.f32.mrb[0].mxu0
  %v3498 = vadd.f32 0.0, %v3497
  %v3499 = vpop.f32.mrb[0].mxu0
  %v3500 = vadd.f32 0.0, %v3499
  %v3501 = vpop.f32.mrb[0].mxu0
  %v3502 = vadd.f32 0.0, %v3501
  %v3503 = vpop.f32.mrb[0].mxu0
  %v3504 = vadd.f32 0.0, %v3503
  %3505 = vmatprep.mubr.bf16.mxu0 0
  %3506 = vmatmul.mubr.bf16.gmra.mrb[0].mxu0 %v75
  %v3507 = vpop.f32.mrb[0].mxu0
  %v3508 = vadd.f32 0.0, %v3507
  %v3509 = vpop.f32.mrb[0].mxu0
  %v3510 = vadd.f32 0.0, %v3509
  %v3511 = vpop.f32.mrb[0].mxu0
  %v3512 = vadd.f32 0.0, %v3511
  %v3513 = vpop.f32.mrb[0].mxu0
  %v3514 = vadd.f32 0.0, %v3513
  %3515 = vmatprep.mubr.bf16.mxu0 0
  %3516 = vmatmul.mubr.bf16.gmra.mrb[0].mxu0 %v76
  %v3517 = vpop.f32.mrb[0].mxu0
  %v3518 = vadd.f32 0.0, %v3517
  %v3519 = vpop.f32.mrb[0].mxu0
  %v3520 = vadd.f32 0.0, %v3519
  %v3521 = vpop.f32.mrb[0].mxu0
  %v3522 = vadd.f32 0.0, %v3521
  %v3523 = vpop.f32.mrb[0].mxu0
  %v3524 = vadd.f32 0.0, %v3523
  %3525 = vdwg.mxu0
  %3526 = vmatprep.subr.bf16.mxu0 %v3392
  %3527 = vmatpush1.bf16.msra.mxu0 %v3391
  %3528 = vmatprep.subr.bf16.mxu0 %v3396
  %3529 = vmatpush1.bf16.msra.mxu0 %v3395
  %3530 = vmatprep.subr.bf16.mxu0 %v3400
  %3531 = vmatpush1.bf16.msra.mxu0 %v3399
  %3532 = vmatprep.subr.bf16.mxu0 %v3404
  %3533 = vmatpush1.bf16.msra.mxu0 %v3403
  %3534 = vmatprep.subr.bf16.mxu0 %v3408
  %3535 = vmatpush1.bf16.msra.mxu0 %v3407
  %3536 = vmatprep.subr.bf16.mxu0 %v3412
  %3537 = vmatpush1.bf16.msra.mxu0 %v3411
  %3538 = vmatprep.subr.bf16.mxu0 %v3416
  %3539 = vmatpush1.bf16.msra.mxu0 %v3415
  %3540 = vmatprep.subr.bf16.mxu0 %v3420
  %3541 = vmatpush1.bf16.msra.mxu0 %v3419
  %3542 = vmatprep.subr.bf16.mxu0 0
  %3543 = vmatpush1.bf16.msra.mxu0 0
  %3544 = vmatprep.subr.bf16.mxu0 0
  %3545 = vmatpush1.bf16.msra.mxu0 0
  %3546 = vmatprep.subr.bf16.mxu0 0
  %3547 = vmatpush1.bf16.msra.mxu0 0
  %3548 = vmatprep.subr.bf16.mxu0 0
  %3549 = vmatpush1.bf16.msra.mxu0 0
  %3550 = vmatprep.subr.bf16.mxu0 0
  %3551 = vmatpush1.bf16.msra.mxu0 0
  %3552 = vmatprep.subr.bf16.mxu0 0
  %3553 = vmatpush1.bf16.msra.mxu0 0
  %3554 = vmatprep.subr.bf16.mxu0 0
  %3555 = vmatpush1.bf16.msra.mxu0 0
  %3556 = vmatprep.subr.bf16.mxu0 0
  %3557 = vmatpush1.bf16.msra.mxu0 0
  %3558 = vmatprep.mubr.bf16.mxu0 0
  %3559 = vmatmul.mubr.bf16.gmra.mrb[0].mxu0 %v73
  %v3560 = vpop.f32.mrb[0].mxu0
  %v3561 = vadd.f32 0.0, %v3560
  %v3562 = vpop.f32.mrb[0].mxu0
  %v3563 = vadd.f32 0.0, %v3562
  %v3564 = vpop.f32.mrb[0].mxu0
  %v3565 = vadd.f32 0.0, %v3564
  %v3566 = vpop.f32.mrb[0].mxu0
  %v3567 = vadd.f32 0.0, %v3566
  %3568 = vmatprep.mubr.bf16.mxu0 0
  %3569 = vmatmul.mubr.bf16.gmra.mrb[0].mxu0 %v74
  %v3570 = vpop.f32.mrb[0].mxu0
  %v3571 = vadd.f32 0.0, %v3570
  %v3572 = vpop.f32.mrb[0].mxu0
  %v3573 = vadd.f32 0.0, %v3572
  %v3574 = vpop.f32.mrb[0].mxu0
  %v3575 = vadd.f32 0.0, %v3574
  %v3576 = vpop.f32.mrb[0].mxu0
  %v3577 = vadd.f32 0.0, %v3576
  %3578 = vmatprep.mubr.bf16.mxu0 0
  %3579 = vmatmul.mubr.bf16.gmra.mrb[0].mxu0 %v75
  %v3580 = vpop.f32.mrb[0].mxu0
  %v3581 = vadd.f32 0.0, %v3580
  %v3582 = vpop.f32.mrb[0].mxu0
  %v3583 = vadd.f32 0.0, %v3582
  %v3584 = vpop.f32.mrb[0].mxu0
  %v3585 = vadd.f32 0.0, %v3584
  %v3586 = vpop.f32.mrb[0].mxu0
  %v3587 = vadd.f32 0.0, %v3586
  %3588 = vmatprep.mubr.bf16.mxu0 0
  %3589 = vmatmul.mubr.bf16.gmra.mrb[0].mxu0 %v76
  %v3590 = vpop.f32.mrb[0].mxu0
  %v3591 = vadd.f32 0.0, %v3590
  %v3592 = vpop.f32.mrb[0].mxu0
  %v3593 = vadd.f32 0.0, %v3592
  %v3594 = vpop.f32.mrb[0].mxu0
  %v3595 = vadd.f32 0.0, %v3594
  %v3596 = vpop.f32.mrb[0].mxu0
  %v3597 = vadd.f32 0.0, %v3596
  %3598 = vdwg.mxu0
  %v3599 = vld [vmem:[%s11] sm:$0xff]
  %v3600 = vld [vmem:[%s11 + $0x8] sm:$0xff]
  %s3601 = scalar_lea.vmem %s11, 16
  %v3602 = vld [vmem:[%s3601] sm:$0xff]
  %v3603 = vld [vmem:[%s3601 + $0x8] sm:$0xff]
  %v3605 = vsel %vm424, %v3602, 0
  %v3608 = vsel %vm424, %v3603, 0
  %3610 = vmatprep.subr.mxu0 0.0
  %3611 = vmatpush1.msra.mxu0 %v3490
  %3612 = vmatprep.subr.mxu0 0.0
  %3613 = vmatpush1.msra.mxu0 %v3494
  %3614 = vmatprep.subr.mxu0 0.0
  %3615 = vmatpush1.msra.mxu0 %v3500
  %3616 = vmatprep.subr.mxu0 0.0
  %3617 = vmatpush1.msra.mxu0 %v3504
  %3618 = vmatprep.subr.mxu0 0.0
  %3619 = vmatpush1.msra.mxu0 %v3510
  %3620 = vmatprep.subr.mxu0 0.0
  %3621 = vmatpush1.msra.mxu0 %v3514
  %3622 = vmatprep.subr.mxu0 0.0
  %3623 = vmatpush1.msra.mxu0 %v3520
  %3624 = vmatprep.subr.mxu0 0.0
  %3625 = vmatpush1.msra.mxu0 %v3524
  %3626 = vmatprep.subr.mxu0 0.0
  %3627 = vmatpush1.msra.mxu0 0.0
  %3628 = vmatprep.subr.mxu0 0.0
  %3629 = vmatpush1.msra.mxu0 0.0
  %3630 = vmatprep.subr.mxu0 0.0
  %3631 = vmatpush1.msra.mxu0 0.0
  %3632 = vmatprep.subr.mxu0 0.0
  %3633 = vmatpush1.msra.mxu0 0.0
  %3634 = vmatprep.subr.mxu0 0.0
  %3635 = vmatpush1.msra.mxu0 0.0
  %3636 = vmatprep.subr.mxu0 0.0
  %3637 = vmatpush1.msra.mxu0 0.0
  %3638 = vmatprep.subr.mxu0 0.0
  %3639 = vmatpush1.msra.mxu0 0.0
  %3640 = vmatprep.subr.mxu0 0.0
  %3641 = vmatpush1.msra.mxu0 0.0
  %3642 = vmatprep.subr.mxu0 0.0
  %3643 = vmatpush1.msra.mxu0 0.0
  %3644 = vmatprep.subr.mxu0 0.0
  %3645 = vmatpush1.msra.mxu0 0.0
  %3646 = vmatprep.subr.mxu0 0.0
  %3647 = vmatpush1.msra.mxu0 0.0
  %3648 = vmatprep.subr.mxu0 0.0
  %3649 = vmatpush1.msra.mxu0 0.0
  %3650 = vmatprep.subr.mxu0 0.0
  %3651 = vmatpush1.msra.mxu0 0.0
  %3652 = vmatprep.subr.mxu0 0.0
  %3653 = vmatpush1.msra.mxu0 0.0
  %3654 = vmatprep.subr.mxu0 0.0
  %3655 = vmatpush1.msra.mxu0 0.0
  %3656 = vmatprep.subr.mxu0 0.0
  %3657 = vmatpush1.msra.mxu0 0.0
  %3658 = vmatprep.subr.mxu0 0.0
  %3659 = vmatpush1.msra.mxu0 0.0
  %3660 = vmatprep.subr.mxu0 0.0
  %3661 = vmatpush1.msra.mxu0 0.0
  %3662 = vmatprep.subr.mxu0 0.0
  %3663 = vmatpush1.msra.mxu0 0.0
  %3664 = vmatprep.subr.mxu0 0.0
  %3665 = vmatpush1.msra.mxu0 0.0
  %3666 = vmatprep.subr.mxu0 0.0
  %3667 = vmatpush1.msra.mxu0 0.0
  %3668 = vmatprep.subr.mxu0 0.0
  %3669 = vmatpush1.msra.mxu0 0.0
  %3670 = vmatprep.subr.mxu0 0.0
  %3671 = vmatpush1.msra.mxu0 0.0
  %3672 = vmatprep.subr.mxu0 0.0
  %3673 = vmatpush1.msra.mxu0 0.0
  %3674 = vmatprep.mubr.f32.mxu0 0.0
  %3675 = vmatmul.mubr.f32.gmra.mrb[0].mxu0 %v3605
  %v3676 = vpop.f32.mrb[0].mxu0
  %v3677 = vadd.f32 0.0, %v3676
  %v3678 = vpop.f32.mrb[0].mxu0
  %3679 = vmatprep.mubr.f32.mxu0 0.0
  %3680 = vmatmul.mubr.f32.gmra.mrb[0].mxu0 %v3608
  %v3681 = vpop.f32.mrb[0].mxu0
  %v3682 = vadd.f32 0.0, %v3681
  %v3683 = vpop.f32.mrb[0].mxu0
  %3684 = vdwg.mxu0
  %v3686 = vsel %vm424, %v3599, 0
  %v3689 = vsel %vm424, %v3600, 0
  %3691 = vmatprep.subr.mxu0 0.0
  %3692 = vmatpush1.msra.mxu0 %v3488
  %3693 = vmatprep.subr.mxu0 0.0
  %3694 = vmatpush1.msra.mxu0 %v3492
  %3695 = vmatprep.subr.mxu0 0.0
  %3696 = vmatpush1.msra.mxu0 %v3498
  %3697 = vmatprep.subr.mxu0 0.0
  %3698 = vmatpush1.msra.mxu0 %v3502
  %3699 = vmatprep.subr.mxu0 0.0
  %3700 = vmatpush1.msra.mxu0 %v3508
  %3701 = vmatprep.subr.mxu0 0.0
  %3702 = vmatpush1.msra.mxu0 %v3512
  %3703 = vmatprep.subr.mxu0 0.0
  %3704 = vmatpush1.msra.mxu0 %v3518
  %3705 = vmatprep.subr.mxu0 0.0
  %3706 = vmatpush1.msra.mxu0 %v3522
  %3707 = vmatprep.subr.mxu0 0.0
  %3708 = vmatpush1.msra.mxu0 0.0
  %3709 = vmatprep.subr.mxu0 0.0
  %3710 = vmatpush1.msra.mxu0 0.0
  %3711 = vmatprep.subr.mxu0 0.0
  %3712 = vmatpush1.msra.mxu0 0.0
  %3713 = vmatprep.subr.mxu0 0.0
  %3714 = vmatpush1.msra.mxu0 0.0
  %3715 = vmatprep.subr.mxu0 0.0
  %3716 = vmatpush1.msra.mxu0 0.0
  %3717 = vmatprep.subr.mxu0 0.0
  %3718 = vmatpush1.msra.mxu0 0.0
  %3719 = vmatprep.subr.mxu0 0.0
  %3720 = vmatpush1.msra.mxu0 0.0
  %3721 = vmatprep.subr.mxu0 0.0
  %3722 = vmatpush1.msra.mxu0 0.0
  %3723 = vmatprep.subr.mxu0 0.0
  %3724 = vmatpush1.msra.mxu0 0.0
  %3725 = vmatprep.subr.mxu0 0.0
  %3726 = vmatpush1.msra.mxu0 0.0
  %3727 = vmatprep.subr.mxu0 0.0
  %3728 = vmatpush1.msra.mxu0 0.0
  %3729 = vmatprep.subr.mxu0 0.0
  %3730 = vmatpush1.msra.mxu0 0.0
  %3731 = vmatprep.subr.mxu0 0.0
  %3732 = vmatpush1.msra.mxu0 0.0
  %3733 = vmatprep.subr.mxu0 0.0
  %3734 = vmatpush1.msra.mxu0 0.0
  %3735 = vmatprep.subr.mxu0 0.0
  %3736 = vmatpush1.msra.mxu0 0.0
  %3737 = vmatprep.subr.mxu0 0.0
  %3738 = vmatpush1.msra.mxu0 0.0
  %3739 = vmatprep.subr.mxu0 0.0
  %3740 = vmatpush1.msra.mxu0 0.0
  %3741 = vmatprep.subr.mxu0 0.0
  %3742 = vmatpush1.msra.mxu0 0.0
  %3743 = vmatprep.subr.mxu0 0.0
  %3744 = vmatpush1.msra.mxu0 0.0
  %3745 = vmatprep.subr.mxu0 0.0
  %3746 = vmatpush1.msra.mxu0 0.0
  %3747 = vmatprep.subr.mxu0 0.0
  %3748 = vmatpush1.msra.mxu0 0.0
  %3749 = vmatprep.subr.mxu0 0.0
  %3750 = vmatpush1.msra.mxu0 0.0
  %3751 = vmatprep.subr.mxu0 0.0
  %3752 = vmatpush1.msra.mxu0 0.0
  %3753 = vmatprep.subr.mxu0 0.0
  %3754 = vmatpush1.msra.mxu0 0.0
  %3755 = vmatprep.mubr.f32.mxu0 0.0
  %3756 = vmatmul.mubr.f32.gmra.mrb[0].mxu0 %v3686
  %v3757 = vpop.f32.mrb[0].mxu0
  %v3758 = vadd.f32 %v3677, %v3757
  %v3759 = vpop.f32.mrb[0].mxu0
  %3760 = vmatprep.mubr.f32.mxu0 0.0
  %3761 = vmatmul.mubr.f32.gmra.mrb[0].mxu0 %v3689
  %v3762 = vpop.f32.mrb[0].mxu0
  %v3763 = vadd.f32 %v3682, %v3762
  %v3764 = vpop.f32.mrb[0].mxu0
  %3765 = vdwg.mxu0
  %s3766 = scalar_lea.vmem %s11, 32
  %v3767 = vld [vmem:[%s3766] sm:$0xff]
  %v3768 = vld [vmem:[%s3766 + $0x8] sm:$0xff]
  %v3770 = vsel %vm424, %v3767, 0
  %v3773 = vsel %vm424, %v3768, 0
  %3775 = vmatprep.subr.mxu0 0.0
  %3776 = vmatpush1.msra.mxu0 %v3561
  %3777 = vmatprep.subr.mxu0 0.0
  %3778 = vmatpush1.msra.mxu0 %v3565
  %3779 = vmatprep.subr.mxu0 0.0
  %3780 = vmatpush1.msra.mxu0 %v3571
  %3781 = vmatprep.subr.mxu0 0.0
  %3782 = vmatpush1.msra.mxu0 %v3575
  %3783 = vmatprep.subr.mxu0 0.0
  %3784 = vmatpush1.msra.mxu0 %v3581
  %3785 = vmatprep.subr.mxu0 0.0
  %3786 = vmatpush1.msra.mxu0 %v3585
  %3787 = vmatprep.subr.mxu0 0.0
  %3788 = vmatpush1.msra.mxu0 %v3591
  %3789 = vmatprep.subr.mxu0 0.0
  %3790 = vmatpush1.msra.mxu0 %v3595
  %3791 = vmatprep.subr.mxu0 0.0
  %3792 = vmatpush1.msra.mxu0 0.0
  %3793 = vmatprep.subr.mxu0 0.0
  %3794 = vmatpush1.msra.mxu0 0.0
  %3795 = vmatprep.subr.mxu0 0.0
  %3796 = vmatpush1.msra.mxu0 0.0
  %3797 = vmatprep.subr.mxu0 0.0
  %3798 = vmatpush1.msra.mxu0 0.0
  %3799 = vmatprep.subr.mxu0 0.0
  %3800 = vmatpush1.msra.mxu0 0.0
  %3801 = vmatprep.subr.mxu0 0.0
  %3802 = vmatpush1.msra.mxu0 0.0
  %3803 = vmatprep.subr.mxu0 0.0
  %3804 = vmatpush1.msra.mxu0 0.0
  %3805 = vmatprep.subr.mxu0 0.0
  %3806 = vmatpush1.msra.mxu0 0.0
  %3807 = vmatprep.subr.mxu0 0.0
  %3808 = vmatpush1.msra.mxu0 0.0
  %3809 = vmatprep.subr.mxu0 0.0
  %3810 = vmatpush1.msra.mxu0 0.0
  %3811 = vmatprep.subr.mxu0 0.0
  %3812 = vmatpush1.msra.mxu0 0.0
  %3813 = vmatprep.subr.mxu0 0.0
  %3814 = vmatpush1.msra.mxu0 0.0
  %3815 = vmatprep.subr.mxu0 0.0
  %3816 = vmatpush1.msra.mxu0 0.0
  %3817 = vmatprep.subr.mxu0 0.0
  %3818 = vmatpush1.msra.mxu0 0.0
  %3819 = vmatprep.subr.mxu0 0.0
  %3820 = vmatpush1.msra.mxu0 0.0
  %3821 = vmatprep.subr.mxu0 0.0
  %3822 = vmatpush1.msra.mxu0 0.0
  %3823 = vmatprep.subr.mxu0 0.0
  %3824 = vmatpush1.msra.mxu0 0.0
  %3825 = vmatprep.subr.mxu0 0.0
  %3826 = vmatpush1.msra.mxu0 0.0
  %3827 = vmatprep.subr.mxu0 0.0
  %3828 = vmatpush1.msra.mxu0 0.0
  %3829 = vmatprep.subr.mxu0 0.0
  %3830 = vmatpush1.msra.mxu0 0.0
  %3831 = vmatprep.subr.mxu0 0.0
  %3832 = vmatpush1.msra.mxu0 0.0
  %3833 = vmatprep.subr.mxu0 0.0
  %3834 = vmatpush1.msra.mxu0 0.0
  %3835 = vmatprep.subr.mxu0 0.0
  %3836 = vmatpush1.msra.mxu0 0.0
  %3837 = vmatprep.subr.mxu0 0.0
  %3838 = vmatpush1.msra.mxu0 0.0
  %3839 = vmatprep.mubr.f32.mxu0 0.0
  %3840 = vmatmul.mubr.f32.gmra.mrb[0].mxu0 %v3770
  %v3841 = vpop.f32.mrb[0].mxu0
  %v3842 = vadd.f32 0.0, %v3841
  %v3843 = vpop.f32.mrb[0].mxu0
  %3844 = vmatprep.mubr.f32.mxu0 0.0
  %3845 = vmatmul.mubr.f32.gmra.mrb[0].mxu0 %v3773
  %v3846 = vpop.f32.mrb[0].mxu0
  %v3847 = vadd.f32 0.0, %v3846
  %v3848 = vpop.f32.mrb[0].mxu0
  %3849 = vdwg.mxu0
  %v3850 = vadd.f32 %v3758, %v3842
  %v3851 = vadd.f32 %v3763, %v3847
  %s3852 = scalar_lea.vmem %s11, 48
  %v3853 = vld [vmem:[%s3852] sm:$0xff]
  %v3854 = vld [vmem:[%s3852 + $0x8] sm:$0xff]
  %v3856 = vsel %vm424, %v3853, 0
  %v3859 = vsel %vm424, %v3854, 0
  %3861 = vmatprep.subr.mxu0 0.0
  %3862 = vmatpush1.msra.mxu0 %v3563
  %3863 = vmatprep.subr.mxu0 0.0
  %3864 = vmatpush1.msra.mxu0 %v3567
  %3865 = vmatprep.subr.mxu0 0.0
  %3866 = vmatpush1.msra.mxu0 %v3573
  %3867 = vmatprep.subr.mxu0 0.0
  %3868 = vmatpush1.msra.mxu0 %v3577
  %3869 = vmatprep.subr.mxu0 0.0
  %3870 = vmatpush1.msra.mxu0 %v3583
  %3871 = vmatprep.subr.mxu0 0.0
  %3872 = vmatpush1.msra.mxu0 %v3587
  %3873 = vmatprep.subr.mxu0 0.0
  %3874 = vmatpush1.msra.mxu0 %v3593
  %3875 = vmatprep.subr.mxu0 0.0
  %3876 = vmatpush1.msra.mxu0 %v3597
  %3877 = vmatprep.subr.mxu0 0.0
  %3878 = vmatpush1.msra.mxu0 0.0
  %3879 = vmatprep.subr.mxu0 0.0
  %3880 = vmatpush1.msra.mxu0 0.0
  %3881 = vmatprep.subr.mxu0 0.0
  %3882 = vmatpush1.msra.mxu0 0.0
  %3883 = vmatprep.subr.mxu0 0.0
  %3884 = vmatpush1.msra.mxu0 0.0
  %3885 = vmatprep.subr.mxu0 0.0
  %3886 = vmatpush1.msra.mxu0 0.0
  %3887 = vmatprep.subr.mxu0 0.0
  %3888 = vmatpush1.msra.mxu0 0.0
  %3889 = vmatprep.subr.mxu0 0.0
  %3890 = vmatpush1.msra.mxu0 0.0
  %3891 = vmatprep.subr.mxu0 0.0
  %3892 = vmatpush1.msra.mxu0 0.0
  %3893 = vmatprep.subr.mxu0 0.0
  %3894 = vmatpush1.msra.mxu0 0.0
  %3895 = vmatprep.subr.mxu0 0.0
  %3896 = vmatpush1.msra.mxu0 0.0
  %3897 = vmatprep.subr.mxu0 0.0
  %3898 = vmatpush1.msra.mxu0 0.0
  %3899 = vmatprep.subr.mxu0 0.0
  %3900 = vmatpush1.msra.mxu0 0.0
  %3901 = vmatprep.subr.mxu0 0.0
  %3902 = vmatpush1.msra.mxu0 0.0
  %3903 = vmatprep.subr.mxu0 0.0
  %3904 = vmatpush1.msra.mxu0 0.0
  %3905 = vmatprep.subr.mxu0 0.0
  %3906 = vmatpush1.msra.mxu0 0.0
  %3907 = vmatprep.subr.mxu0 0.0
  %3908 = vmatpush1.msra.mxu0 0.0
  %3909 = vmatprep.subr.mxu0 0.0
  %3910 = vmatpush1.msra.mxu0 0.0
  %3911 = vmatprep.subr.mxu0 0.0
  %3912 = vmatpush1.msra.mxu0 0.0
  %3913 = vmatprep.subr.mxu0 0.0
  %3914 = vmatpush1.msra.mxu0 0.0
  %3915 = vmatprep.subr.mxu0 0.0
  %3916 = vmatpush1.msra.mxu0 0.0
  %3917 = vmatprep.subr.mxu0 0.0
  %3918 = vmatpush1.msra.mxu0 0.0
  %3919 = vmatprep.subr.mxu0 0.0
  %3920 = vmatpush1.msra.mxu0 0.0
  %3921 = vmatprep.subr.mxu0 0.0
  %3922 = vmatpush1.msra.mxu0 0.0
  %3923 = vmatprep.subr.mxu0 0.0
  %3924 = vmatpush1.msra.mxu0 0.0
  %3925 = vmatprep.mubr.f32.mxu0 0.0
  %3926 = vmatmul.mubr.f32.gmra.mrb[0].mxu0 %v3856
  %v3927 = vpop.f32.mrb[0].mxu0
  %v3928 = vadd.f32 0.0, %v3927
  %v3929 = vpop.f32.mrb[0].mxu0
  %3930 = vmatprep.mubr.f32.mxu0 0.0
  %3931 = vmatmul.mubr.f32.gmra.mrb[0].mxu0 %v3859
  %v3932 = vpop.f32.mrb[0].mxu0
  %v3933 = vadd.f32 0.0, %v3932
  %v3934 = vpop.f32.mrb[0].mxu0
  %3935 = vdwg.mxu0
  %v3936 = vadd.f32 %v3850, %v3928
  %v3937 = vadd.f32 %v3851, %v3933
  %v3938 = vld [vmem:[%s10] sm:$0x1]
  %v3940 = vlaneseq
  %v3941 = vshrl.u32 %v3940, 7
  %v3942 = vsub.s32 0, %v3941
  %v3943 = vrot.slane %v3938, %v3942
  %v3945 = vadd.f32 %v3936, %v3943
  %v3946 = vadd.f32 %v3937, %v3943
  %v3947 = vmul.f32 %v3945, 0.2
  %v3948 = vmul.f32 %v3946, 0.2
  %v3949 = vmax.f32 %v3945, %v3947
  %v3950 = vmax.f32 %v3946, %v3948
  %v3951 = vpack.c.bf16 %v3950, %v3949
  %v3952 = vld [vmem:[%s14] sm:$0xff]
  %v3953 = vld [vmem:[%s14 + $0x8] sm:$0xff]
  %v3954 = vld [vmem:[%s14 + $0x10] sm:$0xff]
  %v3955 = vld [vmem:[%s14 + $0x18] sm:$0xff]
  %v3956 = vld [vmem:[%s14 + $0x20] sm:$0xff]
  %v3957 = vld [vmem:[%s14 + $0x28] sm:$0xff]
  %v3958 = vld [vmem:[%s14 + $0x30] sm:$0xff]
  %v3959 = vld [vmem:[%s14 + $0x38] sm:$0xff]
  %v3960 = vld [vmem:[%s14 + $0x40] sm:$0xff]
  %v3961 = vld [vmem:[%s14 + $0x48] sm:$0xff]
  %v3962 = vld [vmem:[%s14 + $0x50] sm:$0xff]
  %v3963 = vld [vmem:[%s14 + $0x58] sm:$0xff]
  %v3964 = vld [vmem:[%s14 + $0x60] sm:$0xff]
  %v3965 = vld [vmem:[%s14 + $0x68] sm:$0xff]
  %v3966 = vld [vmem:[%s14 + $0x70] sm:$0xff]
  %v3967 = vld [vmem:[%s14 + $0x78] sm:$0xff]
  %v3968 = vld [vmem:[%s14 + $0x80] sm:$0xff]
  %v3969 = vld [vmem:[%s14 + $0x88] sm:$0xff]
  %v3970 = vld [vmem:[%s14 + $0x90] sm:$0xff]
  %v3971 = vld [vmem:[%s14 + $0x98] sm:$0xff]
  %v3972 = vld [vmem:[%s14 + $0xa0] sm:$0xff]
  %v3973 = vld [vmem:[%s14 + $0xa8] sm:$0xff]
  %v3974 = vld [vmem:[%s14 + $0xb0] sm:$0xff]
  %v3975 = vld [vmem:[%s14 + $0xb8] sm:$0xff]
  %v3976 = vld [vmem:[%s14 + $0xc0] sm:$0xff]
  %v3977 = vld [vmem:[%s14 + $0xc8] sm:$0xff]
  %v3978 = vld [vmem:[%s14 + $0xd0] sm:$0xff]
  %v3979 = vld [vmem:[%s14 + $0xd8] sm:$0xff]
  %v3980 = vld [vmem:[%s14 + $0xe0] sm:$0xff]
  %v3981 = vld [vmem:[%s14 + $0xe8] sm:$0xff]
  %v3982 = vld [vmem:[%s14 + $0xf0] sm:$0xff]
  %v3983 = vld [vmem:[%s14 + $0xf8] sm:$0xff]
  %v4016 = vunpack.c.l.b16 %v3952
  %v4017 = vunpack.c.h.b16 %v3952
  %v4018 = vunpack.c.l.b16 %v3953
  %v4019 = vunpack.c.h.b16 %v3953
  %v4020 = vunpack.c.l.b16 %v3954
  %v4021 = vunpack.c.h.b16 %v3954
  %v4022 = vunpack.c.l.b16 %v3955
  %v4023 = vunpack.c.h.b16 %v3955
  %v4024 = vunpack.c.l.b16 %v3956
  %v4025 = vunpack.c.h.b16 %v3956
  %v4026 = vunpack.c.l.b16 %v3957
  %v4027 = vunpack.c.h.b16 %v3957
  %v4028 = vunpack.c.l.b16 %v3958
  %v4029 = vunpack.c.h.b16 %v3958
  %v4030 = vunpack.c.l.b16 %v3959
  %v4031 = vunpack.c.h.b16 %v3959
  %v4032 = vunpack.c.l.b16 %v3960
  %v4033 = vunpack.c.h.b16 %v3960
  %v4034 = vunpack.c.l.b16 %v3961
  %v4035 = vunpack.c.h.b16 %v3961
  %v4036 = vunpack.c.l.b16 %v3962
  %v4037 = vunpack.c.h.b16 %v3962
  %v4038 = vunpack.c.l.b16 %v3963
  %v4039 = vunpack.c.h.b16 %v3963
  %v4040 = vunpack.c.l.b16 %v3964
  %v4041 = vunpack.c.h.b16 %v3964
  %v4042 = vunpack.c.l.b16 %v3965
  %v4043 = vunpack.c.h.b16 %v3965
  %v4044 = vunpack.c.l.b16 %v3966
  %v4045 = vunpack.c.h.b16 %v3966
  %v4046 = vunpack.c.l.b16 %v3967
  %v4047 = vunpack.c.h.b16 %v3967
  %v4048 = vunpack.c.l.b16 %v3968
  %v4049 = vunpack.c.h.b16 %v3968
  %v4050 = vunpack.c.l.b16 %v3969
  %v4051 = vunpack.c.h.b16 %v3969
  %v4052 = vunpack.c.l.b16 %v3970
  %v4053 = vunpack.c.h.b16 %v3970
  %v4054 = vunpack.c.l.b16 %v3971
  %v4055 = vunpack.c.h.b16 %v3971
  %v4056 = vunpack.c.l.b16 %v3972
  %v4057 = vunpack.c.h.b16 %v3972
  %v4058 = vunpack.c.l.b16 %v3973
  %v4059 = vunpack.c.h.b16 %v3973
  %v4060 = vunpack.c.l.b16 %v3974
  %v4061 = vunpack.c.h.b16 %v3974
  %v4062 = vunpack.c.l.b16 %v3975
  %v4063 = vunpack.c.h.b16 %v3975
  %v4064 = vunpack.c.l.b16 %v3976
  %v4065 = vunpack.c.h.b16 %v3976
  %v4066 = vunpack.c.l.b16 %v3977
  %v4067 = vunpack.c.h.b16 %v3977
  %v4068 = vunpack.c.l.b16 %v3978
  %v4069 = vunpack.c.h.b16 %v3978
  %v4070 = vunpack.c.l.b16 %v3979
  %v4071 = vunpack.c.h.b16 %v3979
  %v4072 = vunpack.c.l.b16 %v3980
  %v4073 = vunpack.c.h.b16 %v3980
  %v4074 = vunpack.c.l.b16 %v3981
  %v4075 = vunpack.c.h.b16 %v3981
  %v4076 = vunpack.c.l.b16 %v3982
  %v4077 = vunpack.c.h.b16 %v3982
  %v4078 = vunpack.c.l.b16 %v3983
  %v4079 = vunpack.c.h.b16 %v3983
  %v4080 = vpack.c.b16 %v4020, %v4016
  %v4081 = vpack.c.b16 %v4021, %v4017
  %v4082 = vpack.c.b16 %v4022, %v4018
  %v4083 = vpack.c.b16 %v4023, %v4019
  %v4084 = vpack.c.b16 %v4028, %v4024
  %v4085 = vpack.c.b16 %v4029, %v4025
  %v4086 = vpack.c.b16 %v4030, %v4026
  %v4087 = vpack.c.b16 %v4031, %v4027
  %v4088 = vpack.c.b16 %v4036, %v4032
  %v4089 = vpack.c.b16 %v4037, %v4033
  %v4090 = vpack.c.b16 %v4038, %v4034
  %v4091 = vpack.c.b16 %v4039, %v4035
  %v4092 = vpack.c.b16 %v4044, %v4040
  %v4093 = vpack.c.b16 %v4045, %v4041
  %v4094 = vpack.c.b16 %v4046, %v4042
  %v4095 = vpack.c.b16 %v4047, %v4043
  %v4096 = vpack.c.b16 %v4052, %v4048
  %v4097 = vpack.c.b16 %v4053, %v4049
  %v4098 = vpack.c.b16 %v4054, %v4050
  %v4099 = vpack.c.b16 %v4055, %v4051
  %v4100 = vpack.c.b16 %v4060, %v4056
  %v4101 = vpack.c.b16 %v4061, %v4057
  %v4102 = vpack.c.b16 %v4062, %v4058
  %v4103 = vpack.c.b16 %v4063, %v4059
  %v4104 = vpack.c.b16 %v4068, %v4064
  %v4105 = vpack.c.b16 %v4069, %v4065
  %v4106 = vpack.c.b16 %v4070, %v4066
  %v4107 = vpack.c.b16 %v4071, %v4067
  %v4108 = vpack.c.b16 %v4076, %v4072
  %v4109 = vpack.c.b16 %v4077, %v4073
  %v4110 = vpack.c.b16 %v4078, %v4074
  %v4111 = vpack.c.b16 %v4079, %v4075
  %4144 = vmatprep.subr.bf16.mxu0 %v4081
  %4145 = vmatpush1.bf16.msra.mxu0 %v4080
  %4146 = vmatprep.subr.bf16.mxu0 %v4085
  %4147 = vmatpush1.bf16.msra.mxu0 %v4084
  %4148 = vmatprep.subr.bf16.mxu0 %v4089
  %4149 = vmatpush1.bf16.msra.mxu0 %v4088
  %4150 = vmatprep.subr.bf16.mxu0 %v4093
  %4151 = vmatpush1.bf16.msra.mxu0 %v4092
  %4152 = vmatprep.subr.bf16.mxu0 %v4097
  %4153 = vmatpush1.bf16.msra.mxu0 %v4096
  %4154 = vmatprep.subr.bf16.mxu0 %v4101
  %4155 = vmatpush1.bf16.msra.mxu0 %v4100
  %4156 = vmatprep.subr.bf16.mxu0 %v4105
  %4157 = vmatpush1.bf16.msra.mxu0 %v4104
  %4158 = vmatprep.subr.bf16.mxu0 %v4109
  %4159 = vmatpush1.bf16.msra.mxu0 %v4108
  %4160 = vmatprep.subr.bf16.mxu0 0
  %4161 = vmatpush1.bf16.msra.mxu0 0
  %4162 = vmatprep.subr.bf16.mxu0 0
  %4163 = vmatpush1.bf16.msra.mxu0 0
  %4164 = vmatprep.subr.bf16.mxu0 0
  %4165 = vmatpush1.bf16.msra.mxu0 0
  %4166 = vmatprep.subr.bf16.mxu0 0
  %4167 = vmatpush1.bf16.msra.mxu0 0
  %4168 = vmatprep.subr.bf16.mxu0 0
  %4169 = vmatpush1.bf16.msra.mxu0 0
  %4170 = vmatprep.subr.bf16.mxu0 0
  %4171 = vmatpush1.bf16.msra.mxu0 0
  %4172 = vmatprep.subr.bf16.mxu0 0
  %4173 = vmatpush1.bf16.msra.mxu0 0
  %4174 = vmatprep.subr.bf16.mxu0 0
  %4175 = vmatpush1.bf16.msra.mxu0 0
  %4176 = vmatprep.mubr.bf16.mxu0 0
  %4177 = vmatmul.mubr.bf16.gmra.mrb[0].mxu0 %v3951
  %v4178 = vpop.f32.mrb[0].mxu0
  %v4179 = vadd.f32 0.0, %v4178
  %v4180 = vpop.f32.mrb[0].mxu0
  %v4181 = vadd.f32 0.0, %v4180
  %v4182 = vpop.f32.mrb[0].mxu0
  %v4183 = vadd.f32 0.0, %v4182
  %v4184 = vpop.f32.mrb[0].mxu0
  %v4185 = vadd.f32 0.0, %v4184
  %4186 = vdwg.mxu0
  %4187 = vmatprep.subr.bf16.mxu0 %v4083
  %4188 = vmatpush1.bf16.msra.mxu0 %v4082
  %4189 = vmatprep.subr.bf16.mxu0 %v4087
  %4190 = vmatpush1.bf16.msra.mxu0 %v4086
  %4191 = vmatprep.subr.bf16.mxu0 %v4091
  %4192 = vmatpush1.bf16.msra.mxu0 %v4090
  %4193 = vmatprep.subr.bf16.mxu0 %v4095
  %4194 = vmatpush1.bf16.msra.mxu0 %v4094
  %4195 = vmatprep.subr.bf16.mxu0 %v4099
  %4196 = vmatpush1.bf16.msra.mxu0 %v4098
  %4197 = vmatprep.subr.bf16.mxu0 %v4103
  %4198 = vmatpush1.bf16.msra.mxu0 %v4102
  %4199 = vmatprep.subr.bf16.mxu0 %v4107
  %4200 = vmatpush1.bf16.msra.mxu0 %v4106
  %4201 = vmatprep.subr.bf16.mxu0 %v4111
  %4202 = vmatpush1.bf16.msra.mxu0 %v4110
  %4203 = vmatprep.subr.bf16.mxu0 0
  %4204 = vmatpush1.bf16.msra.mxu0 0
  %4205 = vmatprep.subr.bf16.mxu0 0
  %4206 = vmatpush1.bf16.msra.mxu0 0
  %4207 = vmatprep.subr.bf16.mxu0 0
  %4208 = vmatpush1.bf16.msra.mxu0 0
  %4209 = vmatprep.subr.bf16.mxu0 0
  %4210 = vmatpush1.bf16.msra.mxu0 0
  %4211 = vmatprep.subr.bf16.mxu0 0
  %4212 = vmatpush1.bf16.msra.mxu0 0
  %4213 = vmatprep.subr.bf16.mxu0 0
  %4214 = vmatpush1.bf16.msra.mxu0 0
  %4215 = vmatprep.subr.bf16.mxu0 0
  %4216 = vmatpush1.bf16.msra.mxu0 0
  %4217 = vmatprep.subr.bf16.mxu0 0
  %4218 = vmatpush1.bf16.msra.mxu0 0
  %4219 = vmatprep.mubr.bf16.mxu0 0
  %4220 = vmatmul.mubr.bf16.gmra.mrb[0].mxu0 %v3951
  %v4221 = vpop.f32.mrb[0].mxu0
  %v4222 = vadd.f32 0.0, %v4221
  %v4223 = vpop.f32.mrb[0].mxu0
  %v4224 = vadd.f32 0.0, %v4223
  %v4225 = vpop.f32.mrb[0].mxu0
  %v4226 = vadd.f32 0.0, %v4225
  %v4227 = vpop.f32.mrb[0].mxu0
  %v4228 = vadd.f32 0.0, %v4227
  %4229 = vdwg.mxu0
  %v4230 = vld [vmem:[%s13] sm:$0xff]
  %s4231 = scalar_lea.vmem %s13, 8
  %v4232 = vld [vmem:[%s4231] sm:$0xff]
  %v4234 = vsel %vm2066, %v4232, 0
  %4236 = vmatprep.subr.mxu0 0.0
  %4237 = vmatpush1.msra.mxu0 %v4181
  %4238 = vmatprep.subr.mxu0 0.0
  %4239 = vmatpush1.msra.mxu0 %v4185
  %4240 = vmatprep.subr.mxu0 0.0
  %4241 = vmatpush1.msra.mxu0 0.0
  %4242 = vmatprep.subr.mxu0 0.0
  %4243 = vmatpush1.msra.mxu0 0.0
  %4244 = vmatprep.subr.mxu0 0.0
  %4245 = vmatpush1.msra.mxu0 0.0
  %4246 = vmatprep.subr.mxu0 0.0
  %4247 = vmatpush1.msra.mxu0 0.0
  %4248 = vmatprep.subr.mxu0 0.0
  %4249 = vmatpush1.msra.mxu0 0.0
  %4250 = vmatprep.subr.mxu0 0.0
  %4251 = vmatpush1.msra.mxu0 0.0
  %4252 = vmatprep.subr.mxu0 0.0
  %4253 = vmatpush1.msra.mxu0 0.0
  %4254 = vmatprep.subr.mxu0 0.0
  %4255 = vmatpush1.msra.mxu0 0.0
  %4256 = vmatprep.subr.mxu0 0.0
  %4257 = vmatpush1.msra.mxu0 0.0
  %4258 = vmatprep.subr.mxu0 0.0
  %4259 = vmatpush1.msra.mxu0 0.0
  %4260 = vmatprep.subr.mxu0 0.0
  %4261 = vmatpush1.msra.mxu0 0.0
  %4262 = vmatprep.subr.mxu0 0.0
  %4263 = vmatpush1.msra.mxu0 0.0
  %4264 = vmatprep.subr.mxu0 0.0
  %4265 = vmatpush1.msra.mxu0 0.0
  %4266 = vmatprep.subr.mxu0 0.0
  %4267 = vmatpush1.msra.mxu0 0.0
  %4268 = vmatprep.subr.mxu0 0.0
  %4269 = vmatpush1.msra.mxu0 0.0
  %4270 = vmatprep.subr.mxu0 0.0
  %4271 = vmatpush1.msra.mxu0 0.0
  %4272 = vmatprep.subr.mxu0 0.0
  %4273 = vmatpush1.msra.mxu0 0.0
  %4274 = vmatprep.subr.mxu0 0.0
  %4275 = vmatpush1.msra.mxu0 0.0
  %4276 = vmatprep.subr.mxu0 0.0
  %4277 = vmatpush1.msra.mxu0 0.0
  %4278 = vmatprep.subr.mxu0 0.0
  %4279 = vmatpush1.msra.mxu0 0.0
  %4280 = vmatprep.subr.mxu0 0.0
  %4281 = vmatpush1.msra.mxu0 0.0
  %4282 = vmatprep.subr.mxu0 0.0
  %4283 = vmatpush1.msra.mxu0 0.0
  %4284 = vmatprep.subr.mxu0 0.0
  %4285 = vmatpush1.msra.mxu0 0.0
  %4286 = vmatprep.subr.mxu0 0.0
  %4287 = vmatpush1.msra.mxu0 0.0
  %4288 = vmatprep.subr.mxu0 0.0
  %4289 = vmatpush1.msra.mxu0 0.0
  %4290 = vmatprep.subr.mxu0 0.0
  %4291 = vmatpush1.msra.mxu0 0.0
  %4292 = vmatprep.subr.mxu0 0.0
  %4293 = vmatpush1.msra.mxu0 0.0
  %4294 = vmatprep.subr.mxu0 0.0
  %4295 = vmatpush1.msra.mxu0 0.0
  %4296 = vmatprep.subr.mxu0 0.0
  %4297 = vmatpush1.msra.mxu0 0.0
  %4298 = vmatprep.subr.mxu0 0.0
  %4299 = vmatpush1.msra.mxu0 0.0
  %4300 = vmatprep.mubr.f32.mxu0 0.0
  %4301 = vmatmul.mubr.f32.gmra.mrb[0].mxu0 %v4234
  %v4302 = vpop.f32.mrb[0].mxu0
  %v4303 = vadd.f32 0.0, %v4302
  %v4304 = vpop.f32.mrb[0].mxu0
  %4305 = vdwg.mxu0
  %v4307 = vsel %vm2066, %v4230, 0
  %4309 = vmatprep.subr.mxu0 0.0
  %4310 = vmatpush1.msra.mxu0 %v4179
  %4311 = vmatprep.subr.mxu0 0.0
  %4312 = vmatpush1.msra.mxu0 %v4183
  %4313 = vmatprep.subr.mxu0 0.0
  %4314 = vmatpush1.msra.mxu0 0.0
  %4315 = vmatprep.subr.mxu0 0.0
  %4316 = vmatpush1.msra.mxu0 0.0
  %4317 = vmatprep.subr.mxu0 0.0
  %4318 = vmatpush1.msra.mxu0 0.0
  %4319 = vmatprep.subr.mxu0 0.0
  %4320 = vmatpush1.msra.mxu0 0.0
  %4321 = vmatprep.subr.mxu0 0.0
  %4322 = vmatpush1.msra.mxu0 0.0
  %4323 = vmatprep.subr.mxu0 0.0
  %4324 = vmatpush1.msra.mxu0 0.0
  %4325 = vmatprep.subr.mxu0 0.0
  %4326 = vmatpush1.msra.mxu0 0.0
  %4327 = vmatprep.subr.mxu0 0.0
  %4328 = vmatpush1.msra.mxu0 0.0
  %4329 = vmatprep.subr.mxu0 0.0
  %4330 = vmatpush1.msra.mxu0 0.0
  %4331 = vmatprep.subr.mxu0 0.0
  %4332 = vmatpush1.msra.mxu0 0.0
  %4333 = vmatprep.subr.mxu0 0.0
  %4334 = vmatpush1.msra.mxu0 0.0
  %4335 = vmatprep.subr.mxu0 0.0
  %4336 = vmatpush1.msra.mxu0 0.0
  %4337 = vmatprep.subr.mxu0 0.0
  %4338 = vmatpush1.msra.mxu0 0.0
  %4339 = vmatprep.subr.mxu0 0.0
  %4340 = vmatpush1.msra.mxu0 0.0
  %4341 = vmatprep.subr.mxu0 0.0
  %4342 = vmatpush1.msra.mxu0 0.0
  %4343 = vmatprep.subr.mxu0 0.0
  %4344 = vmatpush1.msra.mxu0 0.0
  %4345 = vmatprep.subr.mxu0 0.0
  %4346 = vmatpush1.msra.mxu0 0.0
  %4347 = vmatprep.subr.mxu0 0.0
  %4348 = vmatpush1.msra.mxu0 0.0
  %4349 = vmatprep.subr.mxu0 0.0
  %4350 = vmatpush1.msra.mxu0 0.0
  %4351 = vmatprep.subr.mxu0 0.0
  %4352 = vmatpush1.msra.mxu0 0.0
  %4353 = vmatprep.subr.mxu0 0.0
  %4354 = vmatpush1.msra.mxu0 0.0
  %4355 = vmatprep.subr.mxu0 0.0
  %4356 = vmatpush1.msra.mxu0 0.0
  %4357 = vmatprep.subr.mxu0 0.0
  %4358 = vmatpush1.msra.mxu0 0.0
  %4359 = vmatprep.subr.mxu0 0.0
  %4360 = vmatpush1.msra.mxu0 0.0
  %4361 = vmatprep.subr.mxu0 0.0
  %4362 = vmatpush1.msra.mxu0 0.0
  %4363 = vmatprep.subr.mxu0 0.0
  %4364 = vmatpush1.msra.mxu0 0.0
  %4365 = vmatprep.subr.mxu0 0.0
  %4366 = vmatpush1.msra.mxu0 0.0
  %4367 = vmatprep.subr.mxu0 0.0
  %4368 = vmatpush1.msra.mxu0 0.0
  %4369 = vmatprep.subr.mxu0 0.0
  %4370 = vmatpush1.msra.mxu0 0.0
  %4371 = vmatprep.subr.mxu0 0.0
  %4372 = vmatpush1.msra.mxu0 0.0
  %4373 = vmatprep.mubr.f32.mxu0 0.0
  %4374 = vmatmul.mubr.f32.gmra.mrb[0].mxu0 %v4307
  %v4375 = vpop.f32.mrb[0].mxu0
  %v4376 = vadd.f32 %v4303, %v4375
  %v4377 = vpop.f32.mrb[0].mxu0
  %4378 = vdwg.mxu0
  %s4379 = scalar_lea.vmem %s13, 16
  %v4380 = vld [vmem:[%s4379] sm:$0xff]
  %v4382 = vsel %vm2066, %v4380, 0
  %4384 = vmatprep.subr.mxu0 0.0
  %4385 = vmatpush1.msra.mxu0 %v4222
  %4386 = vmatprep.subr.mxu0 0.0
  %4387 = vmatpush1.msra.mxu0 %v4226
  %4388 = vmatprep.subr.mxu0 0.0
  %4389 = vmatpush1.msra.mxu0 0.0
  %4390 = vmatprep.subr.mxu0 0.0
  %4391 = vmatpush1.msra.mxu0 0.0
  %4392 = vmatprep.subr.mxu0 0.0
  %4393 = vmatpush1.msra.mxu0 0.0
  %4394 = vmatprep.subr.mxu0 0.0
  %4395 = vmatpush1.msra.mxu0 0.0
  %4396 = vmatprep.subr.mxu0 0.0
  %4397 = vmatpush1.msra.mxu0 0.0
  %4398 = vmatprep.subr.mxu0 0.0
  %4399 = vmatpush1.msra.mxu0 0.0
  %4400 = vmatprep.subr.mxu0 0.0
  %4401 = vmatpush1.msra.mxu0 0.0
  %4402 = vmatprep.subr.mxu0 0.0
  %4403 = vmatpush1.msra.mxu0 0.0
  %4404 = vmatprep.subr.mxu0 0.0
  %4405 = vmatpush1.msra.mxu0 0.0
  %4406 = vmatprep.subr.mxu0 0.0
  %4407 = vmatpush1.msra.mxu0 0.0
  %4408 = vmatprep.subr.mxu0 0.0
  %4409 = vmatpush1.msra.mxu0 0.0
  %4410 = vmatprep.subr.mxu0 0.0
  %4411 = vmatpush1.msra.mxu0 0.0
  %4412 = vmatprep.subr.mxu0 0.0
  %4413 = vmatpush1.msra.mxu0 0.0
  %4414 = vmatprep.subr.mxu0 0.0
  %4415 = vmatpush1.msra.mxu0 0.0
  %4416 = vmatprep.subr.mxu0 0.0
  %4417 = vmatpush1.msra.mxu0 0.0
  %4418 = vmatprep.subr.mxu0 0.0
  %4419 = vmatpush1.msra.mxu0 0.0
  %4420 = vmatprep.subr.mxu0 0.0
  %4421 = vmatpush1.msra.mxu0 0.0
  %4422 = vmatprep.subr.mxu0 0.0
  %4423 = vmatpush1.msra.mxu0 0.0
  %4424 = vmatprep.subr.mxu0 0.0
  %4425 = vmatpush1.msra.mxu0 0.0
  %4426 = vmatprep.subr.mxu0 0.0
  %4427 = vmatpush1.msra.mxu0 0.0
  %4428 = vmatprep.subr.mxu0 0.0
  %4429 = vmatpush1.msra.mxu0 0.0
  %4430 = vmatprep.subr.mxu0 0.0
  %4431 = vmatpush1.msra.mxu0 0.0
  %4432 = vmatprep.subr.mxu0 0.0
  %4433 = vmatpush1.msra.mxu0 0.0
  %4434 = vmatprep.subr.mxu0 0.0
  %4435 = vmatpush1.msra.mxu0 0.0
  %4436 = vmatprep.subr.mxu0 0.0
  %4437 = vmatpush1.msra.mxu0 0.0
  %4438 = vmatprep.subr.mxu0 0.0
  %4439 = vmatpush1.msra.mxu0 0.0
  %4440 = vmatprep.subr.mxu0 0.0
  %4441 = vmatpush1.msra.mxu0 0.0
  %4442 = vmatprep.subr.mxu0 0.0
  %4443 = vmatpush1.msra.mxu0 0.0
  %4444 = vmatprep.subr.mxu0 0.0
  %4445 = vmatpush1.msra.mxu0 0.0
  %4446 = vmatprep.subr.mxu0 0.0
  %4447 = vmatpush1.msra.mxu0 0.0
  %4448 = vmatprep.mubr.f32.mxu0 0.0
  %4449 = vmatmul.mubr.f32.gmra.mrb[0].mxu0 %v4382
  %v4450 = vpop.f32.mrb[0].mxu0
  %v4451 = vadd.f32 0.0, %v4450
  %v4452 = vpop.f32.mrb[0].mxu0
  %4453 = vdwg.mxu0
  %v4454 = vadd.f32 %v4376, %v4451
  %s4455 = scalar_lea.vmem %s13, 24
  %v4456 = vld [vmem:[%s4455] sm:$0xff]
  %v4458 = vsel %vm2066, %v4456, 0
  %4460 = vmatprep.subr.mxu0 0.0
  %4461 = vmatpush1.msra.mxu0 %v4224
  %4462 = vmatprep.subr.mxu0 0.0
  %4463 = vmatpush1.msra.mxu0 %v4228
  %4464 = vmatprep.subr.mxu0 0.0
  %4465 = vmatpush1.msra.mxu0 0.0
  %4466 = vmatprep.subr.mxu0 0.0
  %4467 = vmatpush1.msra.mxu0 0.0
  %4468 = vmatprep.subr.mxu0 0.0
  %4469 = vmatpush1.msra.mxu0 0.0
  %4470 = vmatprep.subr.mxu0 0.0
  %4471 = vmatpush1.msra.mxu0 0.0
  %4472 = vmatprep.subr.mxu0 0.0
  %4473 = vmatpush1.msra.mxu0 0.0
  %4474 = vmatprep.subr.mxu0 0.0
  %4475 = vmatpush1.msra.mxu0 0.0
  %4476 = vmatprep.subr.mxu0 0.0
  %4477 = vmatpush1.msra.mxu0 0.0
  %4478 = vmatprep.subr.mxu0 0.0
  %4479 = vmatpush1.msra.mxu0 0.0
  %4480 = vmatprep.subr.mxu0 0.0
  %4481 = vmatpush1.msra.mxu0 0.0
  %4482 = vmatprep.subr.mxu0 0.0
  %4483 = vmatpush1.msra.mxu0 0.0
  %4484 = vmatprep.subr.mxu0 0.0
  %4485 = vmatpush1.msra.mxu0 0.0
  %4486 = vmatprep.subr.mxu0 0.0
  %4487 = vmatpush1.msra.mxu0 0.0
  %4488 = vmatprep.subr.mxu0 0.0
  %4489 = vmatpush1.msra.mxu0 0.0
  %4490 = vmatprep.subr.mxu0 0.0
  %4491 = vmatpush1.msra.mxu0 0.0
  %4492 = vmatprep.subr.mxu0 0.0
  %4493 = vmatpush1.msra.mxu0 0.0
  %4494 = vmatprep.subr.mxu0 0.0
  %4495 = vmatpush1.msra.mxu0 0.0
  %4496 = vmatprep.subr.mxu0 0.0
  %4497 = vmatpush1.msra.mxu0 0.0
  %4498 = vmatprep.subr.mxu0 0.0
  %4499 = vmatpush1.msra.mxu0 0.0
  %4500 = vmatprep.subr.mxu0 0.0
  %4501 = vmatpush1.msra.mxu0 0.0
  %4502 = vmatprep.subr.mxu0 0.0
  %4503 = vmatpush1.msra.mxu0 0.0
  %4504 = vmatprep.subr.mxu0 0.0
  %4505 = vmatpush1.msra.mxu0 0.0
  %4506 = vmatprep.subr.mxu0 0.0
  %4507 = vmatpush1.msra.mxu0 0.0
  %4508 = vmatprep.subr.mxu0 0.0
  %4509 = vmatpush1.msra.mxu0 0.0
  %4510 = vmatprep.subr.mxu0 0.0
  %4511 = vmatpush1.msra.mxu0 0.0
  %4512 = vmatprep.subr.mxu0 0.0
  %4513 = vmatpush1.msra.mxu0 0.0
  %4514 = vmatprep.subr.mxu0 0.0
  %4515 = vmatpush1.msra.mxu0 0.0
  %4516 = vmatprep.subr.mxu0 0.0
  %4517 = vmatpush1.msra.mxu0 0.0
  %4518 = vmatprep.subr.mxu0 0.0
  %4519 = vmatpush1.msra.mxu0 0.0
  %4520 = vmatprep.subr.mxu0 0.0
  %4521 = vmatpush1.msra.mxu0 0.0
  %4522 = vmatprep.subr.mxu0 0.0
  %4523 = vmatpush1.msra.mxu0 0.0
  %4524 = vmatprep.mubr.f32.mxu0 0.0
  %4525 = vmatmul.mubr.f32.gmra.mrb[0].mxu0 %v4458
  %v4526 = vpop.f32.mrb[0].mxu0
  %v4527 = vadd.f32 0.0, %v4526
  %v4528 = vpop.f32.mrb[0].mxu0
  %4529 = vdwg.mxu0
  %v4530 = vadd.f32 %v4454, %v4527
  %s4531 = scalar_lea.vmem %s10, 1
  %v4532 = vld [vmem:[%s4531] sm:$0x1]
  %v4534 = vlaneseq
  %v4535 = vshrl.u32 %v4534, 7
  %v4536 = vsub.s32 0, %v4535
  %v4537 = vrot.slane %v4532, %v4536
  %v4539 = vadd.f32 %v4530, %v4537
  %v4540 = vmul.f32 %v4539, 0.2
  %v4541 = vmax.f32 %v4539, %v4540
  %v4542 = vpack.c.bf16 %v4541, %v4541
  %v4543 = vld [vmem:[%s16] sm:$0xff]
  %v4544 = vld [vmem:[%s16 + $0x8] sm:$0xff]
  %v4545 = vld [vmem:[%s16 + $0x10] sm:$0xff]
  %v4546 = vld [vmem:[%s16 + $0x18] sm:$0xff]
  %v4547 = vld [vmem:[%s16 + $0x20] sm:$0xff]
  %v4548 = vld [vmem:[%s16 + $0x28] sm:$0xff]
  %v4549 = vld [vmem:[%s16 + $0x30] sm:$0xff]
  %v4550 = vld [vmem:[%s16 + $0x38] sm:$0xff]
  %v4551 = vld [vmem:[%s16 + $0x40] sm:$0xff]
  %v4552 = vld [vmem:[%s16 + $0x48] sm:$0xff]
  %v4553 = vld [vmem:[%s16 + $0x50] sm:$0xff]
  %v4554 = vld [vmem:[%s16 + $0x58] sm:$0xff]
  %v4555 = vld [vmem:[%s16 + $0x60] sm:$0xff]
  %v4556 = vld [vmem:[%s16 + $0x68] sm:$0xff]
  %v4557 = vld [vmem:[%s16 + $0x70] sm:$0xff]
  %v4558 = vld [vmem:[%s16 + $0x78] sm:$0xff]
  %v4559 = vld [vmem:[%s16 + $0x80] sm:$0xff]
  %v4560 = vld [vmem:[%s16 + $0x88] sm:$0xff]
  %v4561 = vld [vmem:[%s16 + $0x90] sm:$0xff]
  %v4562 = vld [vmem:[%s16 + $0x98] sm:$0xff]
  %v4563 = vld [vmem:[%s16 + $0xa0] sm:$0xff]
  %v4564 = vld [vmem:[%s16 + $0xa8] sm:$0xff]
  %v4565 = vld [vmem:[%s16 + $0xb0] sm:$0xff]
  %v4566 = vld [vmem:[%s16 + $0xb8] sm:$0xff]
  %v4567 = vld [vmem:[%s16 + $0xc0] sm:$0xff]
  %v4568 = vld [vmem:[%s16 + $0xc8] sm:$0xff]
  %v4569 = vld [vmem:[%s16 + $0xd0] sm:$0xff]
  %v4570 = vld [vmem:[%s16 + $0xd8] sm:$0xff]
  %v4571 = vld [vmem:[%s16 + $0xe0] sm:$0xff]
  %v4572 = vld [vmem:[%s16 + $0xe8] sm:$0xff]
  %v4573 = vld [vmem:[%s16 + $0xf0] sm:$0xff]
  %v4574 = vld [vmem:[%s16 + $0xf8] sm:$0xff]
  %v4607 = vunpack.c.l.b16 %v4543
  %v4608 = vunpack.c.h.b16 %v4543
  %v4609 = vunpack.c.l.b16 %v4544
  %v4610 = vunpack.c.h.b16 %v4544
  %v4611 = vunpack.c.l.b16 %v4545
  %v4612 = vunpack.c.h.b16 %v4545
  %v4613 = vunpack.c.l.b16 %v4546
  %v4614 = vunpack.c.h.b16 %v4546
  %v4615 = vunpack.c.l.b16 %v4547
  %v4616 = vunpack.c.h.b16 %v4547
  %v4617 = vunpack.c.l.b16 %v4548
  %v4618 = vunpack.c.h.b16 %v4548
  %v4619 = vunpack.c.l.b16 %v4549
  %v4620 = vunpack.c.h.b16 %v4549
  %v4621 = vunpack.c.l.b16 %v4550
  %v4622 = vunpack.c.h.b16 %v4550
  %v4623 = vunpack.c.l.b16 %v4551
  %v4624 = vunpack.c.h.b16 %v4551
  %v4625 = vunpack.c.l.b16 %v4552
  %v4626 = vunpack.c.h.b16 %v4552
  %v4627 = vunpack.c.l.b16 %v4553
  %v4628 = vunpack.c.h.b16 %v4553
  %v4629 = vunpack.c.l.b16 %v4554
  %v4630 = vunpack.c.h.b16 %v4554
  %v4631 = vunpack.c.l.b16 %v4555
  %v4632 = vunpack.c.h.b16 %v4555
  %v4633 = vunpack.c.l.b16 %v4556
  %v4634 = vunpack.c.h.b16 %v4556
  %v4635 = vunpack.c.l.b16 %v4557
  %v4636 = vunpack.c.h.b16 %v4557
  %v4637 = vunpack.c.l.b16 %v4558
  %v4638 = vunpack.c.h.b16 %v4558
  %v4639 = vunpack.c.l.b16 %v4559
  %v4640 = vunpack.c.h.b16 %v4559
  %v4641 = vunpack.c.l.b16 %v4560
  %v4642 = vunpack.c.h.b16 %v4560
  %v4643 = vunpack.c.l.b16 %v4561
  %v4644 = vunpack.c.h.b16 %v4561
  %v4645 = vunpack.c.l.b16 %v4562
  %v4646 = vunpack.c.h.b16 %v4562
  %v4647 = vunpack.c.l.b16 %v4563
  %v4648 = vunpack.c.h.b16 %v4563
  %v4649 = vunpack.c.l.b16 %v4564
  %v4650 = vunpack.c.h.b16 %v4564
  %v4651 = vunpack.c.l.b16 %v4565
  %v4652 = vunpack.c.h.b16 %v4565
  %v4653 = vunpack.c.l.b16 %v4566
  %v4654 = vunpack.c.h.b16 %v4566
  %v4655 = vunpack.c.l.b16 %v4567
  %v4656 = vunpack.c.h.b16 %v4567
  %v4657 = vunpack.c.l.b16 %v4568
  %v4658 = vunpack.c.h.b16 %v4568
  %v4659 = vunpack.c.l.b16 %v4569
  %v4660 = vunpack.c.h.b16 %v4569
  %v4661 = vunpack.c.l.b16 %v4570
  %v4662 = vunpack.c.h.b16 %v4570
  %v4663 = vunpack.c.l.b16 %v4571
  %v4664 = vunpack.c.h.b16 %v4571
  %v4665 = vunpack.c.l.b16 %v4572
  %v4666 = vunpack.c.h.b16 %v4572
  %v4667 = vunpack.c.l.b16 %v4573
  %v4668 = vunpack.c.h.b16 %v4573
  %v4669 = vunpack.c.l.b16 %v4574
  %v4670 = vunpack.c.h.b16 %v4574
  %v4671 = vpack.c.b16 %v4611, %v4607
  %v4672 = vpack.c.b16 %v4612, %v4608
  %v4673 = vpack.c.b16 %v4613, %v4609
  %v4674 = vpack.c.b16 %v4614, %v4610
  %v4675 = vpack.c.b16 %v4619, %v4615
  %v4676 = vpack.c.b16 %v4620, %v4616
  %v4677 = vpack.c.b16 %v4621, %v4617
  %v4678 = vpack.c.b16 %v4622, %v4618
  %v4679 = vpack.c.b16 %v4627, %v4623
  %v4680 = vpack.c.b16 %v4628, %v4624
  %v4681 = vpack.c.b16 %v4629, %v4625
  %v4682 = vpack.c.b16 %v4630, %v4626
  %v4683 = vpack.c.b16 %v4635, %v4631
  %v4684 = vpack.c.b16 %v4636, %v4632
  %v4685 = vpack.c.b16 %v4637, %v4633
  %v4686 = vpack.c.b16 %v4638, %v4634
  %v4687 = vpack.c.b16 %v4643, %v4639
  %v4688 = vpack.c.b16 %v4644, %v4640
  %v4689 = vpack.c.b16 %v4645, %v4641
  %v4690 = vpack.c.b16 %v4646, %v4642
  %v4691 = vpack.c.b16 %v4651, %v4647
  %v4692 = vpack.c.b16 %v4652, %v4648
  %v4693 = vpack.c.b16 %v4653, %v4649
  %v4694 = vpack.c.b16 %v4654, %v4650
  %v4695 = vpack.c.b16 %v4659, %v4655
  %v4696 = vpack.c.b16 %v4660, %v4656
  %v4697 = vpack.c.b16 %v4661, %v4657
  %v4698 = vpack.c.b16 %v4662, %v4658
  %v4699 = vpack.c.b16 %v4667, %v4663
  %v4700 = vpack.c.b16 %v4668, %v4664
  %v4701 = vpack.c.b16 %v4669, %v4665
  %v4702 = vpack.c.b16 %v4670, %v4666
  %4735 = vmatprep.subr.bf16.mxu0 %v4672
  %4736 = vmatpush1.bf16.msra.mxu0 %v4671
  %4737 = vmatprep.subr.bf16.mxu0 %v4676
  %4738 = vmatpush1.bf16.msra.mxu0 %v4675
  %4739 = vmatprep.subr.bf16.mxu0 %v4680
  %4740 = vmatpush1.bf16.msra.mxu0 %v4679
  %4741 = vmatprep.subr.bf16.mxu0 %v4684
  %4742 = vmatpush1.bf16.msra.mxu0 %v4683
  %4743 = vmatprep.subr.bf16.mxu0 %v4688
  %4744 = vmatpush1.bf16.msra.mxu0 %v4687
  %4745 = vmatprep.subr.bf16.mxu0 %v4692
  %4746 = vmatpush1.bf16.msra.mxu0 %v4691
  %4747 = vmatprep.subr.bf16.mxu0 %v4696
  %4748 = vmatpush1.bf16.msra.mxu0 %v4695
  %4749 = vmatprep.subr.bf16.mxu0 %v4700
  %4750 = vmatpush1.bf16.msra.mxu0 %v4699
  %4751 = vmatprep.subr.bf16.mxu0 0
  %4752 = vmatpush1.bf16.msra.mxu0 0
  %4753 = vmatprep.subr.bf16.mxu0 0
  %4754 = vmatpush1.bf16.msra.mxu0 0
  %4755 = vmatprep.subr.bf16.mxu0 0
  %4756 = vmatpush1.bf16.msra.mxu0 0
  %4757 = vmatprep.subr.bf16.mxu0 0
  %4758 = vmatpush1.bf16.msra.mxu0 0
  %4759 = vmatprep.subr.bf16.mxu0 0
  %4760 = vmatpush1.bf16.msra.mxu0 0
  %4761 = vmatprep.subr.bf16.mxu0 0
  %4762 = vmatpush1.bf16.msra.mxu0 0
  %4763 = vmatprep.subr.bf16.mxu0 0
  %4764 = vmatpush1.bf16.msra.mxu0 0
  %4765 = vmatprep.subr.bf16.mxu0 0
  %4766 = vmatpush1.bf16.msra.mxu0 0
  %4767 = vmatprep.mubr.bf16.mxu0 0
  %4768 = vmatmul.mubr.bf16.gmra.mrb[0].mxu0 %v4542
  %v4769 = vpop.f32.mrb[0].mxu0
  %v4770 = vadd.f32 0.0, %v4769
  %v4771 = vpop.f32.mrb[0].mxu0
  %v4772 = vadd.f32 0.0, %v4771
  %v4773 = vpop.f32.mrb[0].mxu0
  %v4774 = vpop.f32.mrb[0].mxu0
  %4775 = vdwg.mxu0
  %4776 = vmatprep.subr.bf16.mxu0 %v4674
  %4777 = vmatpush1.bf16.msra.mxu0 %v4673
  %4778 = vmatprep.subr.bf16.mxu0 %v4678
  %4779 = vmatpush1.bf16.msra.mxu0 %v4677
  %4780 = vmatprep.subr.bf16.mxu0 %v4682
  %4781 = vmatpush1.bf16.msra.mxu0 %v4681
  %4782 = vmatprep.subr.bf16.mxu0 %v4686
  %4783 = vmatpush1.bf16.msra.mxu0 %v4685
  %4784 = vmatprep.subr.bf16.mxu0 %v4690
  %4785 = vmatpush1.bf16.msra.mxu0 %v4689
  %4786 = vmatprep.subr.bf16.mxu0 %v4694
  %4787 = vmatpush1.bf16.msra.mxu0 %v4693
  %4788 = vmatprep.subr.bf16.mxu0 %v4698
  %4789 = vmatpush1.bf16.msra.mxu0 %v4697
  %4790 = vmatprep.subr.bf16.mxu0 %v4702
  %4791 = vmatpush1.bf16.msra.mxu0 %v4701
  %4792 = vmatprep.subr.bf16.mxu0 0
  %4793 = vmatpush1.bf16.msra.mxu0 0
  %4794 = vmatprep.subr.bf16.mxu0 0
  %4795 = vmatpush1.bf16.msra.mxu0 0
  %4796 = vmatprep.subr.bf16.mxu0 0
  %4797 = vmatpush1.bf16.msra.mxu0 0
  %4798 = vmatprep.subr.bf16.mxu0 0
  %4799 = vmatpush1.bf16.msra.mxu0 0
  %4800 = vmatprep.subr.bf16.mxu0 0
  %4801 = vmatpush1.bf16.msra.mxu0 0
  %4802 = vmatprep.subr.bf16.mxu0 0
  %4803 = vmatpush1.bf16.msra.mxu0 0
  %4804 = vmatprep.subr.bf16.mxu0 0
  %4805 = vmatpush1.bf16.msra.mxu0 0
  %4806 = vmatprep.subr.bf16.mxu0 0
  %4807 = vmatpush1.bf16.msra.mxu0 0
  %4808 = vmatprep.mubr.bf16.mxu0 0
  %4809 = vmatmul.mubr.bf16.gmra.mrb[0].mxu0 %v4542
  %v4810 = vpop.f32.mrb[0].mxu0
  %v4811 = vadd.f32 0.0, %v4810
  %v4812 = vpop.f32.mrb[0].mxu0
  %v4813 = vadd.f32 0.0, %v4812
  %v4814 = vpop.f32.mrb[0].mxu0
  %v4815 = vpop.f32.mrb[0].mxu0
  %4816 = vdwg.mxu0
  %v4817 = vld [vmem:[%s15] sm:$0xff]
  %s4818 = scalar_lea.vmem %s15, 8
  %v4819 = vld [vmem:[%s4818] sm:$0xff]
  %vm4820 = vcmask 64512
  %v4822 = vsel %vm4820, %v4819, 0
  %4824 = vmatprep.subr.mxu0 0.0
  %4825 = vmatpush1.msra.mxu0 %v4772
  %4826 = vmatprep.subr.mxu0 0.0
  %4827 = vmatpush1.msra.mxu0 0.0
  %4828 = vmatprep.subr.mxu0 0.0
  %4829 = vmatpush1.msra.mxu0 0.0
  %4830 = vmatprep.subr.mxu0 0.0
  %4831 = vmatpush1.msra.mxu0 0.0
  %4832 = vmatprep.subr.mxu0 0.0
  %4833 = vmatpush1.msra.mxu0 0.0
  %4834 = vmatprep.subr.mxu0 0.0
  %4835 = vmatpush1.msra.mxu0 0.0
  %4836 = vmatprep.subr.mxu0 0.0
  %4837 = vmatpush1.msra.mxu0 0.0
  %4838 = vmatprep.subr.mxu0 0.0
  %4839 = vmatpush1.msra.mxu0 0.0
  %4840 = vmatprep.subr.mxu0 0.0
  %4841 = vmatpush1.msra.mxu0 0.0
  %4842 = vmatprep.subr.mxu0 0.0
  %4843 = vmatpush1.msra.mxu0 0.0
  %4844 = vmatprep.subr.mxu0 0.0
  %4845 = vmatpush1.msra.mxu0 0.0
  %4846 = vmatprep.subr.mxu0 0.0
  %4847 = vmatpush1.msra.mxu0 0.0
  %4848 = vmatprep.subr.mxu0 0.0
  %4849 = vmatpush1.msra.mxu0 0.0
  %4850 = vmatprep.subr.mxu0 0.0
  %4851 = vmatpush1.msra.mxu0 0.0
  %4852 = vmatprep.subr.mxu0 0.0
  %4853 = vmatpush1.msra.mxu0 0.0
  %4854 = vmatprep.subr.mxu0 0.0
  %4855 = vmatpush1.msra.mxu0 0.0
  %4856 = vmatprep.subr.mxu0 0.0
  %4857 = vmatpush1.msra.mxu0 0.0
  %4858 = vmatprep.subr.mxu0 0.0
  %4859 = vmatpush1.msra.mxu0 0.0
  %4860 = vmatprep.subr.mxu0 0.0
  %4861 = vmatpush1.msra.mxu0 0.0
  %4862 = vmatprep.subr.mxu0 0.0
  %4863 = vmatpush1.msra.mxu0 0.0
  %4864 = vmatprep.subr.mxu0 0.0
  %4865 = vmatpush1.msra.mxu0 0.0
  %4866 = vmatprep.subr.mxu0 0.0
  %4867 = vmatpush1.msra.mxu0 0.0
  %4868 = vmatprep.subr.mxu0 0.0
  %4869 = vmatpush1.msra.mxu0 0.0
  %4870 = vmatprep.subr.mxu0 0.0
  %4871 = vmatpush1.msra.mxu0 0.0
  %4872 = vmatprep.subr.mxu0 0.0
  %4873 = vmatpush1.msra.mxu0 0.0
  %4874 = vmatprep.subr.mxu0 0.0
  %4875 = vmatpush1.msra.mxu0 0.0
  %4876 = vmatprep.subr.mxu0 0.0
  %4877 = vmatpush1.msra.mxu0 0.0
  %4878 = vmatprep.subr.mxu0 0.0
  %4879 = vmatpush1.msra.mxu0 0.0
  %4880 = vmatprep.subr.mxu0 0.0
  %4881 = vmatpush1.msra.mxu0 0.0
  %4882 = vmatprep.subr.mxu0 0.0
  %4883 = vmatpush1.msra.mxu0 0.0
  %4884 = vmatprep.subr.mxu0 0.0
  %4885 = vmatpush1.msra.mxu0 0.0
  %4886 = vmatprep.subr.mxu0 0.0
  %4887 = vmatpush1.msra.mxu0 0.0
  %4888 = vmatprep.mubr.f32.mxu0 0.0
  %4889 = vmatmul.mubr.f32.gmra.mrb[0].mxu0 %v4822
  %v4890 = vpop.f32.mrb[0].mxu0
  %v4891 = vadd.f32 0.0, %v4890
  %v4892 = vpop.f32.mrb[0].mxu0
  %4893 = vdwg.mxu0
  %v4895 = vsel %vm4820, %v4817, 0
  %4897 = vmatprep.subr.mxu0 0.0
  %4898 = vmatpush1.msra.mxu0 %v4770
  %4899 = vmatprep.subr.mxu0 0.0
  %4900 = vmatpush1.msra.mxu0 0.0
  %4901 = vmatprep.subr.mxu0 0.0
  %4902 = vmatpush1.msra.mxu0 0.0
  %4903 = vmatprep.subr.mxu0 0.0
  %4904 = vmatpush1.msra.mxu0 0.0
  %4905 = vmatprep.subr.mxu0 0.0
  %4906 = vmatpush1.msra.mxu0 0.0
  %4907 = vmatprep.subr.mxu0 0.0
  %4908 = vmatpush1.msra.mxu0 0.0
  %4909 = vmatprep.subr.mxu0 0.0
  %4910 = vmatpush1.msra.mxu0 0.0
  %4911 = vmatprep.subr.mxu0 0.0
  %4912 = vmatpush1.msra.mxu0 0.0
  %4913 = vmatprep.subr.mxu0 0.0
  %4914 = vmatpush1.msra.mxu0 0.0
  %4915 = vmatprep.subr.mxu0 0.0
  %4916 = vmatpush1.msra.mxu0 0.0
  %4917 = vmatprep.subr.mxu0 0.0
  %4918 = vmatpush1.msra.mxu0 0.0
  %4919 = vmatprep.subr.mxu0 0.0
  %4920 = vmatpush1.msra.mxu0 0.0
  %4921 = vmatprep.subr.mxu0 0.0
  %4922 = vmatpush1.msra.mxu0 0.0
  %4923 = vmatprep.subr.mxu0 0.0
  %4924 = vmatpush1.msra.mxu0 0.0
  %4925 = vmatprep.subr.mxu0 0.0
  %4926 = vmatpush1.msra.mxu0 0.0
  %4927 = vmatprep.subr.mxu0 0.0
  %4928 = vmatpush1.msra.mxu0 0.0
  %4929 = vmatprep.subr.mxu0 0.0
  %4930 = vmatpush1.msra.mxu0 0.0
  %4931 = vmatprep.subr.mxu0 0.0
  %4932 = vmatpush1.msra.mxu0 0.0
  %4933 = vmatprep.subr.mxu0 0.0
  %4934 = vmatpush1.msra.mxu0 0.0
  %4935 = vmatprep.subr.mxu0 0.0
  %4936 = vmatpush1.msra.mxu0 0.0
  %4937 = vmatprep.subr.mxu0 0.0
  %4938 = vmatpush1.msra.mxu0 0.0
  %4939 = vmatprep.subr.mxu0 0.0
  %4940 = vmatpush1.msra.mxu0 0.0
  %4941 = vmatprep.subr.mxu0 0.0
  %4942 = vmatpush1.msra.mxu0 0.0
  %4943 = vmatprep.subr.mxu0 0.0
  %4944 = vmatpush1.msra.mxu0 0.0
  %4945 = vmatprep.subr.mxu0 0.0
  %4946 = vmatpush1.msra.mxu0 0.0
  %4947 = vmatprep.subr.mxu0 0.0
  %4948 = vmatpush1.msra.mxu0 0.0
  %4949 = vmatprep.subr.mxu0 0.0
  %4950 = vmatpush1.msra.mxu0 0.0
  %4951 = vmatprep.subr.mxu0 0.0
  %4952 = vmatpush1.msra.mxu0 0.0
  %4953 = vmatprep.subr.mxu0 0.0
  %4954 = vmatpush1.msra.mxu0 0.0
  %4955 = vmatprep.subr.mxu0 0.0
  %4956 = vmatpush1.msra.mxu0 0.0
  %4957 = vmatprep.subr.mxu0 0.0
  %4958 = vmatpush1.msra.mxu0 0.0
  %4959 = vmatprep.subr.mxu0 0.0
  %4960 = vmatpush1.msra.mxu0 0.0
  %4961 = vmatprep.mubr.f32.mxu0 0.0
  %4962 = vmatmul.mubr.f32.gmra.mrb[0].mxu0 %v4895
  %v4963 = vpop.f32.mrb[0].mxu0
  %v4964 = vadd.f32 %v4891, %v4963
  %v4965 = vpop.f32.mrb[0].mxu0
  %4966 = vdwg.mxu0
  %s4967 = scalar_lea.vmem %s15, 16
  %v4968 = vld [vmem:[%s4967] sm:$0xff]
  %v4970 = vsel %vm4820, %v4968, 0
  %4972 = vmatprep.subr.mxu0 0.0
  %4973 = vmatpush1.msra.mxu0 %v4811
  %4974 = vmatprep.subr.mxu0 0.0
  %4975 = vmatpush1.msra.mxu0 0.0
  %4976 = vmatprep.subr.mxu0 0.0
  %4977 = vmatpush1.msra.mxu0 0.0
  %4978 = vmatprep.subr.mxu0 0.0
  %4979 = vmatpush1.msra.mxu0 0.0
  %4980 = vmatprep.subr.mxu0 0.0
  %4981 = vmatpush1.msra.mxu0 0.0
  %4982 = vmatprep.subr.mxu0 0.0
  %4983 = vmatpush1.msra.mxu0 0.0
  %4984 = vmatprep.subr.mxu0 0.0
  %4985 = vmatpush1.msra.mxu0 0.0
  %4986 = vmatprep.subr.mxu0 0.0
  %4987 = vmatpush1.msra.mxu0 0.0
  %4988 = vmatprep.subr.mxu0 0.0
  %4989 = vmatpush1.msra.mxu0 0.0
  %4990 = vmatprep.subr.mxu0 0.0
  %4991 = vmatpush1.msra.mxu0 0.0
  %4992 = vmatprep.subr.mxu0 0.0
  %4993 = vmatpush1.msra.mxu0 0.0
  %4994 = vmatprep.subr.mxu0 0.0
  %4995 = vmatpush1.msra.mxu0 0.0
  %4996 = vmatprep.subr.mxu0 0.0
  %4997 = vmatpush1.msra.mxu0 0.0
  %4998 = vmatprep.subr.mxu0 0.0
  %4999 = vmatpush1.msra.mxu0 0.0
  %5000 = vmatprep.subr.mxu0 0.0
  %5001 = vmatpush1.msra.mxu0 0.0
  %5002 = vmatprep.subr.mxu0 0.0
  %5003 = vmatpush1.msra.mxu0 0.0
  %5004 = vmatprep.subr.mxu0 0.0
  %5005 = vmatpush1.msra.mxu0 0.0
  %5006 = vmatprep.subr.mxu0 0.0
  %5007 = vmatpush1.msra.mxu0 0.0
  %5008 = vmatprep.subr.mxu0 0.0
  %5009 = vmatpush1.msra.mxu0 0.0
  %5010 = vmatprep.subr.mxu0 0.0
  %5011 = vmatpush1.msra.mxu0 0.0
  %5012 = vmatprep.subr.mxu0 0.0
  %5013 = vmatpush1.msra.mxu0 0.0
  %5014 = vmatprep.subr.mxu0 0.0
  %5015 = vmatpush1.msra.mxu0 0.0
  %5016 = vmatprep.subr.mxu0 0.0
  %5017 = vmatpush1.msra.mxu0 0.0
  %5018 = vmatprep.subr.mxu0 0.0
  %5019 = vmatpush1.msra.mxu0 0.0
  %5020 = vmatprep.subr.mxu0 0.0
  %5021 = vmatpush1.msra.mxu0 0.0
  %5022 = vmatprep.subr.mxu0 0.0
  %5023 = vmatpush1.msra.mxu0 0.0
  %5024 = vmatprep.subr.mxu0 0.0
  %5025 = vmatpush1.msra.mxu0 0.0
  %5026 = vmatprep.subr.mxu0 0.0
  %5027 = vmatpush1.msra.mxu0 0.0
  %5028 = vmatprep.subr.mxu0 0.0
  %5029 = vmatpush1.msra.mxu0 0.0
  %5030 = vmatprep.subr.mxu0 0.0
  %5031 = vmatpush1.msra.mxu0 0.0
  %5032 = vmatprep.subr.mxu0 0.0
  %5033 = vmatpush1.msra.mxu0 0.0
  %5034 = vmatprep.subr.mxu0 0.0
  %5035 = vmatpush1.msra.mxu0 0.0
  %5036 = vmatprep.mubr.f32.mxu0 0.0
  %5037 = vmatmul.mubr.f32.gmra.mrb[0].mxu0 %v4970
  %v5038 = vpop.f32.mrb[0].mxu0
  %v5039 = vadd.f32 0.0, %v5038
  %v5040 = vpop.f32.mrb[0].mxu0
  %5041 = vdwg.mxu0
  %v5042 = vadd.f32 %v4964, %v5039
  %s5043 = scalar_lea.vmem %s15, 24
  %v5044 = vld [vmem:[%s5043] sm:$0xff]
  %v5046 = vsel %vm4820, %v5044, 0
  %5048 = vmatprep.subr.mxu0 0.0
  %5049 = vmatpush1.msra.mxu0 %v4813
  %5050 = vmatprep.subr.mxu0 0.0
  %5051 = vmatpush1.msra.mxu0 0.0
  %5052 = vmatprep.subr.mxu0 0.0
  %5053 = vmatpush1.msra.mxu0 0.0
  %5054 = vmatprep.subr.mxu0 0.0
  %5055 = vmatpush1.msra.mxu0 0.0
  %5056 = vmatprep.subr.mxu0 0.0
  %5057 = vmatpush1.msra.mxu0 0.0
  %5058 = vmatprep.subr.mxu0 0.0
  %5059 = vmatpush1.msra.mxu0 0.0
  %5060 = vmatprep.subr.mxu0 0.0
  %5061 = vmatpush1.msra.mxu0 0.0
  %5062 = vmatprep.subr.mxu0 0.0
  %5063 = vmatpush1.msra.mxu0 0.0
  %5064 = vmatprep.subr.mxu0 0.0
  %5065 = vmatpush1.msra.mxu0 0.0
  %5066 = vmatprep.subr.mxu0 0.0
  %5067 = vmatpush1.msra.mxu0 0.0
  %5068 = vmatprep.subr.mxu0 0.0
  %5069 = vmatpush1.msra.mxu0 0.0
  %5070 = vmatprep.subr.mxu0 0.0
  %5071 = vmatpush1.msra.mxu0 0.0
  %5072 = vmatprep.subr.mxu0 0.0
  %5073 = vmatpush1.msra.mxu0 0.0
  %5074 = vmatprep.subr.mxu0 0.0
  %5075 = vmatpush1.msra.mxu0 0.0
  %5076 = vmatprep.subr.mxu0 0.0
  %5077 = vmatpush1.msra.mxu0 0.0
  %5078 = vmatprep.subr.mxu0 0.0
  %5079 = vmatpush1.msra.mxu0 0.0
  %5080 = vmatprep.subr.mxu0 0.0
  %5081 = vmatpush1.msra.mxu0 0.0
  %5082 = vmatprep.subr.mxu0 0.0
  %5083 = vmatpush1.msra.mxu0 0.0
  %5084 = vmatprep.subr.mxu0 0.0
  %5085 = vmatpush1.msra.mxu0 0.0
  %5086 = vmatprep.subr.mxu0 0.0
  %5087 = vmatpush1.msra.mxu0 0.0
  %5088 = vmatprep.subr.mxu0 0.0
  %5089 = vmatpush1.msra.mxu0 0.0
  %5090 = vmatprep.subr.mxu0 0.0
  %5091 = vmatpush1.msra.mxu0 0.0
  %5092 = vmatprep.subr.mxu0 0.0
  %5093 = vmatpush1.msra.mxu0 0.0
  %5094 = vmatprep.subr.mxu0 0.0
  %5095 = vmatpush1.msra.mxu0 0.0
  %5096 = vmatprep.subr.mxu0 0.0
  %5097 = vmatpush1.msra.mxu0 0.0
  %5098 = vmatprep.subr.mxu0 0.0
  %5099 = vmatpush1.msra.mxu0 0.0
  %5100 = vmatprep.subr.mxu0 0.0
  %5101 = vmatpush1.msra.mxu0 0.0
  %5102 = vmatprep.subr.mxu0 0.0
  %5103 = vmatpush1.msra.mxu0 0.0
  %5104 = vmatprep.subr.mxu0 0.0
  %5105 = vmatpush1.msra.mxu0 0.0
  %5106 = vmatprep.subr.mxu0 0.0
  %5107 = vmatpush1.msra.mxu0 0.0
  %5108 = vmatprep.subr.mxu0 0.0
  %5109 = vmatpush1.msra.mxu0 0.0
  %5110 = vmatprep.subr.mxu0 0.0
  %5111 = vmatpush1.msra.mxu0 0.0
  %5112 = vmatprep.mubr.f32.mxu0 0.0
  %5113 = vmatmul.mubr.f32.gmra.mrb[0].mxu0 %v5046
  %v5114 = vpop.f32.mrb[0].mxu0
  %v5115 = vadd.f32 0.0, %v5114
  %v5116 = vpop.f32.mrb[0].mxu0
  %5117 = vdwg.mxu0
  %v5118 = vadd.f32 %v5042, %v5115
  %s5119 = scalar_lea.vmem %s10, 2
  %v5120 = vld [vmem:[%s5119] sm:$0x1]
  %v5122 = vlaneseq
  %v5123 = vshrl.u32 %v5122, 7
  %v5124 = vsub.s32 0, %v5123
  %v5125 = vrot.slane %v5120, %v5124
  %v5127 = vadd.f32 %v5118, %v5125
  %v5128 = vmul.f32 %v5127, 0.2
  %v5129 = vmax.f32 %v5127, %v5128
  %v5130 = vpack.c.bf16 %v5129, %v5129
  %v5131 = vld [vmem:[%s18] sm:$0xff]
  %v5132 = vld [vmem:[%s18 + $0x8] sm:$0xff]
  %v5133 = vld [vmem:[%s18 + $0x10] sm:$0xff]
  %v5134 = vld [vmem:[%s18 + $0x18] sm:$0xff]
  %v5135 = vld [vmem:[%s18 + $0x20] sm:$0xff]
  %v5136 = vld [vmem:[%s18 + $0x28] sm:$0xff]
  %v5137 = vld [vmem:[%s18 + $0x30] sm:$0xff]
  %v5138 = vld [vmem:[%s18 + $0x38] sm:$0xff]
  %v5139 = vld [vmem:[%s18 + $0x40] sm:$0xff]
  %v5140 = vld [vmem:[%s18 + $0x48] sm:$0xff]
  %v5141 = vld [vmem:[%s18 + $0x50] sm:$0xff]
  %v5142 = vld [vmem:[%s18 + $0x58] sm:$0xff]
  %v5143 = vld [vmem:[%s18 + $0x60] sm:$0xff]
  %v5144 = vld [vmem:[%s18 + $0x68] sm:$0xff]
  %v5145 = vld [vmem:[%s18 + $0x70] sm:$0xff]
  %v5146 = vld [vmem:[%s18 + $0x78] sm:$0xff]
  %v5147 = vld [vmem:[%s18 + $0x80] sm:$0xff]
  %v5148 = vld [vmem:[%s18 + $0x88] sm:$0xff]
  %v5149 = vld [vmem:[%s18 + $0x90] sm:$0xff]
  %v5150 = vld [vmem:[%s18 + $0x98] sm:$0xff]
  %v5151 = vld [vmem:[%s18 + $0xa0] sm:$0xff]
  %v5152 = vld [vmem:[%s18 + $0xa8] sm:$0xff]
  %v5153 = vld [vmem:[%s18 + $0xb0] sm:$0xff]
  %v5154 = vld [vmem:[%s18 + $0xb8] sm:$0xff]
  %v5155 = vld [vmem:[%s18 + $0xc0] sm:$0xff]
  %v5156 = vld [vmem:[%s18 + $0xc8] sm:$0xff]
  %v5157 = vld [vmem:[%s18 + $0xd0] sm:$0xff]
  %v5158 = vld [vmem:[%s18 + $0xd8] sm:$0xff]
  %v5159 = vld [vmem:[%s18 + $0xe0] sm:$0xff]
  %v5160 = vld [vmem:[%s18 + $0xe8] sm:$0xff]
  %v5161 = vld [vmem:[%s18 + $0xf0] sm:$0xff]
  %v5162 = vld [vmem:[%s18 + $0xf8] sm:$0xff]
  %v5195 = vunpack.c.l.b16 %v5131
  %v5196 = vunpack.c.h.b16 %v5131
  %v5197 = vunpack.c.l.b16 %v5132
  %v5198 = vunpack.c.h.b16 %v5132
  %v5199 = vunpack.c.l.b16 %v5133
  %v5200 = vunpack.c.h.b16 %v5133
  %v5201 = vunpack.c.l.b16 %v5134
  %v5202 = vunpack.c.h.b16 %v5134
  %v5203 = vunpack.c.l.b16 %v5135
  %v5204 = vunpack.c.h.b16 %v5135
  %v5205 = vunpack.c.l.b16 %v5136
  %v5206 = vunpack.c.h.b16 %v5136
  %v5207 = vunpack.c.l.b16 %v5137
  %v5208 = vunpack.c.h.b16 %v5137
  %v5209 = vunpack.c.l.b16 %v5138
  %v5210 = vunpack.c.h.b16 %v5138
  %v5211 = vunpack.c.l.b16 %v5139
  %v5212 = vunpack.c.h.b16 %v5139
  %v5213 = vunpack.c.l.b16 %v5140
  %v5214 = vunpack.c.h.b16 %v5140
  %v5215 = vunpack.c.l.b16 %v5141
  %v5216 = vunpack.c.h.b16 %v5141
  %v5217 = vunpack.c.l.b16 %v5142
  %v5218 = vunpack.c.h.b16 %v5142
  %v5219 = vunpack.c.l.b16 %v5143
  %v5220 = vunpack.c.h.b16 %v5143
  %v5221 = vunpack.c.l.b16 %v5144
  %v5222 = vunpack.c.h.b16 %v5144
  %v5223 = vunpack.c.l.b16 %v5145
  %v5224 = vunpack.c.h.b16 %v5145
  %v5225 = vunpack.c.l.b16 %v5146
  %v5226 = vunpack.c.h.b16 %v5146
  %v5227 = vunpack.c.l.b16 %v5147
  %v5228 = vunpack.c.h.b16 %v5147
  %v5229 = vunpack.c.l.b16 %v5148
  %v5230 = vunpack.c.h.b16 %v5148
  %v5231 = vunpack.c.l.b16 %v5149
  %v5232 = vunpack.c.h.b16 %v5149
  %v5233 = vunpack.c.l.b16 %v5150
  %v5234 = vunpack.c.h.b16 %v5150
  %v5235 = vunpack.c.l.b16 %v5151
  %v5236 = vunpack.c.h.b16 %v5151
  %v5237 = vunpack.c.l.b16 %v5152
  %v5238 = vunpack.c.h.b16 %v5152
  %v5239 = vunpack.c.l.b16 %v5153
  %v5240 = vunpack.c.h.b16 %v5153
  %v5241 = vunpack.c.l.b16 %v5154
  %v5242 = vunpack.c.h.b16 %v5154
  %v5243 = vunpack.c.l.b16 %v5155
  %v5244 = vunpack.c.h.b16 %v5155
  %v5245 = vunpack.c.l.b16 %v5156
  %v5246 = vunpack.c.h.b16 %v5156
  %v5247 = vunpack.c.l.b16 %v5157
  %v5248 = vunpack.c.h.b16 %v5157
  %v5249 = vunpack.c.l.b16 %v5158
  %v5250 = vunpack.c.h.b16 %v5158
  %v5251 = vunpack.c.l.b16 %v5159
  %v5252 = vunpack.c.h.b16 %v5159
  %v5253 = vunpack.c.l.b16 %v5160
  %v5254 = vunpack.c.h.b16 %v5160
  %v5255 = vunpack.c.l.b16 %v5161
  %v5256 = vunpack.c.h.b16 %v5161
  %v5257 = vunpack.c.l.b16 %v5162
  %v5258 = vunpack.c.h.b16 %v5162
  %v5259 = vpack.c.b16 %v5199, %v5195
  %v5260 = vpack.c.b16 %v5200, %v5196
  %v5261 = vpack.c.b16 %v5201, %v5197
  %v5262 = vpack.c.b16 %v5202, %v5198
  %v5263 = vpack.c.b16 %v5207, %v5203
  %v5264 = vpack.c.b16 %v5208, %v5204
  %v5265 = vpack.c.b16 %v5209, %v5205
  %v5266 = vpack.c.b16 %v5210, %v5206
  %v5267 = vpack.c.b16 %v5215, %v5211
  %v5268 = vpack.c.b16 %v5216, %v5212
  %v5269 = vpack.c.b16 %v5217, %v5213
  %v5270 = vpack.c.b16 %v5218, %v5214
  %v5271 = vpack.c.b16 %v5223, %v5219
  %v5272 = vpack.c.b16 %v5224, %v5220
  %v5273 = vpack.c.b16 %v5225, %v5221
  %v5274 = vpack.c.b16 %v5226, %v5222
  %v5275 = vpack.c.b16 %v5231, %v5227
  %v5276 = vpack.c.b16 %v5232, %v5228
  %v5277 = vpack.c.b16 %v5233, %v5229
  %v5278 = vpack.c.b16 %v5234, %v5230
  %v5279 = vpack.c.b16 %v5239, %v5235
  %v5280 = vpack.c.b16 %v5240, %v5236
  %v5281 = vpack.c.b16 %v5241, %v5237
  %v5282 = vpack.c.b16 %v5242, %v5238
  %v5283 = vpack.c.b16 %v5247, %v5243
  %v5284 = vpack.c.b16 %v5248, %v5244
  %v5285 = vpack.c.b16 %v5249, %v5245
  %v5286 = vpack.c.b16 %v5250, %v5246
  %v5287 = vpack.c.b16 %v5255, %v5251
  %v5288 = vpack.c.b16 %v5256, %v5252
  %v5289 = vpack.c.b16 %v5257, %v5253
  %v5290 = vpack.c.b16 %v5258, %v5254
  %5323 = vmatprep.subr.bf16.mxu0 %v5260
  %5324 = vmatpush1.bf16.msra.mxu0 %v5259
  %5325 = vmatprep.subr.bf16.mxu0 %v5264
  %5326 = vmatpush1.bf16.msra.mxu0 %v5263
  %5327 = vmatprep.subr.bf16.mxu0 %v5268
  %5328 = vmatpush1.bf16.msra.mxu0 %v5267
  %5329 = vmatprep.subr.bf16.mxu0 %v5272
  %5330 = vmatpush1.bf16.msra.mxu0 %v5271
  %5331 = vmatprep.subr.bf16.mxu0 %v5276
  %5332 = vmatpush1.bf16.msra.mxu0 %v5275
  %5333 = vmatprep.subr.bf16.mxu0 %v5280
  %5334 = vmatpush1.bf16.msra.mxu0 %v5279
  %5335 = vmatprep.subr.bf16.mxu0 %v5284
  %5336 = vmatpush1.bf16.msra.mxu0 %v5283
  %5337 = vmatprep.subr.bf16.mxu0 %v5288
  %5338 = vmatpush1.bf16.msra.mxu0 %v5287
  %5339 = vmatprep.subr.bf16.mxu0 0
  %5340 = vmatpush1.bf16.msra.mxu0 0
  %5341 = vmatprep.subr.bf16.mxu0 0
  %5342 = vmatpush1.bf16.msra.mxu0 0
  %5343 = vmatprep.subr.bf16.mxu0 0
  %5344 = vmatpush1.bf16.msra.mxu0 0
  %5345 = vmatprep.subr.bf16.mxu0 0
  %5346 = vmatpush1.bf16.msra.mxu0 0
  %5347 = vmatprep.subr.bf16.mxu0 0
  %5348 = vmatpush1.bf16.msra.mxu0 0
  %5349 = vmatprep.subr.bf16.mxu0 0
  %5350 = vmatpush1.bf16.msra.mxu0 0
  %5351 = vmatprep.subr.bf16.mxu0 0
  %5352 = vmatpush1.bf16.msra.mxu0 0
  %5353 = vmatprep.subr.bf16.mxu0 0
  %5354 = vmatpush1.bf16.msra.mxu0 0
  %5355 = vmatprep.mubr.bf16.mxu0 0
  %5356 = vmatmul.mubr.bf16.gmra.mrb[0].mxu0 %v5130
  %v5357 = vpop.f32.mrb[0].mxu0
  %v5358 = vadd.f32 0.0, %v5357
  %v5359 = vpop.f32.mrb[0].mxu0
  %v5360 = vadd.f32 0.0, %v5359
  %v5361 = vpop.f32.mrb[0].mxu0
  %v5362 = vpop.f32.mrb[0].mxu0
  %5363 = vdwg.mxu0
  %5364 = vmatprep.subr.bf16.mxu0 %v5262
  %5365 = vmatpush1.bf16.msra.mxu0 %v5261
  %5366 = vmatprep.subr.bf16.mxu0 %v5266
  %5367 = vmatpush1.bf16.msra.mxu0 %v5265
  %5368 = vmatprep.subr.bf16.mxu0 %v5270
  %5369 = vmatpush1.bf16.msra.mxu0 %v5269
  %5370 = vmatprep.subr.bf16.mxu0 %v5274
  %5371 = vmatpush1.bf16.msra.mxu0 %v5273
  %5372 = vmatprep.subr.bf16.mxu0 %v5278
  %5373 = vmatpush1.bf16.msra.mxu0 %v5277
  %5374 = vmatprep.subr.bf16.mxu0 %v5282
  %5375 = vmatpush1.bf16.msra.mxu0 %v5281
  %5376 = vmatprep.subr.bf16.mxu0 %v5286
  %5377 = vmatpush1.bf16.msra.mxu0 %v5285
  %5378 = vmatprep.subr.bf16.mxu0 %v5290
  %5379 = vmatpush1.bf16.msra.mxu0 %v5289
  %5380 = vmatprep.subr.bf16.mxu0 0
  %5381 = vmatpush1.bf16.msra.mxu0 0
  %5382 = vmatprep.subr.bf16.mxu0 0
  %5383 = vmatpush1.bf16.msra.mxu0 0
  %5384 = vmatprep.subr.bf16.mxu0 0
  %5385 = vmatpush1.bf16.msra.mxu0 0
  %5386 = vmatprep.subr.bf16.mxu0 0
  %5387 = vmatpush1.bf16.msra.mxu0 0
  %5388 = vmatprep.subr.bf16.mxu0 0
  %5389 = vmatpush1.bf16.msra.mxu0 0
  %5390 = vmatprep.subr.bf16.mxu0 0
  %5391 = vmatpush1.bf16.msra.mxu0 0
  %5392 = vmatprep.subr.bf16.mxu0 0
  %5393 = vmatpush1.bf16.msra.mxu0 0
  %5394 = vmatprep.subr.bf16.mxu0 0
  %5395 = vmatpush1.bf16.msra.mxu0 0
  %5396 = vmatprep.mubr.bf16.mxu0 0
  %5397 = vmatmul.mubr.bf16.gmra.mrb[0].mxu0 %v5130
  %v5398 = vpop.f32.mrb[0].mxu0
  %v5399 = vadd.f32 0.0, %v5398
  %v5400 = vpop.f32.mrb[0].mxu0
  %v5401 = vadd.f32 0.0, %v5400
  %v5402 = vpop.f32.mrb[0].mxu0
  %v5403 = vpop.f32.mrb[0].mxu0
  %5404 = vdwg.mxu0
  %v5405 = vld [vmem:[%s17] sm:$0xff]
  %s5406 = scalar_lea.vmem %s17, 8
  %v5407 = vld [vmem:[%s5406] sm:$0xff]
  %v5409 = vsel %vm4820, %v5407, 0
  %5411 = vmatprep.subr.mxu0 0.0
  %5412 = vmatpush1.msra.mxu0 %v5360
  %5413 = vmatprep.subr.mxu0 0.0
  %5414 = vmatpush1.msra.mxu0 0.0
  %5415 = vmatprep.subr.mxu0 0.0
  %5416 = vmatpush1.msra.mxu0 0.0
  %5417 = vmatprep.subr.mxu0 0.0
  %5418 = vmatpush1.msra.mxu0 0.0
  %5419 = vmatprep.subr.mxu0 0.0
  %5420 = vmatpush1.msra.mxu0 0.0
  %5421 = vmatprep.subr.mxu0 0.0
  %5422 = vmatpush1.msra.mxu0 0.0
  %5423 = vmatprep.subr.mxu0 0.0
  %5424 = vmatpush1.msra.mxu0 0.0
  %5425 = vmatprep.subr.mxu0 0.0
  %5426 = vmatpush1.msra.mxu0 0.0
  %5427 = vmatprep.subr.mxu0 0.0
  %5428 = vmatpush1.msra.mxu0 0.0
  %5429 = vmatprep.subr.mxu0 0.0
  %5430 = vmatpush1.msra.mxu0 0.0
  %5431 = vmatprep.subr.mxu0 0.0
  %5432 = vmatpush1.msra.mxu0 0.0
  %5433 = vmatprep.subr.mxu0 0.0
  %5434 = vmatpush1.msra.mxu0 0.0
  %5435 = vmatprep.subr.mxu0 0.0
  %5436 = vmatpush1.msra.mxu0 0.0
  %5437 = vmatprep.subr.mxu0 0.0
  %5438 = vmatpush1.msra.mxu0 0.0
  %5439 = vmatprep.subr.mxu0 0.0
  %5440 = vmatpush1.msra.mxu0 0.0
  %5441 = vmatprep.subr.mxu0 0.0
  %5442 = vmatpush1.msra.mxu0 0.0
  %5443 = vmatprep.subr.mxu0 0.0
  %5444 = vmatpush1.msra.mxu0 0.0
  %5445 = vmatprep.subr.mxu0 0.0
  %5446 = vmatpush1.msra.mxu0 0.0
  %5447 = vmatprep.subr.mxu0 0.0
  %5448 = vmatpush1.msra.mxu0 0.0
  %5449 = vmatprep.subr.mxu0 0.0
  %5450 = vmatpush1.msra.mxu0 0.0
  %5451 = vmatprep.subr.mxu0 0.0
  %5452 = vmatpush1.msra.mxu0 0.0
  %5453 = vmatprep.subr.mxu0 0.0
  %5454 = vmatpush1.msra.mxu0 0.0
  %5455 = vmatprep.subr.mxu0 0.0
  %5456 = vmatpush1.msra.mxu0 0.0
  %5457 = vmatprep.subr.mxu0 0.0
  %5458 = vmatpush1.msra.mxu0 0.0
  %5459 = vmatprep.subr.mxu0 0.0
  %5460 = vmatpush1.msra.mxu0 0.0
  %5461 = vmatprep.subr.mxu0 0.0
  %5462 = vmatpush1.msra.mxu0 0.0
  %5463 = vmatprep.subr.mxu0 0.0
  %5464 = vmatpush1.msra.mxu0 0.0
  %5465 = vmatprep.subr.mxu0 0.0
  %5466 = vmatpush1.msra.mxu0 0.0
  %5467 = vmatprep.subr.mxu0 0.0
  %5468 = vmatpush1.msra.mxu0 0.0
  %5469 = vmatprep.subr.mxu0 0.0
  %5470 = vmatpush1.msra.mxu0 0.0
  %5471 = vmatprep.subr.mxu0 0.0
  %5472 = vmatpush1.msra.mxu0 0.0
  %5473 = vmatprep.subr.mxu0 0.0
  %5474 = vmatpush1.msra.mxu0 0.0
  %5475 = vmatprep.mubr.f32.mxu0 0.0
  %5476 = vmatmul.mubr.f32.gmra.mrb[0].mxu0 %v5409
  %v5477 = vpop.f32.mrb[0].mxu0
  %v5478 = vadd.f32 0.0, %v5477
  %v5479 = vpop.f32.mrb[0].mxu0
  %5480 = vdwg.mxu0
  %v5482 = vsel %vm4820, %v5405, 0
  %5484 = vmatprep.subr.mxu0 0.0
  %5485 = vmatpush1.msra.mxu0 %v5358
  %5486 = vmatprep.subr.mxu0 0.0
  %5487 = vmatpush1.msra.mxu0 0.0
  %5488 = vmatprep.subr.mxu0 0.0
  %5489 = vmatpush1.msra.mxu0 0.0
  %5490 = vmatprep.subr.mxu0 0.0
  %5491 = vmatpush1.msra.mxu0 0.0
  %5492 = vmatprep.subr.mxu0 0.0
  %5493 = vmatpush1.msra.mxu0 0.0
  %5494 = vmatprep.subr.mxu0 0.0
  %5495 = vmatpush1.msra.mxu0 0.0
  %5496 = vmatprep.subr.mxu0 0.0
  %5497 = vmatpush1.msra.mxu0 0.0
  %5498 = vmatprep.subr.mxu0 0.0
  %5499 = vmatpush1.msra.mxu0 0.0
  %5500 = vmatprep.subr.mxu0 0.0
  %5501 = vmatpush1.msra.mxu0 0.0
  %5502 = vmatprep.subr.mxu0 0.0
  %5503 = vmatpush1.msra.mxu0 0.0
  %5504 = vmatprep.subr.mxu0 0.0
  %5505 = vmatpush1.msra.mxu0 0.0
  %5506 = vmatprep.subr.mxu0 0.0
  %5507 = vmatpush1.msra.mxu0 0.0
  %5508 = vmatprep.subr.mxu0 0.0
  %5509 = vmatpush1.msra.mxu0 0.0
  %5510 = vmatprep.subr.mxu0 0.0
  %5511 = vmatpush1.msra.mxu0 0.0
  %5512 = vmatprep.subr.mxu0 0.0
  %5513 = vmatpush1.msra.mxu0 0.0
  %5514 = vmatprep.subr.mxu0 0.0
  %5515 = vmatpush1.msra.mxu0 0.0
  %5516 = vmatprep.subr.mxu0 0.0
  %5517 = vmatpush1.msra.mxu0 0.0
  %5518 = vmatprep.subr.mxu0 0.0
  %5519 = vmatpush1.msra.mxu0 0.0
  %5520 = vmatprep.subr.mxu0 0.0
  %5521 = vmatpush1.msra.mxu0 0.0
  %5522 = vmatprep.subr.mxu0 0.0
  %5523 = vmatpush1.msra.mxu0 0.0
  %5524 = vmatprep.subr.mxu0 0.0
  %5525 = vmatpush1.msra.mxu0 0.0
  %5526 = vmatprep.subr.mxu0 0.0
  %5527 = vmatpush1.msra.mxu0 0.0
  %5528 = vmatprep.subr.mxu0 0.0
  %5529 = vmatpush1.msra.mxu0 0.0
  %5530 = vmatprep.subr.mxu0 0.0
  %5531 = vmatpush1.msra.mxu0 0.0
  %5532 = vmatprep.subr.mxu0 0.0
  %5533 = vmatpush1.msra.mxu0 0.0
  %5534 = vmatprep.subr.mxu0 0.0
  %5535 = vmatpush1.msra.mxu0 0.0
  %5536 = vmatprep.subr.mxu0 0.0
  %5537 = vmatpush1.msra.mxu0 0.0
  %5538 = vmatprep.subr.mxu0 0.0
  %5539 = vmatpush1.msra.mxu0 0.0
  %5540 = vmatprep.subr.mxu0 0.0
  %5541 = vmatpush1.msra.mxu0 0.0
  %5542 = vmatprep.subr.mxu0 0.0
  %5543 = vmatpush1.msra.mxu0 0.0
  %5544 = vmatprep.subr.mxu0 0.0
  %5545 = vmatpush1.msra.mxu0 0.0
  %5546 = vmatprep.subr.mxu0 0.0
  %5547 = vmatpush1.msra.mxu0 0.0
  %5548 = vmatprep.mubr.f32.mxu0 0.0
  %5549 = vmatmul.mubr.f32.gmra.mrb[0].mxu0 %v5482
  %v5550 = vpop.f32.mrb[0].mxu0
  %v5551 = vadd.f32 %v5478, %v5550
  %v5552 = vpop.f32.mrb[0].mxu0
  %5553 = vdwg.mxu0
  %s5554 = scalar_lea.vmem %s17, 16
  %v5555 = vld [vmem:[%s5554] sm:$0xff]
  %v5557 = vsel %vm4820, %v5555, 0
  %5559 = vmatprep.subr.mxu0 0.0
  %5560 = vmatpush1.msra.mxu0 %v5399
  %5561 = vmatprep.subr.mxu0 0.0
  %5562 = vmatpush1.msra.mxu0 0.0
  %5563 = vmatprep.subr.mxu0 0.0
  %5564 = vmatpush1.msra.mxu0 0.0
  %5565 = vmatprep.subr.mxu0 0.0
  %5566 = vmatpush1.msra.mxu0 0.0
  %5567 = vmatprep.subr.mxu0 0.0
  %5568 = vmatpush1.msra.mxu0 0.0
  %5569 = vmatprep.subr.mxu0 0.0
  %5570 = vmatpush1.msra.mxu0 0.0
  %5571 = vmatprep.subr.mxu0 0.0
  %5572 = vmatpush1.msra.mxu0 0.0
  %5573 = vmatprep.subr.mxu0 0.0
  %5574 = vmatpush1.msra.mxu0 0.0
  %5575 = vmatprep.subr.mxu0 0.0
  %5576 = vmatpush1.msra.mxu0 0.0
  %5577 = vmatprep.subr.mxu0 0.0
  %5578 = vmatpush1.msra.mxu0 0.0
  %5579 = vmatprep.subr.mxu0 0.0
  %5580 = vmatpush1.msra.mxu0 0.0
  %5581 = vmatprep.subr.mxu0 0.0
  %5582 = vmatpush1.msra.mxu0 0.0
  %5583 = vmatprep.subr.mxu0 0.0
  %5584 = vmatpush1.msra.mxu0 0.0
  %5585 = vmatprep.subr.mxu0 0.0
  %5586 = vmatpush1.msra.mxu0 0.0
  %5587 = vmatprep.subr.mxu0 0.0
  %5588 = vmatpush1.msra.mxu0 0.0
  %5589 = vmatprep.subr.mxu0 0.0
  %5590 = vmatpush1.msra.mxu0 0.0
  %5591 = vmatprep.subr.mxu0 0.0
  %5592 = vmatpush1.msra.mxu0 0.0
  %5593 = vmatprep.subr.mxu0 0.0
  %5594 = vmatpush1.msra.mxu0 0.0
  %5595 = vmatprep.subr.mxu0 0.0
  %5596 = vmatpush1.msra.mxu0 0.0
  %5597 = vmatprep.subr.mxu0 0.0
  %5598 = vmatpush1.msra.mxu0 0.0
  %5599 = vmatprep.subr.mxu0 0.0
  %5600 = vmatpush1.msra.mxu0 0.0
  %5601 = vmatprep.subr.mxu0 0.0
  %5602 = vmatpush1.msra.mxu0 0.0
  %5603 = vmatprep.subr.mxu0 0.0
  %5604 = vmatpush1.msra.mxu0 0.0
  %5605 = vmatprep.subr.mxu0 0.0
  %5606 = vmatpush1.msra.mxu0 0.0
  %5607 = vmatprep.subr.mxu0 0.0
  %5608 = vmatpush1.msra.mxu0 0.0
  %5609 = vmatprep.subr.mxu0 0.0
  %5610 = vmatpush1.msra.mxu0 0.0
  %5611 = vmatprep.subr.mxu0 0.0
  %5612 = vmatpush1.msra.mxu0 0.0
  %5613 = vmatprep.subr.mxu0 0.0
  %5614 = vmatpush1.msra.mxu0 0.0
  %5615 = vmatprep.subr.mxu0 0.0
  %5616 = vmatpush1.msra.mxu0 0.0
  %5617 = vmatprep.subr.mxu0 0.0
  %5618 = vmatpush1.msra.mxu0 0.0
  %5619 = vmatprep.subr.mxu0 0.0
  %5620 = vmatpush1.msra.mxu0 0.0
  %5621 = vmatprep.subr.mxu0 0.0
  %5622 = vmatpush1.msra.mxu0 0.0
  %5623 = vmatprep.mubr.f32.mxu0 0.0
  %5624 = vmatmul.mubr.f32.gmra.mrb[0].mxu0 %v5557
  %v5625 = vpop.f32.mrb[0].mxu0
  %v5626 = vadd.f32 0.0, %v5625
  %v5627 = vpop.f32.mrb[0].mxu0
  %5628 = vdwg.mxu0
  %v5629 = vadd.f32 %v5551, %v5626
  %s5630 = scalar_lea.vmem %s17, 24
  %v5631 = vld [vmem:[%s5630] sm:$0xff]
  %v5633 = vsel %vm4820, %v5631, 0
  %5635 = vmatprep.subr.mxu0 0.0
  %5636 = vmatpush1.msra.mxu0 %v5401
  %5637 = vmatprep.subr.mxu0 0.0
  %5638 = vmatpush1.msra.mxu0 0.0
  %5639 = vmatprep.subr.mxu0 0.0
  %5640 = vmatpush1.msra.mxu0 0.0
  %5641 = vmatprep.subr.mxu0 0.0
  %5642 = vmatpush1.msra.mxu0 0.0
  %5643 = vmatprep.subr.mxu0 0.0
  %5644 = vmatpush1.msra.mxu0 0.0
  %5645 = vmatprep.subr.mxu0 0.0
  %5646 = vmatpush1.msra.mxu0 0.0
  %5647 = vmatprep.subr.mxu0 0.0
  %5648 = vmatpush1.msra.mxu0 0.0
  %5649 = vmatprep.subr.mxu0 0.0
  %5650 = vmatpush1.msra.mxu0 0.0
  %5651 = vmatprep.subr.mxu0 0.0
  %5652 = vmatpush1.msra.mxu0 0.0
  %5653 = vmatprep.subr.mxu0 0.0
  %5654 = vmatpush1.msra.mxu0 0.0
  %5655 = vmatprep.subr.mxu0 0.0
  %5656 = vmatpush1.msra.mxu0 0.0
  %5657 = vmatprep.subr.mxu0 0.0
  %5658 = vmatpush1.msra.mxu0 0.0
  %5659 = vmatprep.subr.mxu0 0.0
  %5660 = vmatpush1.msra.mxu0 0.0
  %5661 = vmatprep.subr.mxu0 0.0
  %5662 = vmatpush1.msra.mxu0 0.0
  %5663 = vmatprep.subr.mxu0 0.0
  %5664 = vmatpush1.msra.mxu0 0.0
  %5665 = vmatprep.subr.mxu0 0.0
  %5666 = vmatpush1.msra.mxu0 0.0
  %5667 = vmatprep.subr.mxu0 0.0
  %5668 = vmatpush1.msra.mxu0 0.0
  %5669 = vmatprep.subr.mxu0 0.0
  %5670 = vmatpush1.msra.mxu0 0.0
  %5671 = vmatprep.subr.mxu0 0.0
  %5672 = vmatpush1.msra.mxu0 0.0
  %5673 = vmatprep.subr.mxu0 0.0
  %5674 = vmatpush1.msra.mxu0 0.0
  %5675 = vmatprep.subr.mxu0 0.0
  %5676 = vmatpush1.msra.mxu0 0.0
  %5677 = vmatprep.subr.mxu0 0.0
  %5678 = vmatpush1.msra.mxu0 0.0
  %5679 = vmatprep.subr.mxu0 0.0
  %5680 = vmatpush1.msra.mxu0 0.0
  %5681 = vmatprep.subr.mxu0 0.0
  %5682 = vmatpush1.msra.mxu0 0.0
  %5683 = vmatprep.subr.mxu0 0.0
  %5684 = vmatpush1.msra.mxu0 0.0
  %5685 = vmatprep.subr.mxu0 0.0
  %5686 = vmatpush1.msra.mxu0 0.0
  %5687 = vmatprep.subr.mxu0 0.0
  %5688 = vmatpush1.msra.mxu0 0.0
  %5689 = vmatprep.subr.mxu0 0.0
  %5690 = vmatpush1.msra.mxu0 0.0
  %5691 = vmatprep.subr.mxu0 0.0
  %5692 = vmatpush1.msra.mxu0 0.0
  %5693 = vmatprep.subr.mxu0 0.0
  %5694 = vmatpush1.msra.mxu0 0.0
  %5695 = vmatprep.subr.mxu0 0.0
  %5696 = vmatpush1.msra.mxu0 0.0
  %5697 = vmatprep.subr.mxu0 0.0
  %5698 = vmatpush1.msra.mxu0 0.0
  %5699 = vmatprep.mubr.f32.mxu0 0.0
  %5700 = vmatmul.mubr.f32.gmra.mrb[0].mxu0 %v5633
  %v5701 = vpop.f32.mrb[0].mxu0
  %v5702 = vadd.f32 0.0, %v5701
  %v5703 = vpop.f32.mrb[0].mxu0
  %5704 = vdwg.mxu0
  %v5705 = vadd.f32 %v5629, %v5702
  %s5706 = scalar_lea.vmem %s10, 3
  %v5707 = vld [vmem:[%s5706] sm:$0x1]
  %v5709 = vlaneseq
  %v5710 = vshrl.u32 %v5709, 7
  %v5711 = vsub.s32 0, %v5710
  %v5712 = vrot.slane %v5707, %v5711
  %v5714 = vadd.f32 %v5705, %v5712
  %5715 = vst [vmem:[%s20] sm:$0xff] %v5714
  // Predicated region
  $region78: #{dis_forward.1} parent=0 // pred_check
    _
  $region79: #{dis_forward.1} parent=0 // pred_check_branch
    %5717 = sbr.rel (0) target = $region81
  $region80: #{dis_forward.1} parent=0 // pred_region
    _
  $region81: #{dis_forward.1} parent=0 // pred_fallthru
    _
  // Predicated region
  $region82: #{dis_forward.1} parent=0 // pred_check
    _
  $region83: #{dis_forward.1} parent=0 // pred_check_branch
    %5719 = sbr.rel (0) target = $region85
  $region84: #{dis_forward.1} parent=0 // pred_region
    _
  $region85: #{dis_forward.1} parent=0 // pred_fallthru
    _
  // Predicated region
  $region86: #{dis_forward.1} parent=0 // pred_check
    _
  $region87: #{dis_forward.1} parent=0 // pred_check_branch
    %5721 = sbr.rel (0) target = $region89
  $region88: #{dis_forward.1} parent=0 // pred_region
    _
  $region89: #{dis_forward.1} parent=0 // pred_fallthru
    _
  // Predicated region
  $region90: #{dis_forward.1} parent=0 // pred_check
    _
  $region91: #{dis_forward.1} parent=0 // pred_check_branch
    %5723 = sbr.rel (0) target = $region93
  $region92: #{dis_forward.1} parent=0 // pred_region
    _
  $region93: #{dis_forward.1} parent=0 // pred_fallthru
    _

</llo_original>
